<compile_context>
chip_gen: v7x
topology: tpu7x:2x2x1
jax: 0.10.0
libtpu: 0.0.40
codegen_flags: <defaults>
</compile_context>

<pallas_src>
import math
import jax
import jax.numpy as jnp
from jax import lax
from jax.experimental import pallas as pl
from jax.experimental.pallas import tpu as pltpu


# ------------------------------ Pallas kernel ------------------------------ #

def _make_fused_kernel(num_layers, S, I, H, V, tile_b):
    """Fused Fasthemal forward kernel factory.

    Ref order (inputs, output, scratch):
      ids        [S*I*tile_b, 1] int32   token ids, row = (s*I + i)*tile_b + b
      tok_last   [I*tile_b, 1]   int32   last non-pad token index per instruction
      ins_last   [tile_b, 1]     int32   last non-pad instruction index per batch
      token layers: (w_proj, w_hh, bias) * num_layers
                    layer 0 w_proj = embedding @ W_ih^T  -> [V, 4H]
                    layers >0 w_proj = W_ih^T            -> [H, 4H]
      instr layers: (w_ih^T, w_hh^T, bias) * num_layers
      w_lin [1, H], b_lin [1, 1]
      out   [tile_b, 1]
      gx_tok [S, I*tile_b, 4H] VMEM, gx_ins [I, tile_b, 4H] VMEM,
      (seq_tok [S, I*tile_b, H], seq_ins [I, tile_b, H])  only if num_layers > 1
    Gate column order is the PyTorch (i, f, g, o) convention.
    """
    n_tok = I * tile_b
    G = 4 * H

    def kernel(*refs):
        ids_ref, tok_last_ref, ins_last_ref = refs[0], refs[1], refs[2]
        p = 3
        tok_layers = [refs[p + 3 * l: p + 3 * l + 3] for l in range(num_layers)]
        p += 3 * num_layers
        ins_layers = [refs[p + 3 * l: p + 3 * l + 3] for l in range(num_layers)]
        p += 3 * num_layers
        wlin_ref, blin_ref = refs[p], refs[p + 1]
        out_ref = refs[p + 2]
        gx_tok, gx_ins = refs[p + 3], refs[p + 4]
        seq_tok = refs[p + 5] if num_layers > 1 else None
        seq_ins = refs[p + 6] if num_layers > 1 else None

        def run_layer(gx_ref, whh_ref, T, n, last_idx, seq_ref, track_last):
            """Serial LSTM recurrence; gx_ref already holds x @ W_ih + biases."""
            whh = whh_ref[...]                       # hoisted out of the chain

            def step(t, carry):
                h, c, h_last = carry
                gates = gx_ref[t] + jnp.dot(h, whh,
                                            preferred_element_type=jnp.float32)
                # Full-vreg nonlinearities (4H = one lane width): one EUP
                # sigmoid pass (exp + approx reciprocal) + one tanh pass.
                sig = pl.reciprocal(1.0 + jnp.exp(-gates), approx=True)
                tnh = jnp.tanh(gates)
                # PyTorch gate order (i, f, g, o).
                c = sig[:, H:2 * H] * c + sig[:, :H] * tnh[:, 2 * H:3 * H]
                h = sig[:, 3 * H:] * jnp.tanh(c)
                if seq_ref is not None:              # only needed below top layer
                    seq_ref[t] = h
                if track_last:                       # last non-pad hidden state
                    h_last = jnp.where(last_idx == t, h, h_last)
                return (h, c, h_last)

            z = jnp.zeros((n, H), jnp.float32)
            _, _, h_last = lax.fori_loop(0, T, step, (z, z, z), unroll=True)
            return h_last

        # ------------------- token-level LSTM stack ------------------------ #
        # Layer-0 input projection fused with the embedding lookup:
        #   gx = one_hot(ids) @ (embedding @ W_ih^T) + (b_ih + b_hh)
        w0, whh0, b0 = tok_layers[0]
        onehot = (ids_ref[...] ==
                  lax.broadcasted_iota(jnp.int32, (S * n_tok, V), 1)
                  ).astype(jnp.float32)
        gx_tok[...] = (jnp.dot(onehot, w0[...],
                               preferred_element_type=jnp.float32)
                       + b0[...]).reshape(S, n_tok, G)

        tok_last = tok_last_ref[...]
        top = (num_layers == 1)
        h_tok = run_layer(gx_tok, whh0, S, n_tok, tok_last,
                          None if top else seq_tok, top)
        # TODO(synk): for num_layers > 1, pipeline layers as a wavefront
        # (layer l step t concurrent with layer l+1 step t-1) to hide MXU latency.
        for l in range(1, num_layers):
            wih, whh, b = tok_layers[l]
            top = (l == num_layers - 1)
            xa = seq_tok[...].reshape(S * n_tok, H)
            gx_tok[...] = (jnp.dot(xa, wih[...],
                                   preferred_element_type=jnp.float32)
                           + b[...]).reshape(S, n_tok, G)
            h_tok = run_layer(gx_tok, whh, S, n_tok, tok_last,
                              None if top else seq_tok, top)

        # ---------------- instruction-level LSTM stack --------------------- #
        # h_tok rows are ordered (instr, batch): viewed as [I, tile_b, H] this
        # IS the time-major instruction sequence -> no transpose, no HBM trip.
        ins_last = ins_last_ref[...]
        wpi0, whhi0, bi0 = ins_layers[0]
        gx_ins[...] = (jnp.dot(h_tok, wpi0[...],
                               preferred_element_type=jnp.float32)
                       + bi0[...]).reshape(I, tile_b, G)
        top = (num_layers == 1)
        h_ins = run_layer(gx_ins, whhi0, I, tile_b, ins_last,
                          None if top else seq_ins, top)
        for l in range(1, num_layers):
            wih, whh, b = ins_layers[l]
            top = (l == num_layers - 1)
            xa = seq_ins[...].reshape(I * tile_b, H)
            gx_ins[...] = (jnp.dot(xa, wih[...],
                                   preferred_element_type=jnp.float32)
                           + b[...]).reshape(I, tile_b, G)
            h_ins = run_layer(gx_ins, whh, I, tile_b, ins_last,
                              None if top else seq_ins, top)

        # Final linear (num_classes == 1): VPU multiply + lane reduction
        # instead of a 1-column MXU matmul.
        out_ref[...] = (jnp.sum(h_ins * wlin_ref[...], axis=1, keepdims=True)
                        + blin_ref[...])

    return kernel


# ------------------------------ host-side glue ----------------------------- #

def _round_up(x, m):
    return ((x + m - 1) // m) * m


def _last_false_index(mask, axis):
    """Same convention as PyTorch get_last_false_values: argmax of the pad
    mask (argmax==0 -> size), minus one.  NOTE: a row whose FIRST element is
    pad (fully padded instruction / sequence) therefore selects index size-1,
    exactly like the reference; only trailing padding is meaningful."""
    size = mask.shape[axis]
    idx = jnp.argmax(mask.astype(jnp.int32), axis=axis)
    return jnp.where(idx == 0, size, idx) - 1


def _prep_layer(layer):
    """PyTorch LSTM layer -> ([in,4H] W_ih^T, [H,4H] W_hh^T, [1,4H] folded bias)."""
    wih_t = jnp.transpose(layer['w_ih']).astype(jnp.float32)
    whh_t = jnp.transpose(layer['w_hh']).astype(jnp.float32)
    bias = (layer['b_ih'] + layer['b_hh']).astype(jnp.float32)[None, :]
    return wih_t, whh_t, bias


def _vmem_bytes(tile_b, I, S, H, num_layers):
    """Per-program scratch + double-buffered int-input estimate (f32 bytes)."""
    n_tok = I * tile_b
    b = 4 * (S * n_tok + I * tile_b) * 4 * H              # gx_tok + gx_ins
    if num_layers > 1:
        b += 4 * (S * n_tok + I * tile_b) * H              # seq_tok + seq_ins
    b += 2 * 4 * (S * n_tok + n_tok + tile_b)              # ids / last-idx, 2 bufs
    return b


def _plan_batch_tile(B_pad, I, S, H, num_layers, budget=24 << 20):
    cands = [t for t in range(8, B_pad + 1, 8) if B_pad % t == 0]
    fitting = [t for t in cands if _vmem_bytes(t, I, S, H, num_layers) <= budget]
    if not fitting:
        fitting = [8]
    # Prefer >=2 grid programs so both v7x TensorCores get work.
    multi = [t for t in fitting if B_pad // t >= 2]
    tile_b = max(multi) if multi else max(fitting)
    use = _vmem_bytes(tile_b, I, S, H, num_layers)
    vmem_limit = int(min(64 << 20, max(16 << 20, 2 * use + (4 << 20))))
    return tile_b, B_pad // tile_b, vmem_limit


def fasthemal_forward(params, x, pad_idx=0):
    """x: int32 [batch, max_instr_count, max_instr_length] -> [batch] float32."""
    B, I, S = x.shape
    V = params['embedding'].shape[0]
    H = params['token_lstm'][0]['w_hh'].shape[1]
    num_layers = len(params['token_lstm'])

    mask = (x == pad_idx)
    tok_last = _last_false_index(mask, axis=2)                       # [B, I]
    inst_last = _last_false_index(jnp.all(mask, axis=-1), axis=1)    # [B]

    # Pad the batch to a multiple of 8 (full sublane occupancy everywhere);
    # padded rows run on pad tokens and are sliced off at the end.
    B_pad = _round_up(B, 8)
    tile_b, n_grid, vmem_limit = _plan_batch_tile(B_pad, I, S, H, num_layers)
    pad_b = B_pad - B
    x_p = jnp.pad(x.astype(jnp.int32), ((0, pad_b), (0, 0), (0, 0)),
                  constant_values=pad_idx)
    tok_last_p = jnp.pad(tok_last, ((0, pad_b), (0, 0)))
    inst_last_p = jnp.pad(inst_last, ((0, pad_b),))

    # Token batch laid out (instr, batch): in-block row = (s*I + i)*tile_b + b.
    ids = (x_p.reshape(n_grid, tile_b, I, S)
           .transpose(0, 3, 2, 1)
           .reshape(n_grid * S * I * tile_b, 1).astype(jnp.int32))
    tok_last_r = (tok_last_p.reshape(n_grid, tile_b, I)
                  .transpose(0, 2, 1)
                  .reshape(n_grid * I * tile_b, 1).astype(jnp.int32))
    inst_last_r = inst_last_p.reshape(B_pad, 1).astype(jnp.int32)

    inputs = [ids, tok_last_r, inst_last_r]
    in_specs = [pl.BlockSpec((S * I * tile_b, 1), lambda g: (g, 0)),
                pl.BlockSpec((I * tile_b, 1), lambda g: (g, 0)),
                pl.BlockSpec((tile_b, 1), lambda g: (g, 0))]

    def add_weight(a):
        inputs.append(a)
        in_specs.append(pl.BlockSpec(a.shape, lambda g: (0, 0)))

    # Token stack.  Layer 0's input projection is pre-folded with the
    # embedding table (weights-only, done once under jit): [V, 4H].
    wih0, whh0, b0 = _prep_layer(params['token_lstm'][0])
    eproj = jnp.dot(params['embedding'].astype(jnp.float32), wih0,
                    preferred_element_type=jnp.float32)
    for a in (eproj, whh0, b0):
        add_weight(a)
    for layer in params['token_lstm'][1:]:
        for a in _prep_layer(layer):
            add_weight(a)
    # Instruction stack.
    for layer in params['instr_lstm']:
        for a in _prep_layer(layer):
            add_weight(a)
    # Final linear (num_classes == 1).
    add_weight(params['linear_w'].astype(jnp.float32).reshape(1, H))
    add_weight(params['linear_b'].astype(jnp.float32).reshape(1, 1))

    scratch = [pltpu.VMEM((S, I * tile_b, 4 * H), jnp.float32),   # gx_tok
               pltpu.VMEM((I, tile_b, 4 * H), jnp.float32)]       # gx_ins
    if num_layers > 1:
        scratch += [pltpu.VMEM((S, I * tile_b, H), jnp.float32),  # seq_tok
                    pltpu.VMEM((I, tile_b, H), jnp.float32)]      # seq_ins

    out = pl.pallas_call(
        _make_fused_kernel(num_layers, S, I, H, V, tile_b),
        out_shape=jax.ShapeDtypeStruct((B_pad, 1), jnp.float32),
        grid=(n_grid,),
        in_specs=in_specs,
        out_specs=pl.BlockSpec((tile_b, 1), lambda g: (g, 0)),
        scratch_shapes=scratch,
        compiler_params=pltpu.CompilerParams(
            dimension_semantics=("parallel",),
            vmem_limit_bytes=vmem_limit),
    )(*inputs)
    return out[:B, 0]


# ----------------------------- parameter init ------------------------------ #

def _uniform(key, shape, scale):
    return jax.random.uniform(key, shape, jnp.float32, -scale, scale)


def init_params(key, vocab_size, embed_dim, hidden_dim, num_layers):
    ks = list(jax.random.split(key, 3 + 8 * num_layers))
    k_iter = iter(ks)
    stdv = 1.0 / math.sqrt(hidden_dim)

    def lstm_layer(in_dim):
        return dict(
            w_ih=_uniform(next(k_iter), (4 * hidden_dim, in_dim), stdv),
            w_hh=_uniform(next(k_iter), (4 * hidden_dim, hidden_dim), stdv),
            b_ih=_uniform(next(k_iter), (4 * hidden_dim,), stdv),
            b_hh=_uniform(next(k_iter), (4 * hidden_dim,), stdv),
        )

    return dict(
        embedding=_uniform(next(k_iter), (vocab_size, embed_dim),
                           0.5 / embed_dim),
        token_lstm=[lstm_layer(embed_dim if l == 0 else hidden_dim)
                    for l in range(num_layers)],
        instr_lstm=[lstm_layer(hidden_dim) for _ in range(num_layers)],
        linear_w=_uniform(next(k_iter), (1, hidden_dim), stdv),
        linear_b=_uniform(next(k_iter), (1,), stdv),
    )


# --------------------------------- main ------------------------------------ #

if __name__ == "__main__":
    # Config analogous to Fasthemal(config):
    #   embed_dim=32, hidden_dim=32, num_layers=1, vocab_size=64, pad_idx=0
    B, I, S = 2, 8, 8
    E, H, VOCAB, NUM_LAYERS = 32, 32, 64, 1

    key = jax.random.PRNGKey(0)
    k_param, k_tok, k_len = jax.random.split(key, 3)
    params = init_params(k_param, VOCAB, E, H, NUM_LAYERS)

    # Token ids with realistic trailing padding (pad_idx = 0).
    tokens = jax.random.randint(k_tok, (B, I, S), 1, VOCAB, dtype=jnp.int32)
    seq_lens = jax.random.randint(k_len, (B, I), 1, S + 1)
    tok_keep = jnp.arange(S)[None, None, :] < seq_lens[:, :, None]
    x = jnp.where(tok_keep, tokens, 0)
    inst_counts = jnp.array([I, I - 3])                  # pad some whole instrs
    inst_keep = jnp.arange(I)[None, :] < inst_counts[:, None]
    x = jnp.where(inst_keep[:, :, None], x, 0).astype(jnp.int32)

    y = jax.jit(fasthemal_forward)(params, x)
    y = jax.block_until_ready(y)

    assert y.shape == (B,), y.shape
    assert y.dtype == jnp.float32
    assert bool(jnp.all(jnp.isfinite(y)))
    print("KERNEL_OK")
</pallas_src>

<mosaic_0001>
module attributes {stable_mosaic.version = 11 : i64} {
  func.func @kernel(%arg0: i32, %arg1: memref<512x1xi32, #tpu.memory_space<vmem>>, %arg2: memref<64x1xi32, #tpu.memory_space<vmem>>, %arg3: memref<8x1xi32, #tpu.memory_space<vmem>>, %arg4: memref<64x128xf32, #tpu.memory_space<vmem>>, %arg5: memref<32x128xf32, #tpu.memory_space<vmem>>, %arg6: memref<1x128xf32, #tpu.memory_space<vmem>>, %arg7: memref<32x128xf32, #tpu.memory_space<vmem>>, %arg8: memref<32x128xf32, #tpu.memory_space<vmem>>, %arg9: memref<1x128xf32, #tpu.memory_space<vmem>>, %arg10: memref<1x32xf32, #tpu.memory_space<vmem>>, %arg11: memref<1x1xf32, #tpu.memory_space<vmem>>, %arg12: memref<8x1xf32, #tpu.memory_space<vmem>>, %arg13: memref<8x64x128xf32, #tpu.memory_space<vmem>>, %arg14: memref<8x8x128xf32, #tpu.memory_space<vmem>>) attributes {dimension_semantics = [#tpu.dimension_semantics<parallel>], iteration_bounds = array<i64: 1>, scalar_prefetch = 0 : i64, scratch_operands = 2 : i64, tpu.core_type = #tpu.core_type<tc>, window_params = [{transform_indices = @transform_0, window_bounds = array<i64: 512, 1>}, {transform_indices = @transform_1, window_bounds = array<i64: 64, 1>}, {transform_indices = @transform_2, window_bounds = array<i64: 8, 1>}, {pipeline_mode = #tpu.pipeline_mode<synchronous>, transform_indices = @transform_3, window_bounds = array<i64: 64, 128>}, {pipeline_mode = #tpu.pipeline_mode<synchronous>, transform_indices = @transform_4, window_bounds = array<i64: 32, 128>}, {pipeline_mode = #tpu.pipeline_mode<synchronous>, transform_indices = @transform_5, window_bounds = array<i64: 1, 128>}, {pipeline_mode = #tpu.pipeline_mode<synchronous>, transform_indices = @transform_6, window_bounds = array<i64: 32, 128>}, {pipeline_mode = #tpu.pipeline_mode<synchronous>, transform_indices = @transform_7, window_bounds = array<i64: 32, 128>}, {pipeline_mode = #tpu.pipeline_mode<synchronous>, transform_indices = @transform_8, window_bounds = array<i64: 1, 128>}, {pipeline_mode = #tpu.pipeline_mode<synchronous>, transform_indices = @transform_9, window_bounds = array<i64: 1, 32>}, {pipeline_mode = #tpu.pipeline_mode<synchronous>, transform_indices = @transform_10, window_bounds = array<i64: 1, 1>}, {transform_indices = @transform_11, window_bounds = array<i64: 8, 1>}]} {
    %c0 = arith.constant 0 : index
    %c0_0 = arith.constant 0 : index
    %0 = vector.load %arg1[%c0, %c0_0] : memref<512x1xi32, #tpu.memory_space<vmem>>, vector<512x1xi32>
    %1 = tpu.iota {dimensions = array<i32: 1>} : vector<512x64xi32>
    %2 = vector.broadcast %0 : vector<512x1xi32> to vector<512x64xi32>
    %3 = arith.cmpi eq, %2, %1 : vector<512x64xi32>
    %4 = arith.extui %3 : vector<512x64xi1> to vector<512x64xi32>
    %5 = arith.sitofp %4 : vector<512x64xi32> to vector<512x64xf32>
    %c0_1 = arith.constant 0 : index
    %c0_2 = arith.constant 0 : index
    %6 = vector.load %arg4[%c0_1, %c0_2] : memref<64x128xf32, #tpu.memory_space<vmem>>, vector<64x128xf32>
    %cst = arith.constant dense<0.000000e+00> : vector<512x128xf32>
    %7 = tpu.matmul %5, %6, %cst {dimension_numbers = #tpu.dot_dimension_numbers<[1], [0], [0], [1], [0, 0, 1, 1], [], []>} : vector<512x64xf32>, vector<64x128xf32>, vector<512x128xf32> -> vector<512x128xf32>
    %c0_3 = arith.constant 0 : index
    %c0_4 = arith.constant 0 : index
    %8 = vector.load %arg6[%c0_3, %c0_4] : memref<1x128xf32, #tpu.memory_space<vmem>>, vector<1x128xf32>
    %9 = vector.broadcast %8 : vector<1x128xf32> to vector<512x128xf32>
    %10 = arith.addf %7, %9 : vector<512x128xf32>
    %11 = vector.shape_cast %10 : vector<512x128xf32> to vector<8x64x128xf32>
    %c0_5 = arith.constant 0 : index
    %c0_6 = arith.constant 0 : index
    %c0_7 = arith.constant 0 : index
    %12 = vector.load %arg13[%c0_5, %c0_6, %c0_7] : memref<8x64x128xf32, #tpu.memory_space<vmem>>, vector<8x64x128xf32>
    tpu.vector_store %arg13[%c0_5, %c0_6, %c0_7], %11 {strides = array<i32>} : memref<8x64x128xf32, #tpu.memory_space<vmem>>, vector<8x64x128xf32>,
    %c0_8 = arith.constant 0 : index
    %c0_9 = arith.constant 0 : index
    %13 = vector.load %arg2[%c0_8, %c0_9] : memref<64x1xi32, #tpu.memory_space<vmem>>, vector<64x1xi32>
    %c0_10 = arith.constant 0 : index
    %c0_11 = arith.constant 0 : index
    %14 = vector.load %arg5[%c0_10, %c0_11] : memref<32x128xf32, #tpu.memory_space<vmem>>, vector<32x128xf32>
    %cst_12 = arith.constant 0.000000e+00 : f32
    %15 = vector.broadcast %cst_12 : f32 to vector<64x32xf32>
    %c0_i32 = arith.constant 0 : i32
    %16 = arith.index_cast %c0_i32 : i32 to index
    %c0_13 = arith.constant 0 : index
    %c0_14 = arith.constant 0 : index
    %17 = vector.load %arg13[%16, %c0_13, %c0_14] : memref<8x64x128xf32, #tpu.memory_space<vmem>>, vector<1x64x128xf32>
    %18 = vector.shape_cast %17 : vector<1x64x128xf32> to vector<64x128xf32>
    %cst_15 = arith.constant dense<0.000000e+00> : vector<64x128xf32>
    %19 = tpu.matmul %15, %14, %cst_15 {dimension_numbers = #tpu.dot_dimension_numbers<[1], [0], [0], [1], [0, 0, 1, 1], [], []>} : vector<64x32xf32>, vector<32x128xf32>, vector<64x128xf32> -> vector<64x128xf32>
    %20 = arith.addf %18, %19 : vector<64x128xf32>
    %cst_16 = arith.constant 0.000000e+00 : f32
    %21 = vector.broadcast %cst_16 : f32 to vector<64x128xf32>
    %22 = arith.subf %21, %20 : vector<64x128xf32>
    %23 = math.exp %22 : vector<64x128xf32>
    %cst_17 = arith.constant 1.000000e+00 : f32
    %24 = vector.broadcast %cst_17 : f32 to vector<64x128xf32>
    %25 = arith.addf %24, %23 : vector<64x128xf32>
    %26 = tpu.reciprocal %25 {approx = true} : vector<64x128xf32> -> vector<64x128xf32>
    %27 = math.tanh %20 : vector<64x128xf32>
    %28 = vector.extract_strided_slice %26 {offsets = [0, 32], sizes = [64, 32], strides = [1, 1]} : vector<64x128xf32> to vector<64x32xf32>
    %29 = arith.mulf %28, %15 : vector<64x32xf32>
    %30 = vector.extract_strided_slice %26 {offsets = [0, 0], sizes = [64, 32], strides = [1, 1]} : vector<64x128xf32> to vector<64x32xf32>
    %31 = vector.extract_strided_slice %27 {offsets = [0, 64], sizes = [64, 32], strides = [1, 1]} : vector<64x128xf32> to vector<64x32xf32>
    %32 = arith.mulf %30, %31 : vector<64x32xf32>
    %33 = arith.addf %29, %32 : vector<64x32xf32>
    %34 = vector.extract_strided_slice %26 {offsets = [0, 96], sizes = [64, 32], strides = [1, 1]} : vector<64x128xf32> to vector<64x32xf32>
    %35 = math.tanh %33 : vector<64x32xf32>
    %36 = arith.mulf %34, %35 : vector<64x32xf32>
    %37 = vector.broadcast %c0_i32 : i32 to vector<64x1xi32>
    %38 = arith.cmpi eq, %13, %37 : vector<64x1xi32>
    %39 = vector.shape_cast %38 : vector<64x1xi1> to vector<64x1xi1>
    %40 = vector.broadcast %39 : vector<64x1xi1> to vector<64x32xi1>
    %41 = arith.select %40, %36, %15 : vector<64x32xi1>, vector<64x32xf32>
    %c1_i32 = arith.constant 1 : i32
    %42 = arith.index_cast %c1_i32 : i32 to index
    %c0_18 = arith.constant 0 : index
    %c0_19 = arith.constant 0 : index
    %43 = vector.load %arg13[%42, %c0_18, %c0_19] : memref<8x64x128xf32, #tpu.memory_space<vmem>>, vector<1x64x128xf32>
    %44 = vector.shape_cast %43 : vector<1x64x128xf32> to vector<64x128xf32>
    %cst_20 = arith.constant dense<0.000000e+00> : vector<64x128xf32>
    %45 = tpu.matmul %36, %14, %cst_20 {dimension_numbers = #tpu.dot_dimension_numbers<[1], [0], [0], [1], [0, 0, 1, 1], [], []>} : vector<64x32xf32>, vector<32x128xf32>, vector<64x128xf32> -> vector<64x128xf32>
    %46 = arith.addf %44, %45 : vector<64x128xf32>
    %cst_21 = arith.constant 0.000000e+00 : f32
    %47 = vector.broadcast %cst_21 : f32 to vector<64x128xf32>
    %48 = arith.subf %47, %46 : vector<64x128xf32>
    %49 = math.exp %48 : vector<64x128xf32>
    %cst_22 = arith.constant 1.000000e+00 : f32
    %50 = vector.broadcast %cst_22 : f32 to vector<64x128xf32>
    %51 = arith.addf %50, %49 : vector<64x128xf32>
    %52 = tpu.reciprocal %51 {approx = true} : vector<64x128xf32> -> vector<64x128xf32>
    %53 = math.tanh %46 : vector<64x128xf32>
    %54 = vector.extract_strided_slice %52 {offsets = [0, 32], sizes = [64, 32], strides = [1, 1]} : vector<64x128xf32> to vector<64x32xf32>
    %55 = arith.mulf %54, %33 : vector<64x32xf32>
    %56 = vector.extract_strided_slice %52 {offsets = [0, 0], sizes = [64, 32], strides = [1, 1]} : vector<64x128xf32> to vector<64x32xf32>
    %57 = vector.extract_strided_slice %53 {offsets = [0, 64], sizes = [64, 32], strides = [1, 1]} : vector<64x128xf32> to vector<64x32xf32>
    %58 = arith.mulf %56, %57 : vector<64x32xf32>
    %59 = arith.addf %55, %58 : vector<64x32xf32>
    %60 = vector.extract_strided_slice %52 {offsets = [0, 96], sizes = [64, 32], strides = [1, 1]} : vector<64x128xf32> to vector<64x32xf32>
    %61 = math.tanh %59 : vector<64x32xf32>
    %62 = arith.mulf %60, %61 : vector<64x32xf32>
    %63 = vector.broadcast %c1_i32 : i32 to vector<64x1xi32>
    %64 = arith.cmpi eq, %13, %63 : vector<64x1xi32>
    %65 = vector.shape_cast %64 : vector<64x1xi1> to vector<64x1xi1>
    %66 = vector.broadcast %65 : vector<64x1xi1> to vector<64x32xi1>
    %67 = arith.select %66, %62, %41 : vector<64x32xi1>, vector<64x32xf32>
    %c2_i32 = arith.constant 2 : i32
    %68 = arith.index_cast %c2_i32 : i32 to index
    %c0_23 = arith.constant 0 : index
    %c0_24 = arith.constant 0 : index
    %69 = vector.load %arg13[%68, %c0_23, %c0_24] : memref<8x64x128xf32, #tpu.memory_space<vmem>>, vector<1x64x128xf32>
    %70 = vector.shape_cast %69 : vector<1x64x128xf32> to vector<64x128xf32>
    %cst_25 = arith.constant dense<0.000000e+00> : vector<64x128xf32>
    %71 = tpu.matmul %62, %14, %cst_25 {dimension_numbers = #tpu.dot_dimension_numbers<[1], [0], [0], [1], [0, 0, 1, 1], [], []>} : vector<64x32xf32>, vector<32x128xf32>, vector<64x128xf32> -> vector<64x128xf32>
    %72 = arith.addf %70, %71 : vector<64x128xf32>
    %cst_26 = arith.constant 0.000000e+00 : f32
    %73 = vector.broadcast %cst_26 : f32 to vector<64x128xf32>
    %74 = arith.subf %73, %72 : vector<64x128xf32>
    %75 = math.exp %74 : vector<64x128xf32>
    %cst_27 = arith.constant 1.000000e+00 : f32
    %76 = vector.broadcast %cst_27 : f32 to vector<64x128xf32>
    %77 = arith.addf %76, %75 : vector<64x128xf32>
    %78 = tpu.reciprocal %77 {approx = true} : vector<64x128xf32> -> vector<64x128xf32>
    %79 = math.tanh %72 : vector<64x128xf32>
    %80 = vector.extract_strided_slice %78 {offsets = [0, 32], sizes = [64, 32], strides = [1, 1]} : vector<64x128xf32> to vector<64x32xf32>
    %81 = arith.mulf %80, %59 : vector<64x32xf32>
    %82 = vector.extract_strided_slice %78 {offsets = [0, 0], sizes = [64, 32], strides = [1, 1]} : vector<64x128xf32> to vector<64x32xf32>
    %83 = vector.extract_strided_slice %79 {offsets = [0, 64], sizes = [64, 32], strides = [1, 1]} : vector<64x128xf32> to vector<64x32xf32>
    %84 = arith.mulf %82, %83 : vector<64x32xf32>
    %85 = arith.addf %81, %84 : vector<64x32xf32>
    %86 = vector.extract_strided_slice %78 {offsets = [0, 96], sizes = [64, 32], strides = [1, 1]} : vector<64x128xf32> to vector<64x32xf32>
    %87 = math.tanh %85 : vector<64x32xf32>
    %88 = arith.mulf %86, %87 : vector<64x32xf32>
    %89 = vector.broadcast %c2_i32 : i32 to vector<64x1xi32>
    %90 = arith.cmpi eq, %13, %89 : vector<64x1xi32>
    %91 = vector.shape_cast %90 : vector<64x1xi1> to vector<64x1xi1>
    %92 = vector.broadcast %91 : vector<64x1xi1> to vector<64x32xi1>
    %93 = arith.select %92, %88, %67 : vector<64x32xi1>, vector<64x32xf32>
    %c3_i32 = arith.constant 3 : i32
    %94 = arith.index_cast %c3_i32 : i32 to index
    %c0_28 = arith.constant 0 : index
    %c0_29 = arith.constant 0 : index
    %95 = vector.load %arg13[%94, %c0_28, %c0_29] : memref<8x64x128xf32, #tpu.memory_space<vmem>>, vector<1x64x128xf32>
    %96 = vector.shape_cast %95 : vector<1x64x128xf32> to vector<64x128xf32>
    %cst_30 = arith.constant dense<0.000000e+00> : vector<64x128xf32>
    %97 = tpu.matmul %88, %14, %cst_30 {dimension_numbers = #tpu.dot_dimension_numbers<[1], [0], [0], [1], [0, 0, 1, 1], [], []>} : vector<64x32xf32>, vector<32x128xf32>, vector<64x128xf32> -> vector<64x128xf32>
    %98 = arith.addf %96, %97 : vector<64x128xf32>
    %cst_31 = arith.constant 0.000000e+00 : f32
    %99 = vector.broadcast %cst_31 : f32 to vector<64x128xf32>
    %100 = arith.subf %99, %98 : vector<64x128xf32>
    %101 = math.exp %100 : vector<64x128xf32>
    %cst_32 = arith.constant 1.000000e+00 : f32
    %102 = vector.broadcast %cst_32 : f32 to vector<64x128xf32>
    %103 = arith.addf %102, %101 : vector<64x128xf32>
    %104 = tpu.reciprocal %103 {approx = true} : vector<64x128xf32> -> vector<64x128xf32>
    %105 = math.tanh %98 : vector<64x128xf32>
    %106 = vector.extract_strided_slice %104 {offsets = [0, 32], sizes = [64, 32], strides = [1, 1]} : vector<64x128xf32> to vector<64x32xf32>
    %107 = arith.mulf %106, %85 : vector<64x32xf32>
    %108 = vector.extract_strided_slice %104 {offsets = [0, 0], sizes = [64, 32], strides = [1, 1]} : vector<64x128xf32> to vector<64x32xf32>
    %109 = vector.extract_strided_slice %105 {offsets = [0, 64], sizes = [64, 32], strides = [1, 1]} : vector<64x128xf32> to vector<64x32xf32>
    %110 = arith.mulf %108, %109 : vector<64x32xf32>
    %111 = arith.addf %107, %110 : vector<64x32xf32>
    %112 = vector.extract_strided_slice %104 {offsets = [0, 96], sizes = [64, 32], strides = [1, 1]} : vector<64x128xf32> to vector<64x32xf32>
    %113 = math.tanh %111 : vector<64x32xf32>
    %114 = arith.mulf %112, %113 : vector<64x32xf32>
    %115 = vector.broadcast %c3_i32 : i32 to vector<64x1xi32>
    %116 = arith.cmpi eq, %13, %115 : vector<64x1xi32>
    %117 = vector.shape_cast %116 : vector<64x1xi1> to vector<64x1xi1>
    %118 = vector.broadcast %117 : vector<64x1xi1> to vector<64x32xi1>
    %119 = arith.select %118, %114, %93 : vector<64x32xi1>, vector<64x32xf32>
    %c4_i32 = arith.constant 4 : i32
    %120 = arith.index_cast %c4_i32 : i32 to index
    %c0_33 = arith.constant 0 : index
    %c0_34 = arith.constant 0 : index
    %121 = vector.load %arg13[%120, %c0_33, %c0_34] : memref<8x64x128xf32, #tpu.memory_space<vmem>>, vector<1x64x128xf32>
    %122 = vector.shape_cast %121 : vector<1x64x128xf32> to vector<64x128xf32>
    %cst_35 = arith.constant dense<0.000000e+00> : vector<64x128xf32>
    %123 = tpu.matmul %114, %14, %cst_35 {dimension_numbers = #tpu.dot_dimension_numbers<[1], [0], [0], [1], [0, 0, 1, 1], [], []>} : vector<64x32xf32>, vector<32x128xf32>, vector<64x128xf32> -> vector<64x128xf32>
    %124 = arith.addf %122, %123 : vector<64x128xf32>
    %cst_36 = arith.constant 0.000000e+00 : f32
    %125 = vector.broadcast %cst_36 : f32 to vector<64x128xf32>
    %126 = arith.subf %125, %124 : vector<64x128xf32>
    %127 = math.exp %126 : vector<64x128xf32>
    %cst_37 = arith.constant 1.000000e+00 : f32
    %128 = vector.broadcast %cst_37 : f32 to vector<64x128xf32>
    %129 = arith.addf %128, %127 : vector<64x128xf32>
    %130 = tpu.reciprocal %129 {approx = true} : vector<64x128xf32> -> vector<64x128xf32>
    %131 = math.tanh %124 : vector<64x128xf32>
    %132 = vector.extract_strided_slice %130 {offsets = [0, 32], sizes = [64, 32], strides = [1, 1]} : vector<64x128xf32> to vector<64x32xf32>
    %133 = arith.mulf %132, %111 : vector<64x32xf32>
    %134 = vector.extract_strided_slice %130 {offsets = [0, 0], sizes = [64, 32], strides = [1, 1]} : vector<64x128xf32> to vector<64x32xf32>
    %135 = vector.extract_strided_slice %131 {offsets = [0, 64], sizes = [64, 32], strides = [1, 1]} : vector<64x128xf32> to vector<64x32xf32>
    %136 = arith.mulf %134, %135 : vector<64x32xf32>
    %137 = arith.addf %133, %136 : vector<64x32xf32>
    %138 = vector.extract_strided_slice %130 {offsets = [0, 96], sizes = [64, 32], strides = [1, 1]} : vector<64x128xf32> to vector<64x32xf32>
    %139 = math.tanh %137 : vector<64x32xf32>
    %140 = arith.mulf %138, %139 : vector<64x32xf32>
    %141 = vector.broadcast %c4_i32 : i32 to vector<64x1xi32>
    %142 = arith.cmpi eq, %13, %141 : vector<64x1xi32>
    %143 = vector.shape_cast %142 : vector<64x1xi1> to vector<64x1xi1>
    %144 = vector.broadcast %143 : vector<64x1xi1> to vector<64x32xi1>
    %145 = arith.select %144, %140, %119 : vector<64x32xi1>, vector<64x32xf32>
    %c5_i32 = arith.constant 5 : i32
    %146 = arith.index_cast %c5_i32 : i32 to index
    %c0_38 = arith.constant 0 : index
    %c0_39 = arith.constant 0 : index
    %147 = vector.load %arg13[%146, %c0_38, %c0_39] : memref<8x64x128xf32, #tpu.memory_space<vmem>>, vector<1x64x128xf32>
    %148 = vector.shape_cast %147 : vector<1x64x128xf32> to vector<64x128xf32>
    %cst_40 = arith.constant dense<0.000000e+00> : vector<64x128xf32>
    %149 = tpu.matmul %140, %14, %cst_40 {dimension_numbers = #tpu.dot_dimension_numbers<[1], [0], [0], [1], [0, 0, 1, 1], [], []>} : vector<64x32xf32>, vector<32x128xf32>, vector<64x128xf32> -> vector<64x128xf32>
    %150 = arith.addf %148, %149 : vector<64x128xf32>
    %cst_41 = arith.constant 0.000000e+00 : f32
    %151 = vector.broadcast %cst_41 : f32 to vector<64x128xf32>
    %152 = arith.subf %151, %150 : vector<64x128xf32>
    %153 = math.exp %152 : vector<64x128xf32>
    %cst_42 = arith.constant 1.000000e+00 : f32
    %154 = vector.broadcast %cst_42 : f32 to vector<64x128xf32>
    %155 = arith.addf %154, %153 : vector<64x128xf32>
    %156 = tpu.reciprocal %155 {approx = true} : vector<64x128xf32> -> vector<64x128xf32>
    %157 = math.tanh %150 : vector<64x128xf32>
    %158 = vector.extract_strided_slice %156 {offsets = [0, 32], sizes = [64, 32], strides = [1, 1]} : vector<64x128xf32> to vector<64x32xf32>
    %159 = arith.mulf %158, %137 : vector<64x32xf32>
    %160 = vector.extract_strided_slice %156 {offsets = [0, 0], sizes = [64, 32], strides = [1, 1]} : vector<64x128xf32> to vector<64x32xf32>
    %161 = vector.extract_strided_slice %157 {offsets = [0, 64], sizes = [64, 32], strides = [1, 1]} : vector<64x128xf32> to vector<64x32xf32>
    %162 = arith.mulf %160, %161 : vector<64x32xf32>
    %163 = arith.addf %159, %162 : vector<64x32xf32>
    %164 = vector.extract_strided_slice %156 {offsets = [0, 96], sizes = [64, 32], strides = [1, 1]} : vector<64x128xf32> to vector<64x32xf32>
    %165 = math.tanh %163 : vector<64x32xf32>
    %166 = arith.mulf %164, %165 : vector<64x32xf32>
    %167 = vector.broadcast %c5_i32 : i32 to vector<64x1xi32>
    %168 = arith.cmpi eq, %13, %167 : vector<64x1xi32>
    %169 = vector.shape_cast %168 : vector<64x1xi1> to vector<64x1xi1>
    %170 = vector.broadcast %169 : vector<64x1xi1> to vector<64x32xi1>
    %171 = arith.select %170, %166, %145 : vector<64x32xi1>, vector<64x32xf32>
    %c6_i32 = arith.constant 6 : i32
    %172 = arith.index_cast %c6_i32 : i32 to index
    %c0_43 = arith.constant 0 : index
    %c0_44 = arith.constant 0 : index
    %173 = vector.load %arg13[%172, %c0_43, %c0_44] : memref<8x64x128xf32, #tpu.memory_space<vmem>>, vector<1x64x128xf32>
    %174 = vector.shape_cast %173 : vector<1x64x128xf32> to vector<64x128xf32>
    %cst_45 = arith.constant dense<0.000000e+00> : vector<64x128xf32>
    %175 = tpu.matmul %166, %14, %cst_45 {dimension_numbers = #tpu.dot_dimension_numbers<[1], [0], [0], [1], [0, 0, 1, 1], [], []>} : vector<64x32xf32>, vector<32x128xf32>, vector<64x128xf32> -> vector<64x128xf32>
    %176 = arith.addf %174, %175 : vector<64x128xf32>
    %cst_46 = arith.constant 0.000000e+00 : f32
    %177 = vector.broadcast %cst_46 : f32 to vector<64x128xf32>
    %178 = arith.subf %177, %176 : vector<64x128xf32>
    %179 = math.exp %178 : vector<64x128xf32>
    %cst_47 = arith.constant 1.000000e+00 : f32
    %180 = vector.broadcast %cst_47 : f32 to vector<64x128xf32>
    %181 = arith.addf %180, %179 : vector<64x128xf32>
    %182 = tpu.reciprocal %181 {approx = true} : vector<64x128xf32> -> vector<64x128xf32>
    %183 = math.tanh %176 : vector<64x128xf32>
    %184 = vector.extract_strided_slice %182 {offsets = [0, 32], sizes = [64, 32], strides = [1, 1]} : vector<64x128xf32> to vector<64x32xf32>
    %185 = arith.mulf %184, %163 : vector<64x32xf32>
    %186 = vector.extract_strided_slice %182 {offsets = [0, 0], sizes = [64, 32], strides = [1, 1]} : vector<64x128xf32> to vector<64x32xf32>
    %187 = vector.extract_strided_slice %183 {offsets = [0, 64], sizes = [64, 32], strides = [1, 1]} : vector<64x128xf32> to vector<64x32xf32>
    %188 = arith.mulf %186, %187 : vector<64x32xf32>
    %189 = arith.addf %185, %188 : vector<64x32xf32>
    %190 = vector.extract_strided_slice %182 {offsets = [0, 96], sizes = [64, 32], strides = [1, 1]} : vector<64x128xf32> to vector<64x32xf32>
    %191 = math.tanh %189 : vector<64x32xf32>
    %192 = arith.mulf %190, %191 : vector<64x32xf32>
    %193 = vector.broadcast %c6_i32 : i32 to vector<64x1xi32>
    %194 = arith.cmpi eq, %13, %193 : vector<64x1xi32>
    %195 = vector.shape_cast %194 : vector<64x1xi1> to vector<64x1xi1>
    %196 = vector.broadcast %195 : vector<64x1xi1> to vector<64x32xi1>
    %197 = arith.select %196, %192, %171 : vector<64x32xi1>, vector<64x32xf32>
    %c7_i32 = arith.constant 7 : i32
    %198 = arith.index_cast %c7_i32 : i32 to index
    %c0_48 = arith.constant 0 : index
    %c0_49 = arith.constant 0 : index
    %199 = vector.load %arg13[%198, %c0_48, %c0_49] : memref<8x64x128xf32, #tpu.memory_space<vmem>>, vector<1x64x128xf32>
    %200 = vector.shape_cast %199 : vector<1x64x128xf32> to vector<64x128xf32>
    %cst_50 = arith.constant dense<0.000000e+00> : vector<64x128xf32>
    %201 = tpu.matmul %192, %14, %cst_50 {dimension_numbers = #tpu.dot_dimension_numbers<[1], [0], [0], [1], [0, 0, 1, 1], [], []>} : vector<64x32xf32>, vector<32x128xf32>, vector<64x128xf32> -> vector<64x128xf32>
    %202 = arith.addf %200, %201 : vector<64x128xf32>
    %cst_51 = arith.constant 0.000000e+00 : f32
    %203 = vector.broadcast %cst_51 : f32 to vector<64x128xf32>
    %204 = arith.subf %203, %202 : vector<64x128xf32>
    %205 = math.exp %204 : vector<64x128xf32>
    %cst_52 = arith.constant 1.000000e+00 : f32
    %206 = vector.broadcast %cst_52 : f32 to vector<64x128xf32>
    %207 = arith.addf %206, %205 : vector<64x128xf32>
    %208 = tpu.reciprocal %207 {approx = true} : vector<64x128xf32> -> vector<64x128xf32>
    %209 = math.tanh %202 : vector<64x128xf32>
    %210 = vector.extract_strided_slice %208 {offsets = [0, 32], sizes = [64, 32], strides = [1, 1]} : vector<64x128xf32> to vector<64x32xf32>
    %211 = arith.mulf %210, %189 : vector<64x32xf32>
    %212 = vector.extract_strided_slice %208 {offsets = [0, 0], sizes = [64, 32], strides = [1, 1]} : vector<64x128xf32> to vector<64x32xf32>
    %213 = vector.extract_strided_slice %209 {offsets = [0, 64], sizes = [64, 32], strides = [1, 1]} : vector<64x128xf32> to vector<64x32xf32>
    %214 = arith.mulf %212, %213 : vector<64x32xf32>
    %215 = arith.addf %211, %214 : vector<64x32xf32>
    %216 = vector.extract_strided_slice %208 {offsets = [0, 96], sizes = [64, 32], strides = [1, 1]} : vector<64x128xf32> to vector<64x32xf32>
    %217 = math.tanh %215 : vector<64x32xf32>
    %218 = arith.mulf %216, %217 : vector<64x32xf32>
    %219 = vector.broadcast %c7_i32 : i32 to vector<64x1xi32>
    %220 = arith.cmpi eq, %13, %219 : vector<64x1xi32>
    %221 = vector.shape_cast %220 : vector<64x1xi1> to vector<64x1xi1>
    %222 = vector.broadcast %221 : vector<64x1xi1> to vector<64x32xi1>
    %223 = arith.select %222, %218, %197 : vector<64x32xi1>, vector<64x32xf32>
    %c8_i32 = arith.constant 8 : i32
    %c0_53 = arith.constant 0 : index
    %c0_54 = arith.constant 0 : index
    %224 = vector.load %arg3[%c0_53, %c0_54] : memref<8x1xi32, #tpu.memory_space<vmem>>, vector<8x1xi32>
    %c0_55 = arith.constant 0 : index
    %c0_56 = arith.constant 0 : index
    %225 = vector.load %arg7[%c0_55, %c0_56] : memref<32x128xf32, #tpu.memory_space<vmem>>, vector<32x128xf32>
    %cst_57 = arith.constant dense<0.000000e+00> : vector<64x128xf32>
    %226 = tpu.matmul %223, %225, %cst_57 {dimension_numbers = #tpu.dot_dimension_numbers<[1], [0], [0], [1], [0, 0, 1, 1], [], []>} : vector<64x32xf32>, vector<32x128xf32>, vector<64x128xf32> -> vector<64x128xf32>
    %c0_58 = arith.constant 0 : index
    %c0_59 = arith.constant 0 : index
    %227 = vector.load %arg9[%c0_58, %c0_59] : memref<1x128xf32, #tpu.memory_space<vmem>>, vector<1x128xf32>
    %228 = vector.broadcast %227 : vector<1x128xf32> to vector<64x128xf32>
    %229 = arith.addf %226, %228 : vector<64x128xf32>
    %230 = vector.shape_cast %229 : vector<64x128xf32> to vector<8x8x128xf32>
    %c0_60 = arith.constant 0 : index
    %c0_61 = arith.constant 0 : index
    %c0_62 = arith.constant 0 : index
    %231 = vector.load %arg14[%c0_60, %c0_61, %c0_62] : memref<8x8x128xf32, #tpu.memory_space<vmem>>, vector<8x8x128xf32>
    tpu.vector_store %arg14[%c0_60, %c0_61, %c0_62], %230 {strides = array<i32>} : memref<8x8x128xf32, #tpu.memory_space<vmem>>, vector<8x8x128xf32>,
    %c0_63 = arith.constant 0 : index
    %c0_64 = arith.constant 0 : index
    %232 = vector.load %arg8[%c0_63, %c0_64] : memref<32x128xf32, #tpu.memory_space<vmem>>, vector<32x128xf32>
    %cst_65 = arith.constant 0.000000e+00 : f32
    %233 = vector.broadcast %cst_65 : f32 to vector<8x32xf32>
    %c0_i32_66 = arith.constant 0 : i32
    %234 = arith.index_cast %c0_i32_66 : i32 to index
    %c0_67 = arith.constant 0 : index
    %c0_68 = arith.constant 0 : index
    %235 = vector.load %arg14[%234, %c0_67, %c0_68] : memref<8x8x128xf32, #tpu.memory_space<vmem>>, vector<1x8x128xf32>
    %236 = vector.shape_cast %235 : vector<1x8x128xf32> to vector<8x128xf32>
    %cst_69 = arith.constant dense<0.000000e+00> : vector<8x128xf32>
    %237 = tpu.matmul %233, %232, %cst_69 {dimension_numbers = #tpu.dot_dimension_numbers<[1], [0], [0], [1], [0, 0, 1, 1], [], []>} : vector<8x32xf32>, vector<32x128xf32>, vector<8x128xf32> -> vector<8x128xf32>
    %238 = arith.addf %236, %237 : vector<8x128xf32>
    %cst_70 = arith.constant 0.000000e+00 : f32
    %239 = vector.broadcast %cst_70 : f32 to vector<8x128xf32>
    %240 = arith.subf %239, %238 : vector<8x128xf32>
    %241 = math.exp %240 : vector<8x128xf32>
    %cst_71 = arith.constant 1.000000e+00 : f32
    %242 = vector.broadcast %cst_71 : f32 to vector<8x128xf32>
    %243 = arith.addf %242, %241 : vector<8x128xf32>
    %244 = tpu.reciprocal %243 {approx = true} : vector<8x128xf32> -> vector<8x128xf32>
    %245 = math.tanh %238 : vector<8x128xf32>
    %246 = vector.extract_strided_slice %244 {offsets = [0, 32], sizes = [8, 32], strides = [1, 1]} : vector<8x128xf32> to vector<8x32xf32>
    %247 = arith.mulf %246, %233 : vector<8x32xf32>
    %248 = vector.extract_strided_slice %244 {offsets = [0, 0], sizes = [8, 32], strides = [1, 1]} : vector<8x128xf32> to vector<8x32xf32>
    %249 = vector.extract_strided_slice %245 {offsets = [0, 64], sizes = [8, 32], strides = [1, 1]} : vector<8x128xf32> to vector<8x32xf32>
    %250 = arith.mulf %248, %249 : vector<8x32xf32>
    %251 = arith.addf %247, %250 : vector<8x32xf32>
    %252 = vector.extract_strided_slice %244 {offsets = [0, 96], sizes = [8, 32], strides = [1, 1]} : vector<8x128xf32> to vector<8x32xf32>
    %253 = math.tanh %251 : vector<8x32xf32>
    %254 = arith.mulf %252, %253 : vector<8x32xf32>
    %255 = vector.broadcast %c0_i32_66 : i32 to vector<8x1xi32>
    %256 = arith.cmpi eq, %224, %255 : vector<8x1xi32>
    %257 = vector.shape_cast %256 : vector<8x1xi1> to vector<8x1xi1>
    %258 = vector.broadcast %257 : vector<8x1xi1> to vector<8x32xi1>
    %259 = arith.select %258, %254, %233 : vector<8x32xi1>, vector<8x32xf32>
    %c1_i32_72 = arith.constant 1 : i32
    %260 = arith.index_cast %c1_i32_72 : i32 to index
    %c0_73 = arith.constant 0 : index
    %c0_74 = arith.constant 0 : index
    %261 = vector.load %arg14[%260, %c0_73, %c0_74] : memref<8x8x128xf32, #tpu.memory_space<vmem>>, vector<1x8x128xf32>
    %262 = vector.shape_cast %261 : vector<1x8x128xf32> to vector<8x128xf32>
    %cst_75 = arith.constant dense<0.000000e+00> : vector<8x128xf32>
    %263 = tpu.matmul %254, %232, %cst_75 {dimension_numbers = #tpu.dot_dimension_numbers<[1], [0], [0], [1], [0, 0, 1, 1], [], []>} : vector<8x32xf32>, vector<32x128xf32>, vector<8x128xf32> -> vector<8x128xf32>
    %264 = arith.addf %262, %263 : vector<8x128xf32>
    %cst_76 = arith.constant 0.000000e+00 : f32
    %265 = vector.broadcast %cst_76 : f32 to vector<8x128xf32>
    %266 = arith.subf %265, %264 : vector<8x128xf32>
    %267 = math.exp %266 : vector<8x128xf32>
    %cst_77 = arith.constant 1.000000e+00 : f32
    %268 = vector.broadcast %cst_77 : f32 to vector<8x128xf32>
    %269 = arith.addf %268, %267 : vector<8x128xf32>
    %270 = tpu.reciprocal %269 {approx = true} : vector<8x128xf32> -> vector<8x128xf32>
    %271 = math.tanh %264 : vector<8x128xf32>
    %272 = vector.extract_strided_slice %270 {offsets = [0, 32], sizes = [8, 32], strides = [1, 1]} : vector<8x128xf32> to vector<8x32xf32>
    %273 = arith.mulf %272, %251 : vector<8x32xf32>
    %274 = vector.extract_strided_slice %270 {offsets = [0, 0], sizes = [8, 32], strides = [1, 1]} : vector<8x128xf32> to vector<8x32xf32>
    %275 = vector.extract_strided_slice %271 {offsets = [0, 64], sizes = [8, 32], strides = [1, 1]} : vector<8x128xf32> to vector<8x32xf32>
    %276 = arith.mulf %274, %275 : vector<8x32xf32>
    %277 = arith.addf %273, %276 : vector<8x32xf32>
    %278 = vector.extract_strided_slice %270 {offsets = [0, 96], sizes = [8, 32], strides = [1, 1]} : vector<8x128xf32> to vector<8x32xf32>
    %279 = math.tanh %277 : vector<8x32xf32>
    %280 = arith.mulf %278, %279 : vector<8x32xf32>
    %281 = vector.broadcast %c1_i32_72 : i32 to vector<8x1xi32>
    %282 = arith.cmpi eq, %224, %281 : vector<8x1xi32>
    %283 = vector.shape_cast %282 : vector<8x1xi1> to vector<8x1xi1>
    %284 = vector.broadcast %283 : vector<8x1xi1> to vector<8x32xi1>
    %285 = arith.select %284, %280, %259 : vector<8x32xi1>, vector<8x32xf32>
    %c2_i32_78 = arith.constant 2 : i32
    %286 = arith.index_cast %c2_i32_78 : i32 to index
    %c0_79 = arith.constant 0 : index
    %c0_80 = arith.constant 0 : index
    %287 = vector.load %arg14[%286, %c0_79, %c0_80] : memref<8x8x128xf32, #tpu.memory_space<vmem>>, vector<1x8x128xf32>
    %288 = vector.shape_cast %287 : vector<1x8x128xf32> to vector<8x128xf32>
    %cst_81 = arith.constant dense<0.000000e+00> : vector<8x128xf32>
    %289 = tpu.matmul %280, %232, %cst_81 {dimension_numbers = #tpu.dot_dimension_numbers<[1], [0], [0], [1], [0, 0, 1, 1], [], []>} : vector<8x32xf32>, vector<32x128xf32>, vector<8x128xf32> -> vector<8x128xf32>
    %290 = arith.addf %288, %289 : vector<8x128xf32>
    %cst_82 = arith.constant 0.000000e+00 : f32
    %291 = vector.broadcast %cst_82 : f32 to vector<8x128xf32>
    %292 = arith.subf %291, %290 : vector<8x128xf32>
    %293 = math.exp %292 : vector<8x128xf32>
    %cst_83 = arith.constant 1.000000e+00 : f32
    %294 = vector.broadcast %cst_83 : f32 to vector<8x128xf32>
    %295 = arith.addf %294, %293 : vector<8x128xf32>
    %296 = tpu.reciprocal %295 {approx = true} : vector<8x128xf32> -> vector<8x128xf32>
    %297 = math.tanh %290 : vector<8x128xf32>
    %298 = vector.extract_strided_slice %296 {offsets = [0, 32], sizes = [8, 32], strides = [1, 1]} : vector<8x128xf32> to vector<8x32xf32>
    %299 = arith.mulf %298, %277 : vector<8x32xf32>
    %300 = vector.extract_strided_slice %296 {offsets = [0, 0], sizes = [8, 32], strides = [1, 1]} : vector<8x128xf32> to vector<8x32xf32>
    %301 = vector.extract_strided_slice %297 {offsets = [0, 64], sizes = [8, 32], strides = [1, 1]} : vector<8x128xf32> to vector<8x32xf32>
    %302 = arith.mulf %300, %301 : vector<8x32xf32>
    %303 = arith.addf %299, %302 : vector<8x32xf32>
    %304 = vector.extract_strided_slice %296 {offsets = [0, 96], sizes = [8, 32], strides = [1, 1]} : vector<8x128xf32> to vector<8x32xf32>
    %305 = math.tanh %303 : vector<8x32xf32>
    %306 = arith.mulf %304, %305 : vector<8x32xf32>
    %307 = vector.broadcast %c2_i32_78 : i32 to vector<8x1xi32>
    %308 = arith.cmpi eq, %224, %307 : vector<8x1xi32>
    %309 = vector.shape_cast %308 : vector<8x1xi1> to vector<8x1xi1>
    %310 = vector.broadcast %309 : vector<8x1xi1> to vector<8x32xi1>
    %311 = arith.select %310, %306, %285 : vector<8x32xi1>, vector<8x32xf32>
    %c3_i32_84 = arith.constant 3 : i32
    %312 = arith.index_cast %c3_i32_84 : i32 to index
    %c0_85 = arith.constant 0 : index
    %c0_86 = arith.constant 0 : index
    %313 = vector.load %arg14[%312, %c0_85, %c0_86] : memref<8x8x128xf32, #tpu.memory_space<vmem>>, vector<1x8x128xf32>
    %314 = vector.shape_cast %313 : vector<1x8x128xf32> to vector<8x128xf32>
    %cst_87 = arith.constant dense<0.000000e+00> : vector<8x128xf32>
    %315 = tpu.matmul %306, %232, %cst_87 {dimension_numbers = #tpu.dot_dimension_numbers<[1], [0], [0], [1], [0, 0, 1, 1], [], []>} : vector<8x32xf32>, vector<32x128xf32>, vector<8x128xf32> -> vector<8x128xf32>
    %316 = arith.addf %314, %315 : vector<8x128xf32>
    %cst_88 = arith.constant 0.000000e+00 : f32
    %317 = vector.broadcast %cst_88 : f32 to vector<8x128xf32>
    %318 = arith.subf %317, %316 : vector<8x128xf32>
    %319 = math.exp %318 : vector<8x128xf32>
    %cst_89 = arith.constant 1.000000e+00 : f32
    %320 = vector.broadcast %cst_89 : f32 to vector<8x128xf32>
    %321 = arith.addf %320, %319 : vector<8x128xf32>
    %322 = tpu.reciprocal %321 {approx = true} : vector<8x128xf32> -> vector<8x128xf32>
    %323 = math.tanh %316 : vector<8x128xf32>
    %324 = vector.extract_strided_slice %322 {offsets = [0, 32], sizes = [8, 32], strides = [1, 1]} : vector<8x128xf32> to vector<8x32xf32>
    %325 = arith.mulf %324, %303 : vector<8x32xf32>
    %326 = vector.extract_strided_slice %322 {offsets = [0, 0], sizes = [8, 32], strides = [1, 1]} : vector<8x128xf32> to vector<8x32xf32>
    %327 = vector.extract_strided_slice %323 {offsets = [0, 64], sizes = [8, 32], strides = [1, 1]} : vector<8x128xf32> to vector<8x32xf32>
    %328 = arith.mulf %326, %327 : vector<8x32xf32>
    %329 = arith.addf %325, %328 : vector<8x32xf32>
    %330 = vector.extract_strided_slice %322 {offsets = [0, 96], sizes = [8, 32], strides = [1, 1]} : vector<8x128xf32> to vector<8x32xf32>
    %331 = math.tanh %329 : vector<8x32xf32>
    %332 = arith.mulf %330, %331 : vector<8x32xf32>
    %333 = vector.broadcast %c3_i32_84 : i32 to vector<8x1xi32>
    %334 = arith.cmpi eq, %224, %333 : vector<8x1xi32>
    %335 = vector.shape_cast %334 : vector<8x1xi1> to vector<8x1xi1>
    %336 = vector.broadcast %335 : vector<8x1xi1> to vector<8x32xi1>
    %337 = arith.select %336, %332, %311 : vector<8x32xi1>, vector<8x32xf32>
    %c4_i32_90 = arith.constant 4 : i32
    %338 = arith.index_cast %c4_i32_90 : i32 to index
    %c0_91 = arith.constant 0 : index
    %c0_92 = arith.constant 0 : index
    %339 = vector.load %arg14[%338, %c0_91, %c0_92] : memref<8x8x128xf32, #tpu.memory_space<vmem>>, vector<1x8x128xf32>
    %340 = vector.shape_cast %339 : vector<1x8x128xf32> to vector<8x128xf32>
    %cst_93 = arith.constant dense<0.000000e+00> : vector<8x128xf32>
    %341 = tpu.matmul %332, %232, %cst_93 {dimension_numbers = #tpu.dot_dimension_numbers<[1], [0], [0], [1], [0, 0, 1, 1], [], []>} : vector<8x32xf32>, vector<32x128xf32>, vector<8x128xf32> -> vector<8x128xf32>
    %342 = arith.addf %340, %341 : vector<8x128xf32>
    %cst_94 = arith.constant 0.000000e+00 : f32
    %343 = vector.broadcast %cst_94 : f32 to vector<8x128xf32>
    %344 = arith.subf %343, %342 : vector<8x128xf32>
    %345 = math.exp %344 : vector<8x128xf32>
    %cst_95 = arith.constant 1.000000e+00 : f32
    %346 = vector.broadcast %cst_95 : f32 to vector<8x128xf32>
    %347 = arith.addf %346, %345 : vector<8x128xf32>
    %348 = tpu.reciprocal %347 {approx = true} : vector<8x128xf32> -> vector<8x128xf32>
    %349 = math.tanh %342 : vector<8x128xf32>
    %350 = vector.extract_strided_slice %348 {offsets = [0, 32], sizes = [8, 32], strides = [1, 1]} : vector<8x128xf32> to vector<8x32xf32>
    %351 = arith.mulf %350, %329 : vector<8x32xf32>
    %352 = vector.extract_strided_slice %348 {offsets = [0, 0], sizes = [8, 32], strides = [1, 1]} : vector<8x128xf32> to vector<8x32xf32>
    %353 = vector.extract_strided_slice %349 {offsets = [0, 64], sizes = [8, 32], strides = [1, 1]} : vector<8x128xf32> to vector<8x32xf32>
    %354 = arith.mulf %352, %353 : vector<8x32xf32>
    %355 = arith.addf %351, %354 : vector<8x32xf32>
    %356 = vector.extract_strided_slice %348 {offsets = [0, 96], sizes = [8, 32], strides = [1, 1]} : vector<8x128xf32> to vector<8x32xf32>
    %357 = math.tanh %355 : vector<8x32xf32>
    %358 = arith.mulf %356, %357 : vector<8x32xf32>
    %359 = vector.broadcast %c4_i32_90 : i32 to vector<8x1xi32>
    %360 = arith.cmpi eq, %224, %359 : vector<8x1xi32>
    %361 = vector.shape_cast %360 : vector<8x1xi1> to vector<8x1xi1>
    %362 = vector.broadcast %361 : vector<8x1xi1> to vector<8x32xi1>
    %363 = arith.select %362, %358, %337 : vector<8x32xi1>, vector<8x32xf32>
    %c5_i32_96 = arith.constant 5 : i32
    %364 = arith.index_cast %c5_i32_96 : i32 to index
    %c0_97 = arith.constant 0 : index
    %c0_98 = arith.constant 0 : index
    %365 = vector.load %arg14[%364, %c0_97, %c0_98] : memref<8x8x128xf32, #tpu.memory_space<vmem>>, vector<1x8x128xf32>
    %366 = vector.shape_cast %365 : vector<1x8x128xf32> to vector<8x128xf32>
    %cst_99 = arith.constant dense<0.000000e+00> : vector<8x128xf32>
    %367 = tpu.matmul %358, %232, %cst_99 {dimension_numbers = #tpu.dot_dimension_numbers<[1], [0], [0], [1], [0, 0, 1, 1], [], []>} : vector<8x32xf32>, vector<32x128xf32>, vector<8x128xf32> -> vector<8x128xf32>
    %368 = arith.addf %366, %367 : vector<8x128xf32>
    %cst_100 = arith.constant 0.000000e+00 : f32
    %369 = vector.broadcast %cst_100 : f32 to vector<8x128xf32>
    %370 = arith.subf %369, %368 : vector<8x128xf32>
    %371 = math.exp %370 : vector<8x128xf32>
    %cst_101 = arith.constant 1.000000e+00 : f32
    %372 = vector.broadcast %cst_101 : f32 to vector<8x128xf32>
    %373 = arith.addf %372, %371 : vector<8x128xf32>
    %374 = tpu.reciprocal %373 {approx = true} : vector<8x128xf32> -> vector<8x128xf32>
    %375 = math.tanh %368 : vector<8x128xf32>
    %376 = vector.extract_strided_slice %374 {offsets = [0, 32], sizes = [8, 32], strides = [1, 1]} : vector<8x128xf32> to vector<8x32xf32>
    %377 = arith.mulf %376, %355 : vector<8x32xf32>
    %378 = vector.extract_strided_slice %374 {offsets = [0, 0], sizes = [8, 32], strides = [1, 1]} : vector<8x128xf32> to vector<8x32xf32>
    %379 = vector.extract_strided_slice %375 {offsets = [0, 64], sizes = [8, 32], strides = [1, 1]} : vector<8x128xf32> to vector<8x32xf32>
    %380 = arith.mulf %378, %379 : vector<8x32xf32>
    %381 = arith.addf %377, %380 : vector<8x32xf32>
    %382 = vector.extract_strided_slice %374 {offsets = [0, 96], sizes = [8, 32], strides = [1, 1]} : vector<8x128xf32> to vector<8x32xf32>
    %383 = math.tanh %381 : vector<8x32xf32>
    %384 = arith.mulf %382, %383 : vector<8x32xf32>
    %385 = vector.broadcast %c5_i32_96 : i32 to vector<8x1xi32>
    %386 = arith.cmpi eq, %224, %385 : vector<8x1xi32>
    %387 = vector.shape_cast %386 : vector<8x1xi1> to vector<8x1xi1>
    %388 = vector.broadcast %387 : vector<8x1xi1> to vector<8x32xi1>
    %389 = arith.select %388, %384, %363 : vector<8x32xi1>, vector<8x32xf32>
    %c6_i32_102 = arith.constant 6 : i32
    %390 = arith.index_cast %c6_i32_102 : i32 to index
    %c0_103 = arith.constant 0 : index
    %c0_104 = arith.constant 0 : index
    %391 = vector.load %arg14[%390, %c0_103, %c0_104] : memref<8x8x128xf32, #tpu.memory_space<vmem>>, vector<1x8x128xf32>
    %392 = vector.shape_cast %391 : vector<1x8x128xf32> to vector<8x128xf32>
    %cst_105 = arith.constant dense<0.000000e+00> : vector<8x128xf32>
    %393 = tpu.matmul %384, %232, %cst_105 {dimension_numbers = #tpu.dot_dimension_numbers<[1], [0], [0], [1], [0, 0, 1, 1], [], []>} : vector<8x32xf32>, vector<32x128xf32>, vector<8x128xf32> -> vector<8x128xf32>
    %394 = arith.addf %392, %393 : vector<8x128xf32>
    %cst_106 = arith.constant 0.000000e+00 : f32
    %395 = vector.broadcast %cst_106 : f32 to vector<8x128xf32>
    %396 = arith.subf %395, %394 : vector<8x128xf32>
    %397 = math.exp %396 : vector<8x128xf32>
    %cst_107 = arith.constant 1.000000e+00 : f32
    %398 = vector.broadcast %cst_107 : f32 to vector<8x128xf32>
    %399 = arith.addf %398, %397 : vector<8x128xf32>
    %400 = tpu.reciprocal %399 {approx = true} : vector<8x128xf32> -> vector<8x128xf32>
    %401 = math.tanh %394 : vector<8x128xf32>
    %402 = vector.extract_strided_slice %400 {offsets = [0, 32], sizes = [8, 32], strides = [1, 1]} : vector<8x128xf32> to vector<8x32xf32>
    %403 = arith.mulf %402, %381 : vector<8x32xf32>
    %404 = vector.extract_strided_slice %400 {offsets = [0, 0], sizes = [8, 32], strides = [1, 1]} : vector<8x128xf32> to vector<8x32xf32>
    %405 = vector.extract_strided_slice %401 {offsets = [0, 64], sizes = [8, 32], strides = [1, 1]} : vector<8x128xf32> to vector<8x32xf32>
    %406 = arith.mulf %404, %405 : vector<8x32xf32>
    %407 = arith.addf %403, %406 : vector<8x32xf32>
    %408 = vector.extract_strided_slice %400 {offsets = [0, 96], sizes = [8, 32], strides = [1, 1]} : vector<8x128xf32> to vector<8x32xf32>
    %409 = math.tanh %407 : vector<8x32xf32>
    %410 = arith.mulf %408, %409 : vector<8x32xf32>
    %411 = vector.broadcast %c6_i32_102 : i32 to vector<8x1xi32>
    %412 = arith.cmpi eq, %224, %411 : vector<8x1xi32>
    %413 = vector.shape_cast %412 : vector<8x1xi1> to vector<8x1xi1>
    %414 = vector.broadcast %413 : vector<8x1xi1> to vector<8x32xi1>
    %415 = arith.select %414, %410, %389 : vector<8x32xi1>, vector<8x32xf32>
    %c7_i32_108 = arith.constant 7 : i32
    %416 = arith.index_cast %c7_i32_108 : i32 to index
    %c0_109 = arith.constant 0 : index
    %c0_110 = arith.constant 0 : index
    %417 = vector.load %arg14[%416, %c0_109, %c0_110] : memref<8x8x128xf32, #tpu.memory_space<vmem>>, vector<1x8x128xf32>
    %418 = vector.shape_cast %417 : vector<1x8x128xf32> to vector<8x128xf32>
    %cst_111 = arith.constant dense<0.000000e+00> : vector<8x128xf32>
    %419 = tpu.matmul %410, %232, %cst_111 {dimension_numbers = #tpu.dot_dimension_numbers<[1], [0], [0], [1], [0, 0, 1, 1], [], []>} : vector<8x32xf32>, vector<32x128xf32>, vector<8x128xf32> -> vector<8x128xf32>
    %420 = arith.addf %418, %419 : vector<8x128xf32>
    %cst_112 = arith.constant 0.000000e+00 : f32
    %421 = vector.broadcast %cst_112 : f32 to vector<8x128xf32>
    %422 = arith.subf %421, %420 : vector<8x128xf32>
    %423 = math.exp %422 : vector<8x128xf32>
    %cst_113 = arith.constant 1.000000e+00 : f32
    %424 = vector.broadcast %cst_113 : f32 to vector<8x128xf32>
    %425 = arith.addf %424, %423 : vector<8x128xf32>
    %426 = tpu.reciprocal %425 {approx = true} : vector<8x128xf32> -> vector<8x128xf32>
    %427 = math.tanh %420 : vector<8x128xf32>
    %428 = vector.extract_strided_slice %426 {offsets = [0, 32], sizes = [8, 32], strides = [1, 1]} : vector<8x128xf32> to vector<8x32xf32>
    %429 = arith.mulf %428, %407 : vector<8x32xf32>
    %430 = vector.extract_strided_slice %426 {offsets = [0, 0], sizes = [8, 32], strides = [1, 1]} : vector<8x128xf32> to vector<8x32xf32>
    %431 = vector.extract_strided_slice %427 {offsets = [0, 64], sizes = [8, 32], strides = [1, 1]} : vector<8x128xf32> to vector<8x32xf32>
    %432 = arith.mulf %430, %431 : vector<8x32xf32>
    %433 = arith.addf %429, %432 : vector<8x32xf32>
    %434 = vector.extract_strided_slice %426 {offsets = [0, 96], sizes = [8, 32], strides = [1, 1]} : vector<8x128xf32> to vector<8x32xf32>
    %435 = math.tanh %433 : vector<8x32xf32>
    %436 = arith.mulf %434, %435 : vector<8x32xf32>
    %437 = vector.broadcast %c7_i32_108 : i32 to vector<8x1xi32>
    %438 = arith.cmpi eq, %224, %437 : vector<8x1xi32>
    %439 = vector.shape_cast %438 : vector<8x1xi1> to vector<8x1xi1>
    %440 = vector.broadcast %439 : vector<8x1xi1> to vector<8x32xi1>
    %441 = arith.select %440, %436, %415 : vector<8x32xi1>, vector<8x32xf32>
    %c8_i32_114 = arith.constant 8 : i32
    %c0_115 = arith.constant 0 : index
    %c0_116 = arith.constant 0 : index
    %442 = vector.load %arg10[%c0_115, %c0_116] : memref<1x32xf32, #tpu.memory_space<vmem>>, vector<1x32xf32>
    %443 = vector.broadcast %442 : vector<1x32xf32> to vector<8x32xf32>
    %444 = arith.mulf %441, %443 : vector<8x32xf32>
    %cst_117 = arith.constant dense<0.000000e+00> : vector<8xf32>
    %445 = vector.multi_reduction <add>, %444, %cst_117 [1] : vector<8x32xf32> to vector<8xf32>
    %446 = vector.shape_cast %445 : vector<8xf32> to vector<8x1xf32>
    %c0_118 = arith.constant 0 : index
    %c0_119 = arith.constant 0 : index
    %447 = vector.load %arg11[%c0_118, %c0_119] : memref<1x1xf32, #tpu.memory_space<vmem>>, vector<1x1xf32>
    %448 = vector.broadcast %447 : vector<1x1xf32> to vector<8x1xf32>
    %449 = arith.addf %446, %448 : vector<8x1xf32>
    %c0_120 = arith.constant 0 : index
    %c0_121 = arith.constant 0 : index
    %450 = vector.load %arg12[%c0_120, %c0_121] : memref<8x1xf32, #tpu.memory_space<vmem>>, vector<8x1xf32>
    tpu.vector_store %arg12[%c0_120, %c0_121], %449 {strides = array<i32>} : memref<8x1xf32, #tpu.memory_space<vmem>>, vector<8x1xf32>,
    return
  }
  func.func @transform_0(%arg0: i32) -> (i32, i32) {
    %c0_i32 = arith.constant 0 : i32
    %c0_i32_0 = arith.constant 0 : i32
    return %arg0, %c0_i32 : i32, i32
  }
  func.func @transform_1(%arg0: i32) -> (i32, i32) {
    %c0_i32 = arith.constant 0 : i32
    %c0_i32_0 = arith.constant 0 : i32
    return %arg0, %c0_i32 : i32, i32
  }
  func.func @transform_2(%arg0: i32) -> (i32, i32) {
    %c0_i32 = arith.constant 0 : i32
    %c0_i32_0 = arith.constant 0 : i32
    return %arg0, %c0_i32 : i32, i32
  }
  func.func @transform_3(%arg0: i32) -> (i32, i32) {
    %c0_i32 = arith.constant 0 : i32
    %c0_i32_0 = arith.constant 0 : i32
    %c0_i32_1 = arith.constant 0 : i32
    return %c0_i32, %c0_i32_0 : i32, i32
  }
  func.func @transform_4(%arg0: i32) -> (i32, i32) {
    %c0_i32 = arith.constant 0 : i32
    %c0_i32_0 = arith.constant 0 : i32
    %c0_i32_1 = arith.constant 0 : i32
    return %c0_i32, %c0_i32_0 : i32, i32
  }
  func.func @transform_5(%arg0: i32) -> (i32, i32) {
    %c0_i32 = arith.constant 0 : i32
    %c0_i32_0 = arith.constant 0 : i32
    %c0_i32_1 = arith.constant 0 : i32
    return %c0_i32, %c0_i32_0 : i32, i32
  }
  func.func @transform_6(%arg0: i32) -> (i32, i32) {
    %c0_i32 = arith.constant 0 : i32
    %c0_i32_0 = arith.constant 0 : i32
    %c0_i32_1 = arith.constant 0 : i32
    return %c0_i32, %c0_i32_0 : i32, i32
  }
  func.func @transform_7(%arg0: i32) -> (i32, i32) {
    %c0_i32 = arith.constant 0 : i32
    %c0_i32_0 = arith.constant 0 : i32
    %c0_i32_1 = arith.constant 0 : i32
    return %c0_i32, %c0_i32_0 : i32, i32
  }
  func.func @transform_8(%arg0: i32) -> (i32, i32) {
    %c0_i32 = arith.constant 0 : i32
    %c0_i32_0 = arith.constant 0 : i32
    %c0_i32_1 = arith.constant 0 : i32
    return %c0_i32, %c0_i32_0 : i32, i32
  }
  func.func @transform_9(%arg0: i32) -> (i32, i32) {
    %c0_i32 = arith.constant 0 : i32
    %c0_i32_0 = arith.constant 0 : i32
    %c0_i32_1 = arith.constant 0 : i32
    return %c0_i32, %c0_i32_0 : i32, i32
  }
  func.func @transform_10(%arg0: i32) -> (i32, i32) {
    %c0_i32 = arith.constant 0 : i32
    %c0_i32_0 = arith.constant 0 : i32
    %c0_i32_1 = arith.constant 0 : i32
    return %c0_i32, %c0_i32_0 : i32, i32
  }
  func.func @transform_11(%arg0: i32) -> (i32, i32) {
    %c0_i32 = arith.constant 0 : i32
    %c0_i32_0 = arith.constant 0 : i32
    return %arg0, %c0_i32 : i32, i32
  }
}

</mosaic_0001>

<llo_original>
// kernel: fasthemal_forward.1
$region0: #{fasthemal_forward.1}
  #allocation0 [shape = 'u32[]', space=smem, size = 0x4, offset = 0x4, fixed_abs, tag = 'smem constant byte address 0x4 - core index']
  #allocation1 [shape = 'u32[144,128]{1,0:T(1,128)}', space=vmem, size = 0x12000, scoped, tag = 'internal scratch']
  #allocation2 [shape = 'f32[8,64,128]{2,1,0:T(8,128)}', space=vmem, size = 0x40000, scoped, tag = 'scratch operand']
  #allocation3 [shape = 'f32[8,8,128]{2,1,0:T(8,128)}', space=vmem, size = 0x8000, scoped, tag = 'scratch operand']
  #allocation4 [shape = 'f32[1,1]{1,0:T(1,128)S(1)}', space=vmem, size = 0x200, scoped, tag = 'scoped memory for fasthemal_forward.1']
  %s0 = inlined_call_operand.vmem [shape: s32[512,1], index: 0, kind: input, shape index: {}]
  %s1 = inlined_call_operand.vmem [shape: s32[64,1], index: 1, kind: input, shape index: {}]
  %s2 = inlined_call_operand.vmem [shape: s32[8,1], index: 2, kind: input, shape index: {}]
  %s3 = inlined_call_operand.vmem [shape: f32[64,128], index: 3, kind: input, shape index: {}]
  %s4 = inlined_call_operand.vmem [shape: f32[32,128], index: 4, kind: input, shape index: {}]
  %s5 = inlined_call_operand.vmem [shape: f32[1,128], index: 5, kind: input, shape index: {}]
  %s6 = inlined_call_operand.vmem [shape: f32[32,128], index: 6, kind: input, shape index: {}]
  %s7 = inlined_call_operand.vmem [shape: f32[32,128], index: 7, kind: input, shape index: {}]
  %s8 = inlined_call_operand.vmem [shape: f32[1,128], index: 8, kind: input, shape index: {}]
  %s9 = inlined_call_operand.vmem [shape: f32[1,32], index: 9, kind: input, shape index: {}]
  %s10 = inlined_call_operand.<no memory space> [shape: f32[1,1], index: 10, kind: input, shape index: {}]
  %s11 = inlined_call_operand.vmem [shape: f32[8,1], index: 11, kind: output, shape index: {}]
  %s12 = sld [smem:[#allocation0]]
  $region54: #{fasthemal_forward.1} parent=0
    _
  %s14 = ssub.s32 1, %s12
  %s15 = scalar_select 0, %s14, %s12
  %v16 = vstv %s10
  %17 = vst [vmem:[#allocation4] sm:$0x1] %v16
  // Predicated region
  $region2: #{fasthemal_forward.1} parent=0 // pred_check
    _
  $region3: #{fasthemal_forward.1} parent=0 // pred_check_branch
    %19 = sbr.rel (0) target = $region5
  $region4: #{fasthemal_forward.1} parent=0 // pred_region
    _
  $region5: #{fasthemal_forward.1} parent=0 // pred_fallthru
    _
  // Predicated region
  $region6: #{fasthemal_forward.1} parent=0 // pred_check
    _
  $region7: #{fasthemal_forward.1} parent=0 // pred_check_branch
    %21 = sbr.rel (0) target = $region9
  $region8: #{fasthemal_forward.1} parent=0 // pred_region
    _
  $region9: #{fasthemal_forward.1} parent=0 // pred_fallthru
    _
  // Predicated region
  $region10: #{fasthemal_forward.1} parent=0 // pred_check
    _
  $region11: #{fasthemal_forward.1} parent=0 // pred_check_branch
    %23 = sbr.rel (0) target = $region13
  $region12: #{fasthemal_forward.1} parent=0 // pred_region
    _
  $region13: #{fasthemal_forward.1} parent=0 // pred_fallthru
    _
  // Predicated region
  $region14: #{fasthemal_forward.1} parent=0 // pred_check
    _
  $region15: #{fasthemal_forward.1} parent=0 // pred_check_branch
    %25 = sbr.rel (0) target = $region17
  $region16: #{fasthemal_forward.1} parent=0 // pred_region
    _
  $region17: #{fasthemal_forward.1} parent=0 // pred_fallthru
    _
  // Predicated region
  $region18: #{fasthemal_forward.1} parent=0 // pred_check
    _
  $region19: #{fasthemal_forward.1} parent=0 // pred_check_branch
    %27 = sbr.rel (0) target = $region21
  $region20: #{fasthemal_forward.1} parent=0 // pred_region
    _
  $region21: #{fasthemal_forward.1} parent=0 // pred_fallthru
    _
  // Predicated region
  $region22: #{fasthemal_forward.1} parent=0 // pred_check
    _
  $region23: #{fasthemal_forward.1} parent=0 // pred_check_branch
    %29 = sbr.rel (0) target = $region25
  $region24: #{fasthemal_forward.1} parent=0 // pred_region
    _
  $region25: #{fasthemal_forward.1} parent=0 // pred_fallthru
    _
  // Predicated region
  $region26: #{fasthemal_forward.1} parent=0 // pred_check
    _
  $region27: #{fasthemal_forward.1} parent=0 // pred_check_branch
    %31 = sbr.rel (0) target = $region29
  $region28: #{fasthemal_forward.1} parent=0 // pred_region
    _
  $region29: #{fasthemal_forward.1} parent=0 // pred_fallthru
    _
  // Predicated region
  $region30: #{fasthemal_forward.1} parent=0 // pred_check
    _
  $region31: #{fasthemal_forward.1} parent=0 // pred_check_branch
    %33 = sbr.rel (0) target = $region33
  $region32: #{fasthemal_forward.1} parent=0 // pred_region
    _
  $region33: #{fasthemal_forward.1} parent=0 // pred_fallthru
    _
  // Predicated region
  $region34: #{fasthemal_forward.1} parent=0 // pred_check
    _
  $region35: #{fasthemal_forward.1} parent=0 // pred_check_branch
    %35 = sbr.rel (0) target = $region37
  $region36: #{fasthemal_forward.1} parent=0 // pred_region
    _
  $region37: #{fasthemal_forward.1} parent=0 // pred_fallthru
    _
  // Predicated region
  $region38: #{fasthemal_forward.1} parent=0 // pred_check
    _
  $region39: #{fasthemal_forward.1} parent=0 // pred_check_branch
    %37 = sbr.rel (0) target = $region41
  $region40: #{fasthemal_forward.1} parent=0 // pred_region
    _
  $region41: #{fasthemal_forward.1} parent=0 // pred_fallthru
    _
  // Predicated region
  $region42: #{fasthemal_forward.1} parent=0 // pred_check
    _
  $region43: #{fasthemal_forward.1} parent=0 // pred_check_branch
    %39 = sbr.rel (0) target = $region45
  $region44: #{fasthemal_forward.1} parent=0 // pred_region
    _
  $region45: #{fasthemal_forward.1} parent=0 // pred_fallthru
    _
  %v40 = vld [vmem:[%s0] sm:$0xff]
  %v41 = vld [vmem:[%s0 + $0x8] sm:$0xff]
  %v42 = vld [vmem:[%s0 + $0x10] sm:$0xff]
  %v43 = vld [vmem:[%s0 + $0x18] sm:$0xff]
  %v44 = vld [vmem:[%s0 + $0x20] sm:$0xff]
  %v45 = vld [vmem:[%s0 + $0x28] sm:$0xff]
  %v46 = vld [vmem:[%s0 + $0x30] sm:$0xff]
  %v47 = vld [vmem:[%s0 + $0x38] sm:$0xff]
  %v48 = vld [vmem:[%s0 + $0x40] sm:$0xff]
  %v49 = vld [vmem:[%s0 + $0x48] sm:$0xff]
  %v50 = vld [vmem:[%s0 + $0x50] sm:$0xff]
  %v51 = vld [vmem:[%s0 + $0x58] sm:$0xff]
  %v52 = vld [vmem:[%s0 + $0x60] sm:$0xff]
  %v53 = vld [vmem:[%s0 + $0x68] sm:$0xff]
  %v54 = vld [vmem:[%s0 + $0x70] sm:$0xff]
  %v55 = vld [vmem:[%s0 + $0x78] sm:$0xff]
  %v56 = vld [vmem:[%s0 + $0x80] sm:$0xff]
  %v57 = vld [vmem:[%s0 + $0x88] sm:$0xff]
  %v58 = vld [vmem:[%s0 + $0x90] sm:$0xff]
  %v59 = vld [vmem:[%s0 + $0x98] sm:$0xff]
  %v60 = vld [vmem:[%s0 + $0xa0] sm:$0xff]
  %v61 = vld [vmem:[%s0 + $0xa8] sm:$0xff]
  %v62 = vld [vmem:[%s0 + $0xb0] sm:$0xff]
  %v63 = vld [vmem:[%s0 + $0xb8] sm:$0xff]
  %v64 = vld [vmem:[%s0 + $0xc0] sm:$0xff]
  %v65 = vld [vmem:[%s0 + $0xc8] sm:$0xff]
  %v66 = vld [vmem:[%s0 + $0xd0] sm:$0xff]
  %v67 = vld [vmem:[%s0 + $0xd8] sm:$0xff]
  %v68 = vld [vmem:[%s0 + $0xe0] sm:$0xff]
  %v69 = vld [vmem:[%s0 + $0xe8] sm:$0xff]
  %v70 = vld [vmem:[%s0 + $0xf0] sm:$0xff]
  %v71 = vld [vmem:[%s0 + $0xf8] sm:$0xff]
  %v72 = vld [vmem:[%s0 + $0x100] sm:$0xff]
  %v73 = vld [vmem:[%s0 + $0x108] sm:$0xff]
  %v74 = vld [vmem:[%s0 + $0x110] sm:$0xff]
  %v75 = vld [vmem:[%s0 + $0x118] sm:$0xff]
  %v76 = vld [vmem:[%s0 + $0x120] sm:$0xff]
  %v77 = vld [vmem:[%s0 + $0x128] sm:$0xff]
  %v78 = vld [vmem:[%s0 + $0x130] sm:$0xff]
  %v79 = vld [vmem:[%s0 + $0x138] sm:$0xff]
  %v80 = vld [vmem:[%s0 + $0x140] sm:$0xff]
  %v81 = vld [vmem:[%s0 + $0x148] sm:$0xff]
  %v82 = vld [vmem:[%s0 + $0x150] sm:$0xff]
  %v83 = vld [vmem:[%s0 + $0x158] sm:$0xff]
  %v84 = vld [vmem:[%s0 + $0x160] sm:$0xff]
  %v85 = vld [vmem:[%s0 + $0x168] sm:$0xff]
  %v86 = vld [vmem:[%s0 + $0x170] sm:$0xff]
  %v87 = vld [vmem:[%s0 + $0x178] sm:$0xff]
  %v88 = vld [vmem:[%s0 + $0x180] sm:$0xff]
  %v89 = vld [vmem:[%s0 + $0x188] sm:$0xff]
  %v90 = vld [vmem:[%s0 + $0x190] sm:$0xff]
  %v91 = vld [vmem:[%s0 + $0x198] sm:$0xff]
  %v92 = vld [vmem:[%s0 + $0x1a0] sm:$0xff]
  %v93 = vld [vmem:[%s0 + $0x1a8] sm:$0xff]
  %v94 = vld [vmem:[%s0 + $0x1b0] sm:$0xff]
  %v95 = vld [vmem:[%s0 + $0x1b8] sm:$0xff]
  %v96 = vld [vmem:[%s0 + $0x1c0] sm:$0xff]
  %v97 = vld [vmem:[%s0 + $0x1c8] sm:$0xff]
  %v98 = vld [vmem:[%s0 + $0x1d0] sm:$0xff]
  %v99 = vld [vmem:[%s0 + $0x1d8] sm:$0xff]
  %v100 = vld [vmem:[%s0 + $0x1e0] sm:$0xff]
  %v101 = vld [vmem:[%s0 + $0x1e8] sm:$0xff]
  %v102 = vld [vmem:[%s0 + $0x1f0] sm:$0xff]
  %v103 = vld [vmem:[%s0 + $0x1f8] sm:$0xff]
  %v104 = vlaneseq
  %v105 = vand.u32 %v104, 127
  %106 = vset.pattern.permute.xlu0 0
  %107 = vperm.xlu0 %106, %v40
  %v108 = vpop.permute.xlu0 %107
  %109 = vset.pattern.permute.xlu0 0
  %110 = vperm.xlu0 %109, %v41
  %v111 = vpop.permute.xlu0 %110
  %112 = vset.pattern.permute.xlu0 0
  %113 = vperm.xlu0 %112, %v42
  %v114 = vpop.permute.xlu0 %113
  %115 = vset.pattern.permute.xlu0 0
  %116 = vperm.xlu0 %115, %v43
  %v117 = vpop.permute.xlu0 %116
  %118 = vset.pattern.permute.xlu0 0
  %119 = vperm.xlu0 %118, %v44
  %v120 = vpop.permute.xlu0 %119
  %121 = vset.pattern.permute.xlu0 0
  %122 = vperm.xlu0 %121, %v45
  %v123 = vpop.permute.xlu0 %122
  %124 = vset.pattern.permute.xlu0 0
  %125 = vperm.xlu0 %124, %v46
  %v126 = vpop.permute.xlu0 %125
  %127 = vset.pattern.permute.xlu0 0
  %128 = vperm.xlu0 %127, %v47
  %v129 = vpop.permute.xlu0 %128
  %130 = vset.pattern.permute.xlu0 0
  %131 = vperm.xlu0 %130, %v48
  %v132 = vpop.permute.xlu0 %131
  %133 = vset.pattern.permute.xlu0 0
  %134 = vperm.xlu0 %133, %v49
  %v135 = vpop.permute.xlu0 %134
  %136 = vset.pattern.permute.xlu0 0
  %137 = vperm.xlu0 %136, %v50
  %v138 = vpop.permute.xlu0 %137
  %139 = vset.pattern.permute.xlu0 0
  %140 = vperm.xlu0 %139, %v51
  %v141 = vpop.permute.xlu0 %140
  %142 = vset.pattern.permute.xlu0 0
  %143 = vperm.xlu0 %142, %v52
  %v144 = vpop.permute.xlu0 %143
  %145 = vset.pattern.permute.xlu0 0
  %146 = vperm.xlu0 %145, %v53
  %v147 = vpop.permute.xlu0 %146
  %148 = vset.pattern.permute.xlu0 0
  %149 = vperm.xlu0 %148, %v54
  %v150 = vpop.permute.xlu0 %149
  %151 = vset.pattern.permute.xlu0 0
  %152 = vperm.xlu0 %151, %v55
  %v153 = vpop.permute.xlu0 %152
  %154 = vset.pattern.permute.xlu0 0
  %155 = vperm.xlu0 %154, %v56
  %v156 = vpop.permute.xlu0 %155
  %157 = vset.pattern.permute.xlu0 0
  %158 = vperm.xlu0 %157, %v57
  %v159 = vpop.permute.xlu0 %158
  %160 = vset.pattern.permute.xlu0 0
  %161 = vperm.xlu0 %160, %v58
  %v162 = vpop.permute.xlu0 %161
  %163 = vset.pattern.permute.xlu0 0
  %164 = vperm.xlu0 %163, %v59
  %v165 = vpop.permute.xlu0 %164
  %166 = vset.pattern.permute.xlu0 0
  %167 = vperm.xlu0 %166, %v60
  %v168 = vpop.permute.xlu0 %167
  %169 = vset.pattern.permute.xlu0 0
  %170 = vperm.xlu0 %169, %v61
  %v171 = vpop.permute.xlu0 %170
  %172 = vset.pattern.permute.xlu0 0
  %173 = vperm.xlu0 %172, %v62
  %v174 = vpop.permute.xlu0 %173
  %175 = vset.pattern.permute.xlu0 0
  %176 = vperm.xlu0 %175, %v63
  %v177 = vpop.permute.xlu0 %176
  %178 = vset.pattern.permute.xlu0 0
  %179 = vperm.xlu0 %178, %v64
  %v180 = vpop.permute.xlu0 %179
  %181 = vset.pattern.permute.xlu0 0
  %182 = vperm.xlu0 %181, %v65
  %v183 = vpop.permute.xlu0 %182
  %184 = vset.pattern.permute.xlu0 0
  %185 = vperm.xlu0 %184, %v66
  %v186 = vpop.permute.xlu0 %185
  %187 = vset.pattern.permute.xlu0 0
  %188 = vperm.xlu0 %187, %v67
  %v189 = vpop.permute.xlu0 %188
  %190 = vset.pattern.permute.xlu0 0
  %191 = vperm.xlu0 %190, %v68
  %v192 = vpop.permute.xlu0 %191
  %193 = vset.pattern.permute.xlu0 0
  %194 = vperm.xlu0 %193, %v69
  %v195 = vpop.permute.xlu0 %194
  %196 = vset.pattern.permute.xlu0 0
  %197 = vperm.xlu0 %196, %v70
  %v198 = vpop.permute.xlu0 %197
  %199 = vset.pattern.permute.xlu0 0
  %200 = vperm.xlu0 %199, %v71
  %v201 = vpop.permute.xlu0 %200
  %202 = vset.pattern.permute.xlu0 0
  %203 = vperm.xlu0 %202, %v72
  %v204 = vpop.permute.xlu0 %203
  %205 = vset.pattern.permute.xlu0 0
  %206 = vperm.xlu0 %205, %v73
  %v207 = vpop.permute.xlu0 %206
  %208 = vset.pattern.permute.xlu0 0
  %209 = vperm.xlu0 %208, %v74
  %v210 = vpop.permute.xlu0 %209
  %211 = vset.pattern.permute.xlu0 0
  %212 = vperm.xlu0 %211, %v75
  %v213 = vpop.permute.xlu0 %212
  %214 = vset.pattern.permute.xlu0 0
  %215 = vperm.xlu0 %214, %v76
  %v216 = vpop.permute.xlu0 %215
  %217 = vset.pattern.permute.xlu0 0
  %218 = vperm.xlu0 %217, %v77
  %v219 = vpop.permute.xlu0 %218
  %220 = vset.pattern.permute.xlu0 0
  %221 = vperm.xlu0 %220, %v78
  %v222 = vpop.permute.xlu0 %221
  %223 = vset.pattern.permute.xlu0 0
  %224 = vperm.xlu0 %223, %v79
  %v225 = vpop.permute.xlu0 %224
  %226 = vset.pattern.permute.xlu0 0
  %227 = vperm.xlu0 %226, %v80
  %v228 = vpop.permute.xlu0 %227
  %229 = vset.pattern.permute.xlu0 0
  %230 = vperm.xlu0 %229, %v81
  %v231 = vpop.permute.xlu0 %230
  %232 = vset.pattern.permute.xlu0 0
  %233 = vperm.xlu0 %232, %v82
  %v234 = vpop.permute.xlu0 %233
  %235 = vset.pattern.permute.xlu0 0
  %236 = vperm.xlu0 %235, %v83
  %v237 = vpop.permute.xlu0 %236
  %238 = vset.pattern.permute.xlu0 0
  %239 = vperm.xlu0 %238, %v84
  %v240 = vpop.permute.xlu0 %239
  %241 = vset.pattern.permute.xlu0 0
  %242 = vperm.xlu0 %241, %v85
  %v243 = vpop.permute.xlu0 %242
  %244 = vset.pattern.permute.xlu0 0
  %245 = vperm.xlu0 %244, %v86
  %v246 = vpop.permute.xlu0 %245
  %247 = vset.pattern.permute.xlu0 0
  %248 = vperm.xlu0 %247, %v87
  %v249 = vpop.permute.xlu0 %248
  %250 = vset.pattern.permute.xlu0 0
  %251 = vperm.xlu0 %250, %v88
  %v252 = vpop.permute.xlu0 %251
  %253 = vset.pattern.permute.xlu0 0
  %254 = vperm.xlu0 %253, %v89
  %v255 = vpop.permute.xlu0 %254
  %256 = vset.pattern.permute.xlu0 0
  %257 = vperm.xlu0 %256, %v90
  %v258 = vpop.permute.xlu0 %257
  %259 = vset.pattern.permute.xlu0 0
  %260 = vperm.xlu0 %259, %v91
  %v261 = vpop.permute.xlu0 %260
  %262 = vset.pattern.permute.xlu0 0
  %263 = vperm.xlu0 %262, %v92
  %v264 = vpop.permute.xlu0 %263
  %265 = vset.pattern.permute.xlu0 0
  %266 = vperm.xlu0 %265, %v93
  %v267 = vpop.permute.xlu0 %266
  %268 = vset.pattern.permute.xlu0 0
  %269 = vperm.xlu0 %268, %v94
  %v270 = vpop.permute.xlu0 %269
  %271 = vset.pattern.permute.xlu0 0
  %272 = vperm.xlu0 %271, %v95
  %v273 = vpop.permute.xlu0 %272
  %274 = vset.pattern.permute.xlu0 0
  %275 = vperm.xlu0 %274, %v96
  %v276 = vpop.permute.xlu0 %275
  %277 = vset.pattern.permute.xlu0 0
  %278 = vperm.xlu0 %277, %v97
  %v279 = vpop.permute.xlu0 %278
  %280 = vset.pattern.permute.xlu0 0
  %281 = vperm.xlu0 %280, %v98
  %v282 = vpop.permute.xlu0 %281
  %283 = vset.pattern.permute.xlu0 0
  %284 = vperm.xlu0 %283, %v99
  %v285 = vpop.permute.xlu0 %284
  %286 = vset.pattern.permute.xlu0 0
  %287 = vperm.xlu0 %286, %v100
  %v288 = vpop.permute.xlu0 %287
  %289 = vset.pattern.permute.xlu0 0
  %290 = vperm.xlu0 %289, %v101
  %v291 = vpop.permute.xlu0 %290
  %292 = vset.pattern.permute.xlu0 0
  %293 = vperm.xlu0 %292, %v102
  %v294 = vpop.permute.xlu0 %293
  %295 = vset.pattern.permute.xlu0 0
  %296 = vperm.xlu0 %295, %v103
  %v297 = vpop.permute.xlu0 %296
  %vm298 = vcmp.eq.s32.totalorder %v108, %v105
  %vm299 = vcmp.eq.s32.totalorder %v111, %v105
  %vm300 = vcmp.eq.s32.totalorder %v114, %v105
  %vm301 = vcmp.eq.s32.totalorder %v117, %v105
  %vm302 = vcmp.eq.s32.totalorder %v120, %v105
  %vm303 = vcmp.eq.s32.totalorder %v123, %v105
  %vm304 = vcmp.eq.s32.totalorder %v126, %v105
  %vm305 = vcmp.eq.s32.totalorder %v129, %v105
  %vm306 = vcmp.eq.s32.totalorder %v132, %v105
  %vm307 = vcmp.eq.s32.totalorder %v135, %v105
  %vm308 = vcmp.eq.s32.totalorder %v138, %v105
  %vm309 = vcmp.eq.s32.totalorder %v141, %v105
  %vm310 = vcmp.eq.s32.totalorder %v144, %v105
  %vm311 = vcmp.eq.s32.totalorder %v147, %v105
  %vm312 = vcmp.eq.s32.totalorder %v150, %v105
  %vm313 = vcmp.eq.s32.totalorder %v153, %v105
  %vm314 = vcmp.eq.s32.totalorder %v156, %v105
  %vm315 = vcmp.eq.s32.totalorder %v159, %v105
  %vm316 = vcmp.eq.s32.totalorder %v162, %v105
  %vm317 = vcmp.eq.s32.totalorder %v165, %v105
  %vm318 = vcmp.eq.s32.totalorder %v168, %v105
  %vm319 = vcmp.eq.s32.totalorder %v171, %v105
  %vm320 = vcmp.eq.s32.totalorder %v174, %v105
  %vm321 = vcmp.eq.s32.totalorder %v177, %v105
  %vm322 = vcmp.eq.s32.totalorder %v180, %v105
  %vm323 = vcmp.eq.s32.totalorder %v183, %v105
  %vm324 = vcmp.eq.s32.totalorder %v186, %v105
  %vm325 = vcmp.eq.s32.totalorder %v189, %v105
  %vm326 = vcmp.eq.s32.totalorder %v192, %v105
  %vm327 = vcmp.eq.s32.totalorder %v195, %v105
  %vm328 = vcmp.eq.s32.totalorder %v198, %v105
  %vm329 = vcmp.eq.s32.totalorder %v201, %v105
  %vm330 = vcmp.eq.s32.totalorder %v204, %v105
  %vm331 = vcmp.eq.s32.totalorder %v207, %v105
  %vm332 = vcmp.eq.s32.totalorder %v210, %v105
  %vm333 = vcmp.eq.s32.totalorder %v213, %v105
  %vm334 = vcmp.eq.s32.totalorder %v216, %v105
  %vm335 = vcmp.eq.s32.totalorder %v219, %v105
  %vm336 = vcmp.eq.s32.totalorder %v222, %v105
  %vm337 = vcmp.eq.s32.totalorder %v225, %v105
  %vm338 = vcmp.eq.s32.totalorder %v228, %v105
  %vm339 = vcmp.eq.s32.totalorder %v231, %v105
  %vm340 = vcmp.eq.s32.totalorder %v234, %v105
  %vm341 = vcmp.eq.s32.totalorder %v237, %v105
  %vm342 = vcmp.eq.s32.totalorder %v240, %v105
  %vm343 = vcmp.eq.s32.totalorder %v243, %v105
  %vm344 = vcmp.eq.s32.totalorder %v246, %v105
  %vm345 = vcmp.eq.s32.totalorder %v249, %v105
  %vm346 = vcmp.eq.s32.totalorder %v252, %v105
  %vm347 = vcmp.eq.s32.totalorder %v255, %v105
  %vm348 = vcmp.eq.s32.totalorder %v258, %v105
  %vm349 = vcmp.eq.s32.totalorder %v261, %v105
  %vm350 = vcmp.eq.s32.totalorder %v264, %v105
  %vm351 = vcmp.eq.s32.totalorder %v267, %v105
  %vm352 = vcmp.eq.s32.totalorder %v270, %v105
  %vm353 = vcmp.eq.s32.totalorder %v273, %v105
  %vm354 = vcmp.eq.s32.totalorder %v276, %v105
  %vm355 = vcmp.eq.s32.totalorder %v279, %v105
  %vm356 = vcmp.eq.s32.totalorder %v282, %v105
  %vm357 = vcmp.eq.s32.totalorder %v285, %v105
  %vm358 = vcmp.eq.s32.totalorder %v288, %v105
  %vm359 = vcmp.eq.s32.totalorder %v291, %v105
  %vm360 = vcmp.eq.s32.totalorder %v294, %v105
  %vm361 = vcmp.eq.s32.totalorder %v297, %v105
  %v362 = vsel %vm298, 1, 0
  %v363 = vsel %vm299, 1, 0
  %v364 = vsel %vm300, 1, 0
  %v365 = vsel %vm301, 1, 0
  %v366 = vsel %vm302, 1, 0
  %v367 = vsel %vm303, 1, 0
  %v368 = vsel %vm304, 1, 0
  %v369 = vsel %vm305, 1, 0
  %v370 = vsel %vm306, 1, 0
  %v371 = vsel %vm307, 1, 0
  %v372 = vsel %vm308, 1, 0
  %v373 = vsel %vm309, 1, 0
  %v374 = vsel %vm310, 1, 0
  %v375 = vsel %vm311, 1, 0
  %v376 = vsel %vm312, 1, 0
  %v377 = vsel %vm313, 1, 0
  %v378 = vsel %vm314, 1, 0
  %v379 = vsel %vm315, 1, 0
  %v380 = vsel %vm316, 1, 0
  %v381 = vsel %vm317, 1, 0
  %v382 = vsel %vm318, 1, 0
  %v383 = vsel %vm319, 1, 0
  %v384 = vsel %vm320, 1, 0
  %v385 = vsel %vm321, 1, 0
  %v386 = vsel %vm322, 1, 0
  %v387 = vsel %vm323, 1, 0
  %v388 = vsel %vm324, 1, 0
  %v389 = vsel %vm325, 1, 0
  %v390 = vsel %vm326, 1, 0
  %v391 = vsel %vm327, 1, 0
  %v392 = vsel %vm328, 1, 0
  %v393 = vsel %vm329, 1, 0
  %v394 = vsel %vm330, 1, 0
  %v395 = vsel %vm331, 1, 0
  %v396 = vsel %vm332, 1, 0
  %v397 = vsel %vm333, 1, 0
  %v398 = vsel %vm334, 1, 0
  %v399 = vsel %vm335, 1, 0
  %v400 = vsel %vm336, 1, 0
  %v401 = vsel %vm337, 1, 0
  %v402 = vsel %vm338, 1, 0
  %v403 = vsel %vm339, 1, 0
  %v404 = vsel %vm340, 1, 0
  %v405 = vsel %vm341, 1, 0
  %v406 = vsel %vm342, 1, 0
  %v407 = vsel %vm343, 1, 0
  %v408 = vsel %vm344, 1, 0
  %v409 = vsel %vm345, 1, 0
  %v410 = vsel %vm346, 1, 0
  %v411 = vsel %vm347, 1, 0
  %v412 = vsel %vm348, 1, 0
  %v413 = vsel %vm349, 1, 0
  %v414 = vsel %vm350, 1, 0
  %v415 = vsel %vm351, 1, 0
  %v416 = vsel %vm352, 1, 0
  %v417 = vsel %vm353, 1, 0
  %v418 = vsel %vm354, 1, 0
  %v419 = vsel %vm355, 1, 0
  %v420 = vsel %vm356, 1, 0
  %v421 = vsel %vm357, 1, 0
  %v422 = vsel %vm358, 1, 0
  %v423 = vsel %vm359, 1, 0
  %v424 = vsel %vm360, 1, 0
  %v425 = vsel %vm361, 1, 0
  %v426 = vcvt.s32.f32 %v362
  %v427 = vcvt.s32.f32 %v363
  %v428 = vcvt.s32.f32 %v364
  %v429 = vcvt.s32.f32 %v365
  %v430 = vcvt.s32.f32 %v366
  %v431 = vcvt.s32.f32 %v367
  %v432 = vcvt.s32.f32 %v368
  %v433 = vcvt.s32.f32 %v369
  %v434 = vcvt.s32.f32 %v370
  %v435 = vcvt.s32.f32 %v371
  %v436 = vcvt.s32.f32 %v372
  %v437 = vcvt.s32.f32 %v373
  %v438 = vcvt.s32.f32 %v374
  %v439 = vcvt.s32.f32 %v375
  %v440 = vcvt.s32.f32 %v376
  %v441 = vcvt.s32.f32 %v377
  %v442 = vcvt.s32.f32 %v378
  %v443 = vcvt.s32.f32 %v379
  %v444 = vcvt.s32.f32 %v380
  %v445 = vcvt.s32.f32 %v381
  %v446 = vcvt.s32.f32 %v382
  %v447 = vcvt.s32.f32 %v383
  %v448 = vcvt.s32.f32 %v384
  %v449 = vcvt.s32.f32 %v385
  %v450 = vcvt.s32.f32 %v386
  %v451 = vcvt.s32.f32 %v387
  %v452 = vcvt.s32.f32 %v388
  %v453 = vcvt.s32.f32 %v389
  %v454 = vcvt.s32.f32 %v390
  %v455 = vcvt.s32.f32 %v391
  %v456 = vcvt.s32.f32 %v392
  %v457 = vcvt.s32.f32 %v393
  %v458 = vcvt.s32.f32 %v394
  %v459 = vcvt.s32.f32 %v395
  %v460 = vcvt.s32.f32 %v396
  %v461 = vcvt.s32.f32 %v397
  %v462 = vcvt.s32.f32 %v398
  %v463 = vcvt.s32.f32 %v399
  %v464 = vcvt.s32.f32 %v400
  %v465 = vcvt.s32.f32 %v401
  %v466 = vcvt.s32.f32 %v402
  %v467 = vcvt.s32.f32 %v403
  %v468 = vcvt.s32.f32 %v404
  %v469 = vcvt.s32.f32 %v405
  %v470 = vcvt.s32.f32 %v406
  %v471 = vcvt.s32.f32 %v407
  %v472 = vcvt.s32.f32 %v408
  %v473 = vcvt.s32.f32 %v409
  %v474 = vcvt.s32.f32 %v410
  %v475 = vcvt.s32.f32 %v411
  %v476 = vcvt.s32.f32 %v412
  %v477 = vcvt.s32.f32 %v413
  %v478 = vcvt.s32.f32 %v414
  %v479 = vcvt.s32.f32 %v415
  %v480 = vcvt.s32.f32 %v416
  %v481 = vcvt.s32.f32 %v417
  %v482 = vcvt.s32.f32 %v418
  %v483 = vcvt.s32.f32 %v419
  %v484 = vcvt.s32.f32 %v420
  %v485 = vcvt.s32.f32 %v421
  %v486 = vcvt.s32.f32 %v422
  %v487 = vcvt.s32.f32 %v423
  %v488 = vcvt.s32.f32 %v424
  %v489 = vcvt.s32.f32 %v425
  %v490 = vld [vmem:[%s3] sm:$0xff]
  %v491 = vld [vmem:[%s3 + $0x8] sm:$0xff]
  %v492 = vld [vmem:[%s3 + $0x10] sm:$0xff]
  %v493 = vld [vmem:[%s3 + $0x18] sm:$0xff]
  %v494 = vld [vmem:[%s3 + $0x20] sm:$0xff]
  %v495 = vld [vmem:[%s3 + $0x28] sm:$0xff]
  %v496 = vld [vmem:[%s3 + $0x30] sm:$0xff]
  %v497 = vld [vmem:[%s3 + $0x38] sm:$0xff]
  %v498 = vld [vmem:[%s5] sm:$0x1]
  %v500 = vlaneseq
  %v501 = vshrl.u32 %v500, 7
  %v502 = vsub.s32 0, %v501
  %v503 = vrot.slane %v498, %v502
  %vm505 = vcmask 523264
  %v507 = vsel %vm505, %v426, 0
  %v510 = vsel %vm505, %v427, 0
  %v513 = vsel %vm505, %v428, 0
  %v516 = vsel %vm505, %v429, 0
  %v519 = vsel %vm505, %v430, 0
  %v522 = vsel %vm505, %v431, 0
  %v525 = vsel %vm505, %v432, 0
  %v528 = vsel %vm505, %v433, 0
  %v531 = vsel %vm505, %v434, 0
  %v534 = vsel %vm505, %v435, 0
  %v537 = vsel %vm505, %v436, 0
  %v540 = vsel %vm505, %v437, 0
  %v543 = vsel %vm505, %v438, 0
  %v546 = vsel %vm505, %v439, 0
  %v549 = vsel %vm505, %v440, 0
  %v552 = vsel %vm505, %v441, 0
  %v555 = vsel %vm505, %v442, 0
  %v558 = vsel %vm505, %v443, 0
  %v561 = vsel %vm505, %v444, 0
  %v564 = vsel %vm505, %v445, 0
  %v567 = vsel %vm505, %v446, 0
  %v570 = vsel %vm505, %v447, 0
  %v573 = vsel %vm505, %v448, 0
  %v576 = vsel %vm505, %v449, 0
  %v579 = vsel %vm505, %v450, 0
  %v582 = vsel %vm505, %v451, 0
  %v585 = vsel %vm505, %v452, 0
  %v588 = vsel %vm505, %v453, 0
  %v591 = vsel %vm505, %v454, 0
  %v594 = vsel %vm505, %v455, 0
  %v597 = vsel %vm505, %v456, 0
  %v600 = vsel %vm505, %v457, 0
  %v603 = vsel %vm505, %v458, 0
  %v606 = vsel %vm505, %v459, 0
  %v609 = vsel %vm505, %v460, 0
  %v612 = vsel %vm505, %v461, 0
  %v615 = vsel %vm505, %v462, 0
  %v618 = vsel %vm505, %v463, 0
  %v621 = vsel %vm505, %v464, 0
  %v624 = vsel %vm505, %v465, 0
  %v627 = vsel %vm505, %v466, 0
  %v630 = vsel %vm505, %v467, 0
  %v633 = vsel %vm505, %v468, 0
  %v636 = vsel %vm505, %v469, 0
  %v639 = vsel %vm505, %v470, 0
  %v642 = vsel %vm505, %v471, 0
  %v645 = vsel %vm505, %v472, 0
  %v648 = vsel %vm505, %v473, 0
  %v651 = vsel %vm505, %v474, 0
  %v654 = vsel %vm505, %v475, 0
  %v657 = vsel %vm505, %v476, 0
  %v660 = vsel %vm505, %v477, 0
  %v663 = vsel %vm505, %v478, 0
  %v666 = vsel %vm505, %v479, 0
  %v669 = vsel %vm505, %v480, 0
  %v672 = vsel %vm505, %v481, 0
  %v675 = vsel %vm505, %v482, 0
  %v678 = vsel %vm505, %v483, 0
  %v681 = vsel %vm505, %v484, 0
  %v684 = vsel %vm505, %v485, 0
  %v687 = vsel %vm505, %v486, 0
  %v690 = vsel %vm505, %v487, 0
  %v693 = vsel %vm505, %v488, 0
  %v696 = vsel %vm505, %v489, 0
  %698 = vmatprep.subr.mxu0 0.0
  %699 = vmatpush1.msra.mxu0 %v490
  %700 = vmatprep.subr.mxu0 0.0
  %701 = vmatpush1.msra.mxu0 %v491
  %702 = vmatprep.subr.mxu0 0.0
  %703 = vmatpush1.msra.mxu0 %v492
  %704 = vmatprep.subr.mxu0 0.0
  %705 = vmatpush1.msra.mxu0 %v493
  %706 = vmatprep.subr.mxu0 0.0
  %707 = vmatpush1.msra.mxu0 %v494
  %708 = vmatprep.subr.mxu0 0.0
  %709 = vmatpush1.msra.mxu0 %v495
  %710 = vmatprep.subr.mxu0 0.0
  %711 = vmatpush1.msra.mxu0 %v496
  %712 = vmatprep.subr.mxu0 0.0
  %713 = vmatpush1.msra.mxu0 %v497
  %714 = vmatprep.subr.mxu0 0.0
  %715 = vmatpush1.msra.mxu0 0.0
  %716 = vmatprep.subr.mxu0 0.0
  %717 = vmatpush1.msra.mxu0 0.0
  %718 = vmatprep.subr.mxu0 0.0
  %719 = vmatpush1.msra.mxu0 0.0
  %720 = vmatprep.subr.mxu0 0.0
  %721 = vmatpush1.msra.mxu0 0.0
  %722 = vmatprep.subr.mxu0 0.0
  %723 = vmatpush1.msra.mxu0 0.0
  %724 = vmatprep.subr.mxu0 0.0
  %725 = vmatpush1.msra.mxu0 0.0
  %726 = vmatprep.subr.mxu0 0.0
  %727 = vmatpush1.msra.mxu0 0.0
  %728 = vmatprep.subr.mxu0 0.0
  %729 = vmatpush1.msra.mxu0 0.0
  %730 = vmatprep.subr.mxu0 0.0
  %731 = vmatpush1.msra.mxu0 0.0
  %732 = vmatprep.subr.mxu0 0.0
  %733 = vmatpush1.msra.mxu0 0.0
  %734 = vmatprep.subr.mxu0 0.0
  %735 = vmatpush1.msra.mxu0 0.0
  %736 = vmatprep.subr.mxu0 0.0
  %737 = vmatpush1.msra.mxu0 0.0
  %738 = vmatprep.subr.mxu0 0.0
  %739 = vmatpush1.msra.mxu0 0.0
  %740 = vmatprep.subr.mxu0 0.0
  %741 = vmatpush1.msra.mxu0 0.0
  %742 = vmatprep.subr.mxu0 0.0
  %743 = vmatpush1.msra.mxu0 0.0
  %744 = vmatprep.subr.mxu0 0.0
  %745 = vmatpush1.msra.mxu0 0.0
  %746 = vmatprep.subr.mxu0 0.0
  %747 = vmatpush1.msra.mxu0 0.0
  %748 = vmatprep.subr.mxu0 0.0
  %749 = vmatpush1.msra.mxu0 0.0
  %750 = vmatprep.subr.mxu0 0.0
  %751 = vmatpush1.msra.mxu0 0.0
  %752 = vmatprep.subr.mxu0 0.0
  %753 = vmatpush1.msra.mxu0 0.0
  %754 = vmatprep.subr.mxu0 0.0
  %755 = vmatpush1.msra.mxu0 0.0
  %756 = vmatprep.subr.mxu0 0.0
  %757 = vmatpush1.msra.mxu0 0.0
  %758 = vmatprep.subr.mxu0 0.0
  %759 = vmatpush1.msra.mxu0 0.0
  %760 = vmatprep.subr.mxu0 0.0
  %761 = vmatpush1.msra.mxu0 0.0
  %762 = vmatprep.mubr.f32.mxu0 0.0
  %763 = vmatmul.mubr.f32.gmra.mrb[0].mxu0 %v507
  %v764 = vpop.f32.mrb[0].mxu0
  %v765 = vadd.f32 %v503, %v764
  %v766 = vpop.f32.mrb[0].mxu0
  %767 = vmatprep.mubr.f32.mxu0 0.0
  %768 = vmatmul.mubr.f32.gmra.mrb[0].mxu0 %v510
  %v769 = vpop.f32.mrb[0].mxu0
  %v770 = vadd.f32 %v503, %v769
  %v771 = vpop.f32.mrb[0].mxu0
  %772 = vmatprep.mubr.f32.mxu0 0.0
  %773 = vmatmul.mubr.f32.gmra.mrb[0].mxu0 %v513
  %v774 = vpop.f32.mrb[0].mxu0
  %v775 = vadd.f32 %v503, %v774
  %v776 = vpop.f32.mrb[0].mxu0
  %777 = vmatprep.mubr.f32.mxu0 0.0
  %778 = vmatmul.mubr.f32.gmra.mrb[0].mxu0 %v516
  %v779 = vpop.f32.mrb[0].mxu0
  %v780 = vadd.f32 %v503, %v779
  %v781 = vpop.f32.mrb[0].mxu0
  %782 = vmatprep.mubr.f32.mxu0 0.0
  %783 = vmatmul.mubr.f32.gmra.mrb[0].mxu0 %v519
  %v784 = vpop.f32.mrb[0].mxu0
  %v785 = vadd.f32 %v503, %v784
  %v786 = vpop.f32.mrb[0].mxu0
  %787 = vmatprep.mubr.f32.mxu0 0.0
  %788 = vmatmul.mubr.f32.gmra.mrb[0].mxu0 %v522
  %v789 = vpop.f32.mrb[0].mxu0
  %v790 = vadd.f32 %v503, %v789
  %v791 = vpop.f32.mrb[0].mxu0
  %792 = vmatprep.mubr.f32.mxu0 0.0
  %793 = vmatmul.mubr.f32.gmra.mrb[0].mxu0 %v525
  %v794 = vpop.f32.mrb[0].mxu0
  %v795 = vadd.f32 %v503, %v794
  %v796 = vpop.f32.mrb[0].mxu0
  %797 = vmatprep.mubr.f32.mxu0 0.0
  %798 = vmatmul.mubr.f32.gmra.mrb[0].mxu0 %v528
  %v799 = vpop.f32.mrb[0].mxu0
  %v800 = vadd.f32 %v503, %v799
  %v801 = vpop.f32.mrb[0].mxu0
  %802 = vmatprep.mubr.f32.mxu0 0.0
  %803 = vmatmul.mubr.f32.gmra.mrb[0].mxu0 %v531
  %v804 = vpop.f32.mrb[0].mxu0
  %v805 = vadd.f32 %v503, %v804
  %v806 = vpop.f32.mrb[0].mxu0
  %807 = vmatprep.mubr.f32.mxu0 0.0
  %808 = vmatmul.mubr.f32.gmra.mrb[0].mxu0 %v534
  %v809 = vpop.f32.mrb[0].mxu0
  %v810 = vadd.f32 %v503, %v809
  %v811 = vpop.f32.mrb[0].mxu0
  %812 = vmatprep.mubr.f32.mxu0 0.0
  %813 = vmatmul.mubr.f32.gmra.mrb[0].mxu0 %v537
  %v814 = vpop.f32.mrb[0].mxu0
  %v815 = vadd.f32 %v503, %v814
  %v816 = vpop.f32.mrb[0].mxu0
  %817 = vmatprep.mubr.f32.mxu0 0.0
  %818 = vmatmul.mubr.f32.gmra.mrb[0].mxu0 %v540
  %v819 = vpop.f32.mrb[0].mxu0
  %v820 = vadd.f32 %v503, %v819
  %v821 = vpop.f32.mrb[0].mxu0
  %822 = vmatprep.mubr.f32.mxu0 0.0
  %823 = vmatmul.mubr.f32.gmra.mrb[0].mxu0 %v543
  %v824 = vpop.f32.mrb[0].mxu0
  %v825 = vadd.f32 %v503, %v824
  %v826 = vpop.f32.mrb[0].mxu0
  %827 = vmatprep.mubr.f32.mxu0 0.0
  %828 = vmatmul.mubr.f32.gmra.mrb[0].mxu0 %v546
  %v829 = vpop.f32.mrb[0].mxu0
  %v830 = vadd.f32 %v503, %v829
  %v831 = vpop.f32.mrb[0].mxu0
  %832 = vmatprep.mubr.f32.mxu0 0.0
  %833 = vmatmul.mubr.f32.gmra.mrb[0].mxu0 %v549
  %v834 = vpop.f32.mrb[0].mxu0
  %v835 = vadd.f32 %v503, %v834
  %v836 = vpop.f32.mrb[0].mxu0
  %837 = vmatprep.mubr.f32.mxu0 0.0
  %838 = vmatmul.mubr.f32.gmra.mrb[0].mxu0 %v552
  %v839 = vpop.f32.mrb[0].mxu0
  %v840 = vadd.f32 %v503, %v839
  %v841 = vpop.f32.mrb[0].mxu0
  %842 = vmatprep.mubr.f32.mxu0 0.0
  %843 = vmatmul.mubr.f32.gmra.mrb[0].mxu0 %v555
  %v844 = vpop.f32.mrb[0].mxu0
  %v845 = vadd.f32 %v503, %v844
  %v846 = vpop.f32.mrb[0].mxu0
  %847 = vmatprep.mubr.f32.mxu0 0.0
  %848 = vmatmul.mubr.f32.gmra.mrb[0].mxu0 %v558
  %v849 = vpop.f32.mrb[0].mxu0
  %v850 = vadd.f32 %v503, %v849
  %v851 = vpop.f32.mrb[0].mxu0
  %852 = vmatprep.mubr.f32.mxu0 0.0
  %853 = vmatmul.mubr.f32.gmra.mrb[0].mxu0 %v561
  %v854 = vpop.f32.mrb[0].mxu0
  %v855 = vadd.f32 %v503, %v854
  %v856 = vpop.f32.mrb[0].mxu0
  %857 = vmatprep.mubr.f32.mxu0 0.0
  %858 = vmatmul.mubr.f32.gmra.mrb[0].mxu0 %v564
  %v859 = vpop.f32.mrb[0].mxu0
  %v860 = vadd.f32 %v503, %v859
  %v861 = vpop.f32.mrb[0].mxu0
  %862 = vmatprep.mubr.f32.mxu0 0.0
  %863 = vmatmul.mubr.f32.gmra.mrb[0].mxu0 %v567
  %v864 = vpop.f32.mrb[0].mxu0
  %v865 = vadd.f32 %v503, %v864
  %v866 = vpop.f32.mrb[0].mxu0
  %867 = vmatprep.mubr.f32.mxu0 0.0
  %868 = vmatmul.mubr.f32.gmra.mrb[0].mxu0 %v570
  %v869 = vpop.f32.mrb[0].mxu0
  %v870 = vadd.f32 %v503, %v869
  %v871 = vpop.f32.mrb[0].mxu0
  %872 = vmatprep.mubr.f32.mxu0 0.0
  %873 = vmatmul.mubr.f32.gmra.mrb[0].mxu0 %v573
  %v874 = vpop.f32.mrb[0].mxu0
  %v875 = vadd.f32 %v503, %v874
  %v876 = vpop.f32.mrb[0].mxu0
  %877 = vmatprep.mubr.f32.mxu0 0.0
  %878 = vmatmul.mubr.f32.gmra.mrb[0].mxu0 %v576
  %v879 = vpop.f32.mrb[0].mxu0
  %v880 = vadd.f32 %v503, %v879
  %v881 = vpop.f32.mrb[0].mxu0
  %882 = vmatprep.mubr.f32.mxu0 0.0
  %883 = vmatmul.mubr.f32.gmra.mrb[0].mxu0 %v579
  %v884 = vpop.f32.mrb[0].mxu0
  %v885 = vadd.f32 %v503, %v884
  %v886 = vpop.f32.mrb[0].mxu0
  %887 = vmatprep.mubr.f32.mxu0 0.0
  %888 = vmatmul.mubr.f32.gmra.mrb[0].mxu0 %v582
  %v889 = vpop.f32.mrb[0].mxu0
  %v890 = vadd.f32 %v503, %v889
  %v891 = vpop.f32.mrb[0].mxu0
  %892 = vmatprep.mubr.f32.mxu0 0.0
  %893 = vmatmul.mubr.f32.gmra.mrb[0].mxu0 %v585
  %v894 = vpop.f32.mrb[0].mxu0
  %v895 = vadd.f32 %v503, %v894
  %v896 = vpop.f32.mrb[0].mxu0
  %897 = vmatprep.mubr.f32.mxu0 0.0
  %898 = vmatmul.mubr.f32.gmra.mrb[0].mxu0 %v588
  %v899 = vpop.f32.mrb[0].mxu0
  %v900 = vadd.f32 %v503, %v899
  %v901 = vpop.f32.mrb[0].mxu0
  %902 = vmatprep.mubr.f32.mxu0 0.0
  %903 = vmatmul.mubr.f32.gmra.mrb[0].mxu0 %v591
  %v904 = vpop.f32.mrb[0].mxu0
  %v905 = vadd.f32 %v503, %v904
  %v906 = vpop.f32.mrb[0].mxu0
  %907 = vmatprep.mubr.f32.mxu0 0.0
  %908 = vmatmul.mubr.f32.gmra.mrb[0].mxu0 %v594
  %v909 = vpop.f32.mrb[0].mxu0
  %v910 = vadd.f32 %v503, %v909
  %v911 = vpop.f32.mrb[0].mxu0
  %912 = vmatprep.mubr.f32.mxu0 0.0
  %913 = vmatmul.mubr.f32.gmra.mrb[0].mxu0 %v597
  %v914 = vpop.f32.mrb[0].mxu0
  %v915 = vadd.f32 %v503, %v914
  %v916 = vpop.f32.mrb[0].mxu0
  %917 = vmatprep.mubr.f32.mxu0 0.0
  %918 = vmatmul.mubr.f32.gmra.mrb[0].mxu0 %v600
  %v919 = vpop.f32.mrb[0].mxu0
  %v920 = vadd.f32 %v503, %v919
  %v921 = vpop.f32.mrb[0].mxu0
  %922 = vmatprep.mubr.f32.mxu0 0.0
  %923 = vmatmul.mubr.f32.gmra.mrb[0].mxu0 %v603
  %v924 = vpop.f32.mrb[0].mxu0
  %v925 = vadd.f32 %v503, %v924
  %v926 = vpop.f32.mrb[0].mxu0
  %927 = vmatprep.mubr.f32.mxu0 0.0
  %928 = vmatmul.mubr.f32.gmra.mrb[0].mxu0 %v606
  %v929 = vpop.f32.mrb[0].mxu0
  %v930 = vadd.f32 %v503, %v929
  %v931 = vpop.f32.mrb[0].mxu0
  %932 = vmatprep.mubr.f32.mxu0 0.0
  %933 = vmatmul.mubr.f32.gmra.mrb[0].mxu0 %v609
  %v934 = vpop.f32.mrb[0].mxu0
  %v935 = vadd.f32 %v503, %v934
  %v936 = vpop.f32.mrb[0].mxu0
  %937 = vmatprep.mubr.f32.mxu0 0.0
  %938 = vmatmul.mubr.f32.gmra.mrb[0].mxu0 %v612
  %v939 = vpop.f32.mrb[0].mxu0
  %v940 = vadd.f32 %v503, %v939
  %v941 = vpop.f32.mrb[0].mxu0
  %942 = vmatprep.mubr.f32.mxu0 0.0
  %943 = vmatmul.mubr.f32.gmra.mrb[0].mxu0 %v615
  %v944 = vpop.f32.mrb[0].mxu0
  %v945 = vadd.f32 %v503, %v944
  %v946 = vpop.f32.mrb[0].mxu0
  %947 = vmatprep.mubr.f32.mxu0 0.0
  %948 = vmatmul.mubr.f32.gmra.mrb[0].mxu0 %v618
  %v949 = vpop.f32.mrb[0].mxu0
  %v950 = vadd.f32 %v503, %v949
  %v951 = vpop.f32.mrb[0].mxu0
  %952 = vmatprep.mubr.f32.mxu0 0.0
  %953 = vmatmul.mubr.f32.gmra.mrb[0].mxu0 %v621
  %v954 = vpop.f32.mrb[0].mxu0
  %v955 = vadd.f32 %v503, %v954
  %v956 = vpop.f32.mrb[0].mxu0
  %957 = vmatprep.mubr.f32.mxu0 0.0
  %958 = vmatmul.mubr.f32.gmra.mrb[0].mxu0 %v624
  %v959 = vpop.f32.mrb[0].mxu0
  %v960 = vadd.f32 %v503, %v959
  %v961 = vpop.f32.mrb[0].mxu0
  %962 = vmatprep.mubr.f32.mxu0 0.0
  %963 = vmatmul.mubr.f32.gmra.mrb[0].mxu0 %v627
  %v964 = vpop.f32.mrb[0].mxu0
  %v965 = vadd.f32 %v503, %v964
  %v966 = vpop.f32.mrb[0].mxu0
  %967 = vmatprep.mubr.f32.mxu0 0.0
  %968 = vmatmul.mubr.f32.gmra.mrb[0].mxu0 %v630
  %v969 = vpop.f32.mrb[0].mxu0
  %v970 = vadd.f32 %v503, %v969
  %v971 = vpop.f32.mrb[0].mxu0
  %972 = vmatprep.mubr.f32.mxu0 0.0
  %973 = vmatmul.mubr.f32.gmra.mrb[0].mxu0 %v633
  %v974 = vpop.f32.mrb[0].mxu0
  %v975 = vadd.f32 %v503, %v974
  %v976 = vpop.f32.mrb[0].mxu0
  %977 = vmatprep.mubr.f32.mxu0 0.0
  %978 = vmatmul.mubr.f32.gmra.mrb[0].mxu0 %v636
  %v979 = vpop.f32.mrb[0].mxu0
  %v980 = vadd.f32 %v503, %v979
  %v981 = vpop.f32.mrb[0].mxu0
  %982 = vmatprep.mubr.f32.mxu0 0.0
  %983 = vmatmul.mubr.f32.gmra.mrb[0].mxu0 %v639
  %v984 = vpop.f32.mrb[0].mxu0
  %v985 = vadd.f32 %v503, %v984
  %v986 = vpop.f32.mrb[0].mxu0
  %987 = vmatprep.mubr.f32.mxu0 0.0
  %988 = vmatmul.mubr.f32.gmra.mrb[0].mxu0 %v642
  %v989 = vpop.f32.mrb[0].mxu0
  %v990 = vadd.f32 %v503, %v989
  %v991 = vpop.f32.mrb[0].mxu0
  %992 = vmatprep.mubr.f32.mxu0 0.0
  %993 = vmatmul.mubr.f32.gmra.mrb[0].mxu0 %v645
  %v994 = vpop.f32.mrb[0].mxu0
  %v995 = vadd.f32 %v503, %v994
  %v996 = vpop.f32.mrb[0].mxu0
  %997 = vmatprep.mubr.f32.mxu0 0.0
  %998 = vmatmul.mubr.f32.gmra.mrb[0].mxu0 %v648
  %v999 = vpop.f32.mrb[0].mxu0
  %v1000 = vadd.f32 %v503, %v999
  %v1001 = vpop.f32.mrb[0].mxu0
  %1002 = vmatprep.mubr.f32.mxu0 0.0
  %1003 = vmatmul.mubr.f32.gmra.mrb[0].mxu0 %v651
  %v1004 = vpop.f32.mrb[0].mxu0
  %v1005 = vadd.f32 %v503, %v1004
  %v1006 = vpop.f32.mrb[0].mxu0
  %1007 = vmatprep.mubr.f32.mxu0 0.0
  %1008 = vmatmul.mubr.f32.gmra.mrb[0].mxu0 %v654
  %v1009 = vpop.f32.mrb[0].mxu0
  %v1010 = vadd.f32 %v503, %v1009
  %v1011 = vpop.f32.mrb[0].mxu0
  %1012 = vmatprep.mubr.f32.mxu0 0.0
  %1013 = vmatmul.mubr.f32.gmra.mrb[0].mxu0 %v657
  %v1014 = vpop.f32.mrb[0].mxu0
  %v1015 = vadd.f32 %v503, %v1014
  %v1016 = vpop.f32.mrb[0].mxu0
  %1017 = vmatprep.mubr.f32.mxu0 0.0
  %1018 = vmatmul.mubr.f32.gmra.mrb[0].mxu0 %v660
  %v1019 = vpop.f32.mrb[0].mxu0
  %v1020 = vadd.f32 %v503, %v1019
  %v1021 = vpop.f32.mrb[0].mxu0
  %1022 = vmatprep.mubr.f32.mxu0 0.0
  %1023 = vmatmul.mubr.f32.gmra.mrb[0].mxu0 %v663
  %v1024 = vpop.f32.mrb[0].mxu0
  %v1025 = vadd.f32 %v503, %v1024
  %v1026 = vpop.f32.mrb[0].mxu0
  %1027 = vmatprep.mubr.f32.mxu0 0.0
  %1028 = vmatmul.mubr.f32.gmra.mrb[0].mxu0 %v666
  %v1029 = vpop.f32.mrb[0].mxu0
  %v1030 = vadd.f32 %v503, %v1029
  %v1031 = vpop.f32.mrb[0].mxu0
  %1032 = vmatprep.mubr.f32.mxu0 0.0
  %1033 = vmatmul.mubr.f32.gmra.mrb[0].mxu0 %v669
  %v1034 = vpop.f32.mrb[0].mxu0
  %v1035 = vadd.f32 %v503, %v1034
  %v1036 = vpop.f32.mrb[0].mxu0
  %1037 = vmatprep.mubr.f32.mxu0 0.0
  %1038 = vmatmul.mubr.f32.gmra.mrb[0].mxu0 %v672
  %v1039 = vpop.f32.mrb[0].mxu0
  %v1040 = vadd.f32 %v503, %v1039
  %v1041 = vpop.f32.mrb[0].mxu0
  %1042 = vmatprep.mubr.f32.mxu0 0.0
  %1043 = vmatmul.mubr.f32.gmra.mrb[0].mxu0 %v675
  %v1044 = vpop.f32.mrb[0].mxu0
  %v1045 = vadd.f32 %v503, %v1044
  %v1046 = vpop.f32.mrb[0].mxu0
  %1047 = vmatprep.mubr.f32.mxu0 0.0
  %1048 = vmatmul.mubr.f32.gmra.mrb[0].mxu0 %v678
  %v1049 = vpop.f32.mrb[0].mxu0
  %v1050 = vadd.f32 %v503, %v1049
  %v1051 = vpop.f32.mrb[0].mxu0
  %1052 = vmatprep.mubr.f32.mxu0 0.0
  %1053 = vmatmul.mubr.f32.gmra.mrb[0].mxu0 %v681
  %v1054 = vpop.f32.mrb[0].mxu0
  %v1055 = vadd.f32 %v503, %v1054
  %v1056 = vpop.f32.mrb[0].mxu0
  %1057 = vmatprep.mubr.f32.mxu0 0.0
  %1058 = vmatmul.mubr.f32.gmra.mrb[0].mxu0 %v684
  %v1059 = vpop.f32.mrb[0].mxu0
  %v1060 = vadd.f32 %v503, %v1059
  %v1061 = vpop.f32.mrb[0].mxu0
  %1062 = vmatprep.mubr.f32.mxu0 0.0
  %1063 = vmatmul.mubr.f32.gmra.mrb[0].mxu0 %v687
  %v1064 = vpop.f32.mrb[0].mxu0
  %v1065 = vadd.f32 %v503, %v1064
  %v1066 = vpop.f32.mrb[0].mxu0
  %1067 = vmatprep.mubr.f32.mxu0 0.0
  %1068 = vmatmul.mubr.f32.gmra.mrb[0].mxu0 %v690
  %v1069 = vpop.f32.mrb[0].mxu0
  %v1070 = vadd.f32 %v503, %v1069
  %v1071 = vpop.f32.mrb[0].mxu0
  %1072 = vmatprep.mubr.f32.mxu0 0.0
  %1073 = vmatmul.mubr.f32.gmra.mrb[0].mxu0 %v693
  %v1074 = vpop.f32.mrb[0].mxu0
  %v1075 = vadd.f32 %v503, %v1074
  %v1076 = vpop.f32.mrb[0].mxu0
  %1077 = vmatprep.mubr.f32.mxu0 0.0
  %1078 = vmatmul.mubr.f32.gmra.mrb[0].mxu0 %v696
  %v1079 = vpop.f32.mrb[0].mxu0
  %v1080 = vadd.f32 %v503, %v1079
  %v1081 = vpop.f32.mrb[0].mxu0
  %1082 = vdwg.mxu0
  %1083 = vst [vmem:[#allocation2] sm:$0xff] %v765
  %1084 = vst [vmem:[#allocation2 + $0x8] sm:$0xff] %v770
  %1085 = vst [vmem:[#allocation2 + $0x10] sm:$0xff] %v775
  %1086 = vst [vmem:[#allocation2 + $0x18] sm:$0xff] %v780
  %1087 = vst [vmem:[#allocation2 + $0x20] sm:$0xff] %v785
  %1088 = vst [vmem:[#allocation2 + $0x28] sm:$0xff] %v790
  %1089 = vst [vmem:[#allocation2 + $0x30] sm:$0xff] %v795
  %1090 = vst [vmem:[#allocation2 + $0x38] sm:$0xff] %v800
  %1091 = vst [vmem:[#allocation2 + $0x40] sm:$0xff] %v805
  %1092 = vst [vmem:[#allocation2 + $0x48] sm:$0xff] %v810
  %1093 = vst [vmem:[#allocation2 + $0x50] sm:$0xff] %v815
  %1094 = vst [vmem:[#allocation2 + $0x58] sm:$0xff] %v820
  %1095 = vst [vmem:[#allocation2 + $0x60] sm:$0xff] %v825
  %1096 = vst [vmem:[#allocation2 + $0x68] sm:$0xff] %v830
  %1097 = vst [vmem:[#allocation2 + $0x70] sm:$0xff] %v835
  %1098 = vst [vmem:[#allocation2 + $0x78] sm:$0xff] %v840
  %1099 = vst [vmem:[#allocation2 + $0x80] sm:$0xff] %v845
  %1100 = vst [vmem:[#allocation2 + $0x88] sm:$0xff] %v850
  %1101 = vst [vmem:[#allocation2 + $0x90] sm:$0xff] %v855
  %1102 = vst [vmem:[#allocation2 + $0x98] sm:$0xff] %v860
  %1103 = vst [vmem:[#allocation2 + $0xa0] sm:$0xff] %v865
  %1104 = vst [vmem:[#allocation2 + $0xa8] sm:$0xff] %v870
  %1105 = vst [vmem:[#allocation2 + $0xb0] sm:$0xff] %v875
  %1106 = vst [vmem:[#allocation2 + $0xb8] sm:$0xff] %v880
  %1107 = vst [vmem:[#allocation2 + $0xc0] sm:$0xff] %v885
  %1108 = vst [vmem:[#allocation2 + $0xc8] sm:$0xff] %v890
  %1109 = vst [vmem:[#allocation2 + $0xd0] sm:$0xff] %v895
  %1110 = vst [vmem:[#allocation2 + $0xd8] sm:$0xff] %v900
  %1111 = vst [vmem:[#allocation2 + $0xe0] sm:$0xff] %v905
  %1112 = vst [vmem:[#allocation2 + $0xe8] sm:$0xff] %v910
  %1113 = vst [vmem:[#allocation2 + $0xf0] sm:$0xff] %v915
  %1114 = vst [vmem:[#allocation2 + $0xf8] sm:$0xff] %v920
  %1115 = vst [vmem:[#allocation2 + $0x100] sm:$0xff] %v925
  %1116 = vst [vmem:[#allocation2 + $0x108] sm:$0xff] %v930
  %1117 = vst [vmem:[#allocation2 + $0x110] sm:$0xff] %v935
  %1118 = vst [vmem:[#allocation2 + $0x118] sm:$0xff] %v940
  %1119 = vst [vmem:[#allocation2 + $0x120] sm:$0xff] %v945
  %1120 = vst [vmem:[#allocation2 + $0x128] sm:$0xff] %v950
  %1121 = vst [vmem:[#allocation2 + $0x130] sm:$0xff] %v955
  %1122 = vst [vmem:[#allocation2 + $0x138] sm:$0xff] %v960
  %1123 = vst [vmem:[#allocation2 + $0x140] sm:$0xff] %v965
  %1124 = vst [vmem:[#allocation2 + $0x148] sm:$0xff] %v970
  %1125 = vst [vmem:[#allocation2 + $0x150] sm:$0xff] %v975
  %1126 = vst [vmem:[#allocation2 + $0x158] sm:$0xff] %v980
  %1127 = vst [vmem:[#allocation2 + $0x160] sm:$0xff] %v985
  %1128 = vst [vmem:[#allocation2 + $0x168] sm:$0xff] %v990
  %1129 = vst [vmem:[#allocation2 + $0x170] sm:$0xff] %v995
  %1130 = vst [vmem:[#allocation2 + $0x178] sm:$0xff] %v1000
  %1131 = vst [vmem:[#allocation2 + $0x180] sm:$0xff] %v1005
  %1132 = vst [vmem:[#allocation2 + $0x188] sm:$0xff] %v1010
  %1133 = vst [vmem:[#allocation2 + $0x190] sm:$0xff] %v1015
  %1134 = vst [vmem:[#allocation2 + $0x198] sm:$0xff] %v1020
  %1135 = vst [vmem:[#allocation2 + $0x1a0] sm:$0xff] %v1025
  %1136 = vst [vmem:[#allocation2 + $0x1a8] sm:$0xff] %v1030
  %1137 = vst [vmem:[#allocation2 + $0x1b0] sm:$0xff] %v1035
  %1138 = vst [vmem:[#allocation2 + $0x1b8] sm:$0xff] %v1040
  %1139 = vst [vmem:[#allocation2 + $0x1c0] sm:$0xff] %v1045
  %1140 = vst [vmem:[#allocation2 + $0x1c8] sm:$0xff] %v1050
  %1141 = vst [vmem:[#allocation2 + $0x1d0] sm:$0xff] %v1055
  %1142 = vst [vmem:[#allocation2 + $0x1d8] sm:$0xff] %v1060
  %1143 = vst [vmem:[#allocation2 + $0x1e0] sm:$0xff] %v1065
  %1144 = vst [vmem:[#allocation2 + $0x1e8] sm:$0xff] %v1070
  %1145 = vst [vmem:[#allocation2 + $0x1f0] sm:$0xff] %v1075
  %1146 = vst [vmem:[#allocation2 + $0x1f8] sm:$0xff] %v1080
  %v1147 = vld [vmem:[%s1] sm:$0xff]
  %v1148 = vld [vmem:[%s1 + $0x8] sm:$0xff]
  %v1149 = vld [vmem:[%s1 + $0x10] sm:$0xff]
  %v1150 = vld [vmem:[%s1 + $0x18] sm:$0xff]
  %v1151 = vld [vmem:[%s1 + $0x20] sm:$0xff]
  %v1152 = vld [vmem:[%s1 + $0x28] sm:$0xff]
  %v1153 = vld [vmem:[%s1 + $0x30] sm:$0xff]
  %v1154 = vld [vmem:[%s1 + $0x38] sm:$0xff]
  %v1155 = vld [vmem:[%s4] sm:$0xff]
  %v1156 = vld [vmem:[%s4 + $0x8] sm:$0xff]
  %v1157 = vld [vmem:[%s4 + $0x10] sm:$0xff]
  %v1158 = vld [vmem:[%s4 + $0x18] sm:$0xff]
  %v1159 = vld [vmem:[#allocation2] sm:$0xff]
  %v1160 = vld [vmem:[#allocation2 + $0x8] sm:$0xff]
  %v1161 = vld [vmem:[#allocation2 + $0x10] sm:$0xff]
  %v1162 = vld [vmem:[#allocation2 + $0x18] sm:$0xff]
  %v1163 = vld [vmem:[#allocation2 + $0x20] sm:$0xff]
  %v1164 = vld [vmem:[#allocation2 + $0x28] sm:$0xff]
  %v1165 = vld [vmem:[#allocation2 + $0x30] sm:$0xff]
  %v1166 = vld [vmem:[#allocation2 + $0x38] sm:$0xff]
  %vm1167 = vcmask 261120
  %v1169 = vsel %vm1167, 0.0, 0
  %1171 = vmatprep.subr.mxu0 0.0
  %1172 = vmatpush1.msra.mxu0 %v1155
  %1173 = vmatprep.subr.mxu0 0.0
  %1174 = vmatpush1.msra.mxu0 %v1156
  %1175 = vmatprep.subr.mxu0 0.0
  %1176 = vmatpush1.msra.mxu0 %v1157
  %1177 = vmatprep.subr.mxu0 0.0
  %1178 = vmatpush1.msra.mxu0 %v1158
  %1179 = vmatprep.subr.mxu0 0.0
  %1180 = vmatpush1.msra.mxu0 0.0
  %1181 = vmatprep.subr.mxu0 0.0
  %1182 = vmatpush1.msra.mxu0 0.0
  %1183 = vmatprep.subr.mxu0 0.0
  %1184 = vmatpush1.msra.mxu0 0.0
  %1185 = vmatprep.subr.mxu0 0.0
  %1186 = vmatpush1.msra.mxu0 0.0
  %1187 = vmatprep.subr.mxu0 0.0
  %1188 = vmatpush1.msra.mxu0 0.0
  %1189 = vmatprep.subr.mxu0 0.0
  %1190 = vmatpush1.msra.mxu0 0.0
  %1191 = vmatprep.subr.mxu0 0.0
  %1192 = vmatpush1.msra.mxu0 0.0
  %1193 = vmatprep.subr.mxu0 0.0
  %1194 = vmatpush1.msra.mxu0 0.0
  %1195 = vmatprep.subr.mxu0 0.0
  %1196 = vmatpush1.msra.mxu0 0.0
  %1197 = vmatprep.subr.mxu0 0.0
  %1198 = vmatpush1.msra.mxu0 0.0
  %1199 = vmatprep.subr.mxu0 0.0
  %1200 = vmatpush1.msra.mxu0 0.0
  %1201 = vmatprep.subr.mxu0 0.0
  %1202 = vmatpush1.msra.mxu0 0.0
  %1203 = vmatprep.subr.mxu0 0.0
  %1204 = vmatpush1.msra.mxu0 0.0
  %1205 = vmatprep.subr.mxu0 0.0
  %1206 = vmatpush1.msra.mxu0 0.0
  %1207 = vmatprep.subr.mxu0 0.0
  %1208 = vmatpush1.msra.mxu0 0.0
  %1209 = vmatprep.subr.mxu0 0.0
  %1210 = vmatpush1.msra.mxu0 0.0
  %1211 = vmatprep.subr.mxu0 0.0
  %1212 = vmatpush1.msra.mxu0 0.0
  %1213 = vmatprep.subr.mxu0 0.0
  %1214 = vmatpush1.msra.mxu0 0.0
  %1215 = vmatprep.subr.mxu0 0.0
  %1216 = vmatpush1.msra.mxu0 0.0
  %1217 = vmatprep.subr.mxu0 0.0
  %1218 = vmatpush1.msra.mxu0 0.0
  %1219 = vmatprep.subr.mxu0 0.0
  %1220 = vmatpush1.msra.mxu0 0.0
  %1221 = vmatprep.subr.mxu0 0.0
  %1222 = vmatpush1.msra.mxu0 0.0
  %1223 = vmatprep.subr.mxu0 0.0
  %1224 = vmatpush1.msra.mxu0 0.0
  %1225 = vmatprep.subr.mxu0 0.0
  %1226 = vmatpush1.msra.mxu0 0.0
  %1227 = vmatprep.subr.mxu0 0.0
  %1228 = vmatpush1.msra.mxu0 0.0
  %1229 = vmatprep.subr.mxu0 0.0
  %1230 = vmatpush1.msra.mxu0 0.0
  %1231 = vmatprep.subr.mxu0 0.0
  %1232 = vmatpush1.msra.mxu0 0.0
  %1233 = vmatprep.subr.mxu0 0.0
  %1234 = vmatpush1.msra.mxu0 0.0
  %1235 = vmatprep.mubr.f32.mxu0 0.0
  %1236 = vmatmul.mubr.f32.gmra.mrb[0].mxu0 %v1169
  %v1237 = vpop.f32.mrb[0].mxu0
  %v1238 = vadd.f32 0.0, %v1237
  %v1239 = vpop.f32.mrb[0].mxu0
  %1240 = vmatprep.mubr.f32.mxu0 0.0
  %1241 = vmatmul.mubr.f32.gmra.mrb[0].mxu0 %v1169
  %v1242 = vpop.f32.mrb[0].mxu0
  %v1243 = vadd.f32 0.0, %v1242
  %v1244 = vpop.f32.mrb[0].mxu0
  %1245 = vmatprep.mubr.f32.mxu0 0.0
  %1246 = vmatmul.mubr.f32.gmra.mrb[0].mxu0 %v1169
  %v1247 = vpop.f32.mrb[0].mxu0
  %v1248 = vadd.f32 0.0, %v1247
  %v1249 = vpop.f32.mrb[0].mxu0
  %1250 = vmatprep.mubr.f32.mxu0 0.0
  %1251 = vmatmul.mubr.f32.gmra.mrb[0].mxu0 %v1169
  %v1252 = vpop.f32.mrb[0].mxu0
  %v1253 = vadd.f32 0.0, %v1252
  %v1254 = vpop.f32.mrb[0].mxu0
  %1255 = vmatprep.mubr.f32.mxu0 0.0
  %1256 = vmatmul.mubr.f32.gmra.mrb[0].mxu0 %v1169
  %v1257 = vpop.f32.mrb[0].mxu0
  %v1258 = vadd.f32 0.0, %v1257
  %v1259 = vpop.f32.mrb[0].mxu0
  %1260 = vmatprep.mubr.f32.mxu0 0.0
  %1261 = vmatmul.mubr.f32.gmra.mrb[0].mxu0 %v1169
  %v1262 = vpop.f32.mrb[0].mxu0
  %v1263 = vadd.f32 0.0, %v1262
  %v1264 = vpop.f32.mrb[0].mxu0
  %1265 = vmatprep.mubr.f32.mxu0 0.0
  %1266 = vmatmul.mubr.f32.gmra.mrb[0].mxu0 %v1169
  %v1267 = vpop.f32.mrb[0].mxu0
  %v1268 = vadd.f32 0.0, %v1267
  %v1269 = vpop.f32.mrb[0].mxu0
  %1270 = vmatprep.mubr.f32.mxu0 0.0
  %1271 = vmatmul.mubr.f32.gmra.mrb[0].mxu0 %v1169
  %v1272 = vpop.f32.mrb[0].mxu0
  %v1273 = vadd.f32 0.0, %v1272
  %v1274 = vpop.f32.mrb[0].mxu0
  %1275 = vdwg.mxu0
  %v1276 = vadd.f32 %v1159, %v1238
  %v1277 = vadd.f32 %v1160, %v1243
  %v1278 = vadd.f32 %v1161, %v1248
  %v1279 = vadd.f32 %v1162, %v1253
  %v1280 = vadd.f32 %v1163, %v1258
  %v1281 = vadd.f32 %v1164, %v1263
  %v1282 = vadd.f32 %v1165, %v1268
  %v1283 = vadd.f32 %v1166, %v1273
  %v1284 = vsub.f32 0.0, %v1276
  %v1285 = vsub.f32 0.0, %v1277
  %v1286 = vsub.f32 0.0, %v1278
  %v1287 = vsub.f32 0.0, %v1279
  %v1288 = vsub.f32 0.0, %v1280
  %v1289 = vsub.f32 0.0, %v1281
  %v1290 = vsub.f32 0.0, %v1282
  %v1291 = vsub.f32 0.0, %v1283
  %v1292 = vmul.f32 %v1284, 1.442695
  %v1293 = vpow.pop %v1292
  %v1294 = vmul.f32 %v1285, 1.442695
  %v1295 = vpow.pop %v1294
  %v1296 = vmul.f32 %v1286, 1.442695
  %v1297 = vpow.pop %v1296
  %v1298 = vmul.f32 %v1287, 1.442695
  %v1299 = vpow.pop %v1298
  %v1300 = vmul.f32 %v1288, 1.442695
  %v1301 = vpow.pop %v1300
  %v1302 = vmul.f32 %v1289, 1.442695
  %v1303 = vpow.pop %v1302
  %v1304 = vmul.f32 %v1290, 1.442695
  %v1305 = vpow.pop %v1304
  %v1306 = vmul.f32 %v1291, 1.442695
  %v1307 = vpow.pop %v1306
  %v1308 = vadd.f32 %v1293, 1.0
  %v1309 = vadd.f32 %v1295, 1.0
  %v1310 = vadd.f32 %v1297, 1.0
  %v1311 = vadd.f32 %v1299, 1.0
  %v1312 = vadd.f32 %v1301, 1.0
  %v1313 = vadd.f32 %v1303, 1.0
  %v1314 = vadd.f32 %v1305, 1.0
  %v1315 = vadd.f32 %v1307, 1.0
  %v1316 = vrcp.pop %v1308
  %v1317 = vrcp.pop %v1309
  %v1318 = vrcp.pop %v1310
  %v1319 = vrcp.pop %v1311
  %v1320 = vrcp.pop %v1312
  %v1321 = vrcp.pop %v1313
  %v1322 = vrcp.pop %v1314
  %v1323 = vrcp.pop %v1315
  %v1324 = vtanh.pop %v1276
  %v1325 = vtanh.pop %v1277
  %v1326 = vtanh.pop %v1278
  %v1327 = vtanh.pop %v1279
  %v1328 = vtanh.pop %v1280
  %v1329 = vtanh.pop %v1281
  %v1330 = vtanh.pop %v1282
  %v1331 = vtanh.pop %v1283
  %v1332 = vmul.f32 %v1316, 0.0
  %v1333 = vmul.f32 %v1317, 0.0
  %v1334 = vmul.f32 %v1318, 0.0
  %v1335 = vmul.f32 %v1319, 0.0
  %v1336 = vmul.f32 %v1320, 0.0
  %v1337 = vmul.f32 %v1321, 0.0
  %v1338 = vmul.f32 %v1322, 0.0
  %v1339 = vmul.f32 %v1323, 0.0
  %1348 = vrot.lane.b32.xlu0 %v1324, 64
  %v1349 = vpop.permute.xlu0 %1348
  %1350 = vrot.lane.b32.xlu0 %v1325, 64
  %v1351 = vpop.permute.xlu0 %1350
  %1352 = vrot.lane.b32.xlu0 %v1326, 64
  %v1353 = vpop.permute.xlu0 %1352
  %1354 = vrot.lane.b32.xlu0 %v1327, 64
  %v1355 = vpop.permute.xlu0 %1354
  %1356 = vrot.lane.b32.xlu0 %v1328, 64
  %v1357 = vpop.permute.xlu0 %1356
  %1358 = vrot.lane.b32.xlu0 %v1329, 64
  %v1359 = vpop.permute.xlu0 %1358
  %1360 = vrot.lane.b32.xlu0 %v1330, 64
  %v1361 = vpop.permute.xlu0 %1360
  %1362 = vrot.lane.b32.xlu0 %v1331, 64
  %v1363 = vpop.permute.xlu0 %1362
  %v1372 = vmul.f32 %v1316, %v1349
  %v1373 = vmul.f32 %v1317, %v1351
  %v1374 = vmul.f32 %v1318, %v1353
  %v1375 = vmul.f32 %v1319, %v1355
  %v1376 = vmul.f32 %v1320, %v1357
  %v1377 = vmul.f32 %v1321, %v1359
  %v1378 = vmul.f32 %v1322, %v1361
  %v1379 = vmul.f32 %v1323, %v1363
  %1388 = vrot.lane.b32.xlu0 %v1372, 32
  %v1389 = vpop.permute.xlu0 %1388
  %1390 = vrot.lane.b32.xlu0 %v1373, 32
  %v1391 = vpop.permute.xlu0 %1390
  %1392 = vrot.lane.b32.xlu0 %v1374, 32
  %v1393 = vpop.permute.xlu0 %1392
  %1394 = vrot.lane.b32.xlu0 %v1375, 32
  %v1395 = vpop.permute.xlu0 %1394
  %1396 = vrot.lane.b32.xlu0 %v1376, 32
  %v1397 = vpop.permute.xlu0 %1396
  %1398 = vrot.lane.b32.xlu0 %v1377, 32
  %v1399 = vpop.permute.xlu0 %1398
  %1400 = vrot.lane.b32.xlu0 %v1378, 32
  %v1401 = vpop.permute.xlu0 %1400
  %1402 = vrot.lane.b32.xlu0 %v1379, 32
  %v1403 = vpop.permute.xlu0 %1402
  %v1412 = vadd.f32 %v1332, %v1389
  %v1413 = vadd.f32 %v1333, %v1391
  %v1414 = vadd.f32 %v1334, %v1393
  %v1415 = vadd.f32 %v1335, %v1395
  %v1416 = vadd.f32 %v1336, %v1397
  %v1417 = vadd.f32 %v1337, %v1399
  %v1418 = vadd.f32 %v1338, %v1401
  %v1419 = vadd.f32 %v1339, %v1403
  %v1420 = vtanh.pop %v1412
  %v1421 = vtanh.pop %v1413
  %v1422 = vtanh.pop %v1414
  %v1423 = vtanh.pop %v1415
  %v1424 = vtanh.pop %v1416
  %v1425 = vtanh.pop %v1417
  %v1426 = vtanh.pop %v1418
  %v1427 = vtanh.pop %v1419
  %1436 = vrot.lane.b32.xlu0 %v1420, 64
  %v1437 = vpop.permute.xlu0 %1436
  %1438 = vrot.lane.b32.xlu0 %v1421, 64
  %v1439 = vpop.permute.xlu0 %1438
  %1440 = vrot.lane.b32.xlu0 %v1422, 64
  %v1441 = vpop.permute.xlu0 %1440
  %1442 = vrot.lane.b32.xlu0 %v1423, 64
  %v1443 = vpop.permute.xlu0 %1442
  %1444 = vrot.lane.b32.xlu0 %v1424, 64
  %v1445 = vpop.permute.xlu0 %1444
  %1446 = vrot.lane.b32.xlu0 %v1425, 64
  %v1447 = vpop.permute.xlu0 %1446
  %1448 = vrot.lane.b32.xlu0 %v1426, 64
  %v1449 = vpop.permute.xlu0 %1448
  %1450 = vrot.lane.b32.xlu0 %v1427, 64
  %v1451 = vpop.permute.xlu0 %1450
  %v1460 = vmul.f32 %v1316, %v1437
  %v1461 = vmul.f32 %v1317, %v1439
  %v1462 = vmul.f32 %v1318, %v1441
  %v1463 = vmul.f32 %v1319, %v1443
  %v1464 = vmul.f32 %v1320, %v1445
  %v1465 = vmul.f32 %v1321, %v1447
  %v1466 = vmul.f32 %v1322, %v1449
  %v1467 = vmul.f32 %v1323, %v1451
  %vm1468 = vcmp.eq.s32.totalorder %v1147, 0
  %vm1469 = vcmp.eq.s32.totalorder %v1148, 0
  %vm1470 = vcmp.eq.s32.totalorder %v1149, 0
  %vm1471 = vcmp.eq.s32.totalorder %v1150, 0
  %vm1472 = vcmp.eq.s32.totalorder %v1151, 0
  %vm1473 = vcmp.eq.s32.totalorder %v1152, 0
  %vm1474 = vcmp.eq.s32.totalorder %v1153, 0
  %vm1475 = vcmp.eq.s32.totalorder %v1154, 0
  %v1476 = vsel %vm1468, 1, 0
  %v1477 = vsel %vm1469, 1, 0
  %v1478 = vsel %vm1470, 1, 0
  %v1479 = vsel %vm1471, 1, 0
  %v1480 = vsel %vm1472, 1, 0
  %v1481 = vsel %vm1473, 1, 0
  %v1482 = vsel %vm1474, 1, 0
  %v1483 = vsel %vm1475, 1, 0
  %1484 = vset.pattern.permute.xlu0 0
  %1485 = vperm.xlu0 %1484, %v1476
  %v1486 = vpop.permute.xlu0 %1485
  %1487 = vset.pattern.permute.xlu0 0
  %1488 = vperm.xlu0 %1487, %v1477
  %v1489 = vpop.permute.xlu0 %1488
  %1490 = vset.pattern.permute.xlu0 0
  %1491 = vperm.xlu0 %1490, %v1478
  %v1492 = vpop.permute.xlu0 %1491
  %1493 = vset.pattern.permute.xlu0 0
  %1494 = vperm.xlu0 %1493, %v1479
  %v1495 = vpop.permute.xlu0 %1494
  %1496 = vset.pattern.permute.xlu0 0
  %1497 = vperm.xlu0 %1496, %v1480
  %v1498 = vpop.permute.xlu0 %1497
  %1499 = vset.pattern.permute.xlu0 0
  %1500 = vperm.xlu0 %1499, %v1481
  %v1501 = vpop.permute.xlu0 %1500
  %1502 = vset.pattern.permute.xlu0 0
  %1503 = vperm.xlu0 %1502, %v1482
  %v1504 = vpop.permute.xlu0 %1503
  %1505 = vset.pattern.permute.xlu0 0
  %1506 = vperm.xlu0 %1505, %v1483
  %v1507 = vpop.permute.xlu0 %1506
  %vm1508 = vcmp.eq.s32.totalorder %v1486, 1
  %vm1509 = vcmp.eq.s32.totalorder %v1489, 1
  %vm1510 = vcmp.eq.s32.totalorder %v1492, 1
  %vm1511 = vcmp.eq.s32.totalorder %v1495, 1
  %vm1512 = vcmp.eq.s32.totalorder %v1498, 1
  %vm1513 = vcmp.eq.s32.totalorder %v1501, 1
  %vm1514 = vcmp.eq.s32.totalorder %v1504, 1
  %vm1515 = vcmp.eq.s32.totalorder %v1507, 1
  %v1516 = vsel %vm1508, %v1460, 0.0
  %v1517 = vsel %vm1509, %v1461, 0.0
  %v1518 = vsel %vm1510, %v1462, 0.0
  %v1519 = vsel %vm1511, %v1463, 0.0
  %v1520 = vsel %vm1512, %v1464, 0.0
  %v1521 = vsel %vm1513, %v1465, 0.0
  %v1522 = vsel %vm1514, %v1466, 0.0
  %v1523 = vsel %vm1515, %v1467, 0.0
  %s1524 = scalar_lea.vmem [#allocation2], 64
  %v1525 = vld [vmem:[%s1524] sm:$0xff]
  %v1526 = vld [vmem:[%s1524 + $0x8] sm:$0xff]
  %v1527 = vld [vmem:[%s1524 + $0x10] sm:$0xff]
  %v1528 = vld [vmem:[%s1524 + $0x18] sm:$0xff]
  %v1529 = vld [vmem:[%s1524 + $0x20] sm:$0xff]
  %v1530 = vld [vmem:[%s1524 + $0x28] sm:$0xff]
  %v1531 = vld [vmem:[%s1524 + $0x30] sm:$0xff]
  %v1532 = vld [vmem:[%s1524 + $0x38] sm:$0xff]
  %1541 = vrot.lane.b32.xlu0 %v1460, 32
  %v1542 = vpop.permute.xlu0 %1541
  %1543 = vrot.lane.b32.xlu0 %v1461, 32
  %v1544 = vpop.permute.xlu0 %1543
  %1545 = vrot.lane.b32.xlu0 %v1462, 32
  %v1546 = vpop.permute.xlu0 %1545
  %1547 = vrot.lane.b32.xlu0 %v1463, 32
  %v1548 = vpop.permute.xlu0 %1547
  %1549 = vrot.lane.b32.xlu0 %v1464, 32
  %v1550 = vpop.permute.xlu0 %1549
  %1551 = vrot.lane.b32.xlu0 %v1465, 32
  %v1552 = vpop.permute.xlu0 %1551
  %1553 = vrot.lane.b32.xlu0 %v1466, 32
  %v1554 = vpop.permute.xlu0 %1553
  %1555 = vrot.lane.b32.xlu0 %v1467, 32
  %v1556 = vpop.permute.xlu0 %1555
  %v1557 = vsel %vm1167, %v1542, 0
  %v1559 = vsel %vm1167, %v1544, 0
  %v1561 = vsel %vm1167, %v1546, 0
  %v1563 = vsel %vm1167, %v1548, 0
  %v1565 = vsel %vm1167, %v1550, 0
  %v1567 = vsel %vm1167, %v1552, 0
  %v1569 = vsel %vm1167, %v1554, 0
  %v1571 = vsel %vm1167, %v1556, 0
  %1573 = vmatprep.subr.mxu0 0.0
  %1574 = vmatpush1.msra.mxu0 %v1155
  %1575 = vmatprep.subr.mxu0 0.0
  %1576 = vmatpush1.msra.mxu0 %v1156
  %1577 = vmatprep.subr.mxu0 0.0
  %1578 = vmatpush1.msra.mxu0 %v1157
  %1579 = vmatprep.subr.mxu0 0.0
  %1580 = vmatpush1.msra.mxu0 %v1158
  %1581 = vmatprep.subr.mxu0 0.0
  %1582 = vmatpush1.msra.mxu0 0.0
  %1583 = vmatprep.subr.mxu0 0.0
  %1584 = vmatpush1.msra.mxu0 0.0
  %1585 = vmatprep.subr.mxu0 0.0
  %1586 = vmatpush1.msra.mxu0 0.0
  %1587 = vmatprep.subr.mxu0 0.0
  %1588 = vmatpush1.msra.mxu0 0.0
  %1589 = vmatprep.subr.mxu0 0.0
  %1590 = vmatpush1.msra.mxu0 0.0
  %1591 = vmatprep.subr.mxu0 0.0
  %1592 = vmatpush1.msra.mxu0 0.0
  %1593 = vmatprep.subr.mxu0 0.0
  %1594 = vmatpush1.msra.mxu0 0.0
  %1595 = vmatprep.subr.mxu0 0.0
  %1596 = vmatpush1.msra.mxu0 0.0
  %1597 = vmatprep.subr.mxu0 0.0
  %1598 = vmatpush1.msra.mxu0 0.0
  %1599 = vmatprep.subr.mxu0 0.0
  %1600 = vmatpush1.msra.mxu0 0.0
  %1601 = vmatprep.subr.mxu0 0.0
  %1602 = vmatpush1.msra.mxu0 0.0
  %1603 = vmatprep.subr.mxu0 0.0
  %1604 = vmatpush1.msra.mxu0 0.0
  %1605 = vmatprep.subr.mxu0 0.0
  %1606 = vmatpush1.msra.mxu0 0.0
  %1607 = vmatprep.subr.mxu0 0.0
  %1608 = vmatpush1.msra.mxu0 0.0
  %1609 = vmatprep.subr.mxu0 0.0
  %1610 = vmatpush1.msra.mxu0 0.0
  %1611 = vmatprep.subr.mxu0 0.0
  %1612 = vmatpush1.msra.mxu0 0.0
  %1613 = vmatprep.subr.mxu0 0.0
  %1614 = vmatpush1.msra.mxu0 0.0
  %1615 = vmatprep.subr.mxu0 0.0
  %1616 = vmatpush1.msra.mxu0 0.0
  %1617 = vmatprep.subr.mxu0 0.0
  %1618 = vmatpush1.msra.mxu0 0.0
  %1619 = vmatprep.subr.mxu0 0.0
  %1620 = vmatpush1.msra.mxu0 0.0
  %1621 = vmatprep.subr.mxu0 0.0
  %1622 = vmatpush1.msra.mxu0 0.0
  %1623 = vmatprep.subr.mxu0 0.0
  %1624 = vmatpush1.msra.mxu0 0.0
  %1625 = vmatprep.subr.mxu0 0.0
  %1626 = vmatpush1.msra.mxu0 0.0
  %1627 = vmatprep.subr.mxu0 0.0
  %1628 = vmatpush1.msra.mxu0 0.0
  %1629 = vmatprep.subr.mxu0 0.0
  %1630 = vmatpush1.msra.mxu0 0.0
  %1631 = vmatprep.subr.mxu0 0.0
  %1632 = vmatpush1.msra.mxu0 0.0
  %1633 = vmatprep.subr.mxu0 0.0
  %1634 = vmatpush1.msra.mxu0 0.0
  %1635 = vmatprep.subr.mxu0 0.0
  %1636 = vmatpush1.msra.mxu0 0.0
  %1637 = vmatprep.mubr.f32.mxu0 0.0
  %1638 = vmatmul.mubr.f32.gmra.mrb[0].mxu0 %v1557
  %v1639 = vpop.f32.mrb[0].mxu0
  %v1640 = vadd.f32 0.0, %v1639
  %v1641 = vpop.f32.mrb[0].mxu0
  %1642 = vmatprep.mubr.f32.mxu0 0.0
  %1643 = vmatmul.mubr.f32.gmra.mrb[0].mxu0 %v1559
  %v1644 = vpop.f32.mrb[0].mxu0
  %v1645 = vadd.f32 0.0, %v1644
  %v1646 = vpop.f32.mrb[0].mxu0
  %1647 = vmatprep.mubr.f32.mxu0 0.0
  %1648 = vmatmul.mubr.f32.gmra.mrb[0].mxu0 %v1561
  %v1649 = vpop.f32.mrb[0].mxu0
  %v1650 = vadd.f32 0.0, %v1649
  %v1651 = vpop.f32.mrb[0].mxu0
  %1652 = vmatprep.mubr.f32.mxu0 0.0
  %1653 = vmatmul.mubr.f32.gmra.mrb[0].mxu0 %v1563
  %v1654 = vpop.f32.mrb[0].mxu0
  %v1655 = vadd.f32 0.0, %v1654
  %v1656 = vpop.f32.mrb[0].mxu0
  %1657 = vmatprep.mubr.f32.mxu0 0.0
  %1658 = vmatmul.mubr.f32.gmra.mrb[0].mxu0 %v1565
  %v1659 = vpop.f32.mrb[0].mxu0
  %v1660 = vadd.f32 0.0, %v1659
  %v1661 = vpop.f32.mrb[0].mxu0
  %1662 = vmatprep.mubr.f32.mxu0 0.0
  %1663 = vmatmul.mubr.f32.gmra.mrb[0].mxu0 %v1567
  %v1664 = vpop.f32.mrb[0].mxu0
  %v1665 = vadd.f32 0.0, %v1664
  %v1666 = vpop.f32.mrb[0].mxu0
  %1667 = vmatprep.mubr.f32.mxu0 0.0
  %1668 = vmatmul.mubr.f32.gmra.mrb[0].mxu0 %v1569
  %v1669 = vpop.f32.mrb[0].mxu0
  %v1670 = vadd.f32 0.0, %v1669
  %v1671 = vpop.f32.mrb[0].mxu0
  %1672 = vmatprep.mubr.f32.mxu0 0.0
  %1673 = vmatmul.mubr.f32.gmra.mrb[0].mxu0 %v1571
  %v1674 = vpop.f32.mrb[0].mxu0
  %v1675 = vadd.f32 0.0, %v1674
  %v1676 = vpop.f32.mrb[0].mxu0
  %1677 = vdwg.mxu0
  %v1678 = vadd.f32 %v1525, %v1640
  %v1679 = vadd.f32 %v1526, %v1645
  %v1680 = vadd.f32 %v1527, %v1650
  %v1681 = vadd.f32 %v1528, %v1655
  %v1682 = vadd.f32 %v1529, %v1660
  %v1683 = vadd.f32 %v1530, %v1665
  %v1684 = vadd.f32 %v1531, %v1670
  %v1685 = vadd.f32 %v1532, %v1675
  %v1686 = vsub.f32 0.0, %v1678
  %v1687 = vsub.f32 0.0, %v1679
  %v1688 = vsub.f32 0.0, %v1680
  %v1689 = vsub.f32 0.0, %v1681
  %v1690 = vsub.f32 0.0, %v1682
  %v1691 = vsub.f32 0.0, %v1683
  %v1692 = vsub.f32 0.0, %v1684
  %v1693 = vsub.f32 0.0, %v1685
  %v1694 = vmul.f32 %v1686, 1.442695
  %v1695 = vpow.pop %v1694
  %v1696 = vmul.f32 %v1687, 1.442695
  %v1697 = vpow.pop %v1696
  %v1698 = vmul.f32 %v1688, 1.442695
  %v1699 = vpow.pop %v1698
  %v1700 = vmul.f32 %v1689, 1.442695
  %v1701 = vpow.pop %v1700
  %v1702 = vmul.f32 %v1690, 1.442695
  %v1703 = vpow.pop %v1702
  %v1704 = vmul.f32 %v1691, 1.442695
  %v1705 = vpow.pop %v1704
  %v1706 = vmul.f32 %v1692, 1.442695
  %v1707 = vpow.pop %v1706
  %v1708 = vmul.f32 %v1693, 1.442695
  %v1709 = vpow.pop %v1708
  %v1710 = vadd.f32 %v1695, 1.0
  %v1711 = vadd.f32 %v1697, 1.0
  %v1712 = vadd.f32 %v1699, 1.0
  %v1713 = vadd.f32 %v1701, 1.0
  %v1714 = vadd.f32 %v1703, 1.0
  %v1715 = vadd.f32 %v1705, 1.0
  %v1716 = vadd.f32 %v1707, 1.0
  %v1717 = vadd.f32 %v1709, 1.0
  %v1718 = vrcp.pop %v1710
  %v1719 = vrcp.pop %v1711
  %v1720 = vrcp.pop %v1712
  %v1721 = vrcp.pop %v1713
  %v1722 = vrcp.pop %v1714
  %v1723 = vrcp.pop %v1715
  %v1724 = vrcp.pop %v1716
  %v1725 = vrcp.pop %v1717
  %v1726 = vtanh.pop %v1678
  %v1727 = vtanh.pop %v1679
  %v1728 = vtanh.pop %v1680
  %v1729 = vtanh.pop %v1681
  %v1730 = vtanh.pop %v1682
  %v1731 = vtanh.pop %v1683
  %v1732 = vtanh.pop %v1684
  %v1733 = vtanh.pop %v1685
  %v1734 = vmul.f32 %v1718, %v1412
  %v1735 = vmul.f32 %v1719, %v1413
  %v1736 = vmul.f32 %v1720, %v1414
  %v1737 = vmul.f32 %v1721, %v1415
  %v1738 = vmul.f32 %v1722, %v1416
  %v1739 = vmul.f32 %v1723, %v1417
  %v1740 = vmul.f32 %v1724, %v1418
  %v1741 = vmul.f32 %v1725, %v1419
  %1750 = vrot.lane.b32.xlu0 %v1726, 64
  %v1751 = vpop.permute.xlu0 %1750
  %1752 = vrot.lane.b32.xlu0 %v1727, 64
  %v1753 = vpop.permute.xlu0 %1752
  %1754 = vrot.lane.b32.xlu0 %v1728, 64
  %v1755 = vpop.permute.xlu0 %1754
  %1756 = vrot.lane.b32.xlu0 %v1729, 64
  %v1757 = vpop.permute.xlu0 %1756
  %1758 = vrot.lane.b32.xlu0 %v1730, 64
  %v1759 = vpop.permute.xlu0 %1758
  %1760 = vrot.lane.b32.xlu0 %v1731, 64
  %v1761 = vpop.permute.xlu0 %1760
  %1762 = vrot.lane.b32.xlu0 %v1732, 64
  %v1763 = vpop.permute.xlu0 %1762
  %1764 = vrot.lane.b32.xlu0 %v1733, 64
  %v1765 = vpop.permute.xlu0 %1764
  %v1774 = vmul.f32 %v1718, %v1751
  %v1775 = vmul.f32 %v1719, %v1753
  %v1776 = vmul.f32 %v1720, %v1755
  %v1777 = vmul.f32 %v1721, %v1757
  %v1778 = vmul.f32 %v1722, %v1759
  %v1779 = vmul.f32 %v1723, %v1761
  %v1780 = vmul.f32 %v1724, %v1763
  %v1781 = vmul.f32 %v1725, %v1765
  %1790 = vrot.lane.b32.xlu0 %v1774, 32
  %v1791 = vpop.permute.xlu0 %1790
  %1792 = vrot.lane.b32.xlu0 %v1775, 32
  %v1793 = vpop.permute.xlu0 %1792
  %1794 = vrot.lane.b32.xlu0 %v1776, 32
  %v1795 = vpop.permute.xlu0 %1794
  %1796 = vrot.lane.b32.xlu0 %v1777, 32
  %v1797 = vpop.permute.xlu0 %1796
  %1798 = vrot.lane.b32.xlu0 %v1778, 32
  %v1799 = vpop.permute.xlu0 %1798
  %1800 = vrot.lane.b32.xlu0 %v1779, 32
  %v1801 = vpop.permute.xlu0 %1800
  %1802 = vrot.lane.b32.xlu0 %v1780, 32
  %v1803 = vpop.permute.xlu0 %1802
  %1804 = vrot.lane.b32.xlu0 %v1781, 32
  %v1805 = vpop.permute.xlu0 %1804
  %v1814 = vadd.f32 %v1734, %v1791
  %v1815 = vadd.f32 %v1735, %v1793
  %v1816 = vadd.f32 %v1736, %v1795
  %v1817 = vadd.f32 %v1737, %v1797
  %v1818 = vadd.f32 %v1738, %v1799
  %v1819 = vadd.f32 %v1739, %v1801
  %v1820 = vadd.f32 %v1740, %v1803
  %v1821 = vadd.f32 %v1741, %v1805
  %v1822 = vtanh.pop %v1814
  %v1823 = vtanh.pop %v1815
  %v1824 = vtanh.pop %v1816
  %v1825 = vtanh.pop %v1817
  %v1826 = vtanh.pop %v1818
  %v1827 = vtanh.pop %v1819
  %v1828 = vtanh.pop %v1820
  %v1829 = vtanh.pop %v1821
  %1838 = vrot.lane.b32.xlu0 %v1822, 64
  %v1839 = vpop.permute.xlu0 %1838
  %1840 = vrot.lane.b32.xlu0 %v1823, 64
  %v1841 = vpop.permute.xlu0 %1840
  %1842 = vrot.lane.b32.xlu0 %v1824, 64
  %v1843 = vpop.permute.xlu0 %1842
  %1844 = vrot.lane.b32.xlu0 %v1825, 64
  %v1845 = vpop.permute.xlu0 %1844
  %1846 = vrot.lane.b32.xlu0 %v1826, 64
  %v1847 = vpop.permute.xlu0 %1846
  %1848 = vrot.lane.b32.xlu0 %v1827, 64
  %v1849 = vpop.permute.xlu0 %1848
  %1850 = vrot.lane.b32.xlu0 %v1828, 64
  %v1851 = vpop.permute.xlu0 %1850
  %1852 = vrot.lane.b32.xlu0 %v1829, 64
  %v1853 = vpop.permute.xlu0 %1852
  %v1862 = vmul.f32 %v1718, %v1839
  %v1863 = vmul.f32 %v1719, %v1841
  %v1864 = vmul.f32 %v1720, %v1843
  %v1865 = vmul.f32 %v1721, %v1845
  %v1866 = vmul.f32 %v1722, %v1847
  %v1867 = vmul.f32 %v1723, %v1849
  %v1868 = vmul.f32 %v1724, %v1851
  %v1869 = vmul.f32 %v1725, %v1853
  %vm1870 = vcmp.eq.s32.totalorder %v1147, 1
  %vm1871 = vcmp.eq.s32.totalorder %v1148, 1
  %vm1872 = vcmp.eq.s32.totalorder %v1149, 1
  %vm1873 = vcmp.eq.s32.totalorder %v1150, 1
  %vm1874 = vcmp.eq.s32.totalorder %v1151, 1
  %vm1875 = vcmp.eq.s32.totalorder %v1152, 1
  %vm1876 = vcmp.eq.s32.totalorder %v1153, 1
  %vm1877 = vcmp.eq.s32.totalorder %v1154, 1
  %v1878 = vsel %vm1870, 1, 0
  %v1879 = vsel %vm1871, 1, 0
  %v1880 = vsel %vm1872, 1, 0
  %v1881 = vsel %vm1873, 1, 0
  %v1882 = vsel %vm1874, 1, 0
  %v1883 = vsel %vm1875, 1, 0
  %v1884 = vsel %vm1876, 1, 0
  %v1885 = vsel %vm1877, 1, 0
  %1886 = vset.pattern.permute.xlu0 0
  %1887 = vperm.xlu0 %1886, %v1878
  %v1888 = vpop.permute.xlu0 %1887
  %1889 = vset.pattern.permute.xlu0 0
  %1890 = vperm.xlu0 %1889, %v1879
  %v1891 = vpop.permute.xlu0 %1890
  %1892 = vset.pattern.permute.xlu0 0
  %1893 = vperm.xlu0 %1892, %v1880
  %v1894 = vpop.permute.xlu0 %1893
  %1895 = vset.pattern.permute.xlu0 0
  %1896 = vperm.xlu0 %1895, %v1881
  %v1897 = vpop.permute.xlu0 %1896
  %1898 = vset.pattern.permute.xlu0 0
  %1899 = vperm.xlu0 %1898, %v1882
  %v1900 = vpop.permute.xlu0 %1899
  %1901 = vset.pattern.permute.xlu0 0
  %1902 = vperm.xlu0 %1901, %v1883
  %v1903 = vpop.permute.xlu0 %1902
  %1904 = vset.pattern.permute.xlu0 0
  %1905 = vperm.xlu0 %1904, %v1884
  %v1906 = vpop.permute.xlu0 %1905
  %1907 = vset.pattern.permute.xlu0 0
  %1908 = vperm.xlu0 %1907, %v1885
  %v1909 = vpop.permute.xlu0 %1908
  %vm1910 = vcmp.eq.s32.totalorder %v1888, 1
  %vm1911 = vcmp.eq.s32.totalorder %v1891, 1
  %vm1912 = vcmp.eq.s32.totalorder %v1894, 1
  %vm1913 = vcmp.eq.s32.totalorder %v1897, 1
  %vm1914 = vcmp.eq.s32.totalorder %v1900, 1
  %vm1915 = vcmp.eq.s32.totalorder %v1903, 1
  %vm1916 = vcmp.eq.s32.totalorder %v1906, 1
  %vm1917 = vcmp.eq.s32.totalorder %v1909, 1
  %v1918 = vsel %vm1910, %v1862, %v1516
  %v1919 = vsel %vm1911, %v1863, %v1517
  %v1920 = vsel %vm1912, %v1864, %v1518
  %v1921 = vsel %vm1913, %v1865, %v1519
  %v1922 = vsel %vm1914, %v1866, %v1520
  %v1923 = vsel %vm1915, %v1867, %v1521
  %v1924 = vsel %vm1916, %v1868, %v1522
  %v1925 = vsel %vm1917, %v1869, %v1523
  %s1926 = scalar_lea.vmem [#allocation2], 128
  %v1927 = vld [vmem:[%s1926] sm:$0xff]
  %v1928 = vld [vmem:[%s1926 + $0x8] sm:$0xff]
  %v1929 = vld [vmem:[%s1926 + $0x10] sm:$0xff]
  %v1930 = vld [vmem:[%s1926 + $0x18] sm:$0xff]
  %v1931 = vld [vmem:[%s1926 + $0x20] sm:$0xff]
  %v1932 = vld [vmem:[%s1926 + $0x28] sm:$0xff]
  %v1933 = vld [vmem:[%s1926 + $0x30] sm:$0xff]
  %v1934 = vld [vmem:[%s1926 + $0x38] sm:$0xff]
  %1943 = vrot.lane.b32.xlu0 %v1862, 32
  %v1944 = vpop.permute.xlu0 %1943
  %1945 = vrot.lane.b32.xlu0 %v1863, 32
  %v1946 = vpop.permute.xlu0 %1945
  %1947 = vrot.lane.b32.xlu0 %v1864, 32
  %v1948 = vpop.permute.xlu0 %1947
  %1949 = vrot.lane.b32.xlu0 %v1865, 32
  %v1950 = vpop.permute.xlu0 %1949
  %1951 = vrot.lane.b32.xlu0 %v1866, 32
  %v1952 = vpop.permute.xlu0 %1951
  %1953 = vrot.lane.b32.xlu0 %v1867, 32
  %v1954 = vpop.permute.xlu0 %1953
  %1955 = vrot.lane.b32.xlu0 %v1868, 32
  %v1956 = vpop.permute.xlu0 %1955
  %1957 = vrot.lane.b32.xlu0 %v1869, 32
  %v1958 = vpop.permute.xlu0 %1957
  %v1959 = vsel %vm1167, %v1944, 0
  %v1961 = vsel %vm1167, %v1946, 0
  %v1963 = vsel %vm1167, %v1948, 0
  %v1965 = vsel %vm1167, %v1950, 0
  %v1967 = vsel %vm1167, %v1952, 0
  %v1969 = vsel %vm1167, %v1954, 0
  %v1971 = vsel %vm1167, %v1956, 0
  %v1973 = vsel %vm1167, %v1958, 0
  %1975 = vmatprep.subr.mxu0 0.0
  %1976 = vmatpush1.msra.mxu0 %v1155
  %1977 = vmatprep.subr.mxu0 0.0
  %1978 = vmatpush1.msra.mxu0 %v1156
  %1979 = vmatprep.subr.mxu0 0.0
  %1980 = vmatpush1.msra.mxu0 %v1157
  %1981 = vmatprep.subr.mxu0 0.0
  %1982 = vmatpush1.msra.mxu0 %v1158
  %1983 = vmatprep.subr.mxu0 0.0
  %1984 = vmatpush1.msra.mxu0 0.0
  %1985 = vmatprep.subr.mxu0 0.0
  %1986 = vmatpush1.msra.mxu0 0.0
  %1987 = vmatprep.subr.mxu0 0.0
  %1988 = vmatpush1.msra.mxu0 0.0
  %1989 = vmatprep.subr.mxu0 0.0
  %1990 = vmatpush1.msra.mxu0 0.0
  %1991 = vmatprep.subr.mxu0 0.0
  %1992 = vmatpush1.msra.mxu0 0.0
  %1993 = vmatprep.subr.mxu0 0.0
  %1994 = vmatpush1.msra.mxu0 0.0
  %1995 = vmatprep.subr.mxu0 0.0
  %1996 = vmatpush1.msra.mxu0 0.0
  %1997 = vmatprep.subr.mxu0 0.0
  %1998 = vmatpush1.msra.mxu0 0.0
  %1999 = vmatprep.subr.mxu0 0.0
  %2000 = vmatpush1.msra.mxu0 0.0
  %2001 = vmatprep.subr.mxu0 0.0
  %2002 = vmatpush1.msra.mxu0 0.0
  %2003 = vmatprep.subr.mxu0 0.0
  %2004 = vmatpush1.msra.mxu0 0.0
  %2005 = vmatprep.subr.mxu0 0.0
  %2006 = vmatpush1.msra.mxu0 0.0
  %2007 = vmatprep.subr.mxu0 0.0
  %2008 = vmatpush1.msra.mxu0 0.0
  %2009 = vmatprep.subr.mxu0 0.0
  %2010 = vmatpush1.msra.mxu0 0.0
  %2011 = vmatprep.subr.mxu0 0.0
  %2012 = vmatpush1.msra.mxu0 0.0
  %2013 = vmatprep.subr.mxu0 0.0
  %2014 = vmatpush1.msra.mxu0 0.0
  %2015 = vmatprep.subr.mxu0 0.0
  %2016 = vmatpush1.msra.mxu0 0.0
  %2017 = vmatprep.subr.mxu0 0.0
  %2018 = vmatpush1.msra.mxu0 0.0
  %2019 = vmatprep.subr.mxu0 0.0
  %2020 = vmatpush1.msra.mxu0 0.0
  %2021 = vmatprep.subr.mxu0 0.0
  %2022 = vmatpush1.msra.mxu0 0.0
  %2023 = vmatprep.subr.mxu0 0.0
  %2024 = vmatpush1.msra.mxu0 0.0
  %2025 = vmatprep.subr.mxu0 0.0
  %2026 = vmatpush1.msra.mxu0 0.0
  %2027 = vmatprep.subr.mxu0 0.0
  %2028 = vmatpush1.msra.mxu0 0.0
  %2029 = vmatprep.subr.mxu0 0.0
  %2030 = vmatpush1.msra.mxu0 0.0
  %2031 = vmatprep.subr.mxu0 0.0
  %2032 = vmatpush1.msra.mxu0 0.0
  %2033 = vmatprep.subr.mxu0 0.0
  %2034 = vmatpush1.msra.mxu0 0.0
  %2035 = vmatprep.subr.mxu0 0.0
  %2036 = vmatpush1.msra.mxu0 0.0
  %2037 = vmatprep.subr.mxu0 0.0
  %2038 = vmatpush1.msra.mxu0 0.0
  %2039 = vmatprep.mubr.f32.mxu0 0.0
  %2040 = vmatmul.mubr.f32.gmra.mrb[0].mxu0 %v1959
  %v2041 = vpop.f32.mrb[0].mxu0
  %v2042 = vadd.f32 0.0, %v2041
  %v2043 = vpop.f32.mrb[0].mxu0
  %2044 = vmatprep.mubr.f32.mxu0 0.0
  %2045 = vmatmul.mubr.f32.gmra.mrb[0].mxu0 %v1961
  %v2046 = vpop.f32.mrb[0].mxu0
  %v2047 = vadd.f32 0.0, %v2046
  %v2048 = vpop.f32.mrb[0].mxu0
  %2049 = vmatprep.mubr.f32.mxu0 0.0
  %2050 = vmatmul.mubr.f32.gmra.mrb[0].mxu0 %v1963
  %v2051 = vpop.f32.mrb[0].mxu0
  %v2052 = vadd.f32 0.0, %v2051
  %v2053 = vpop.f32.mrb[0].mxu0
  %2054 = vmatprep.mubr.f32.mxu0 0.0
  %2055 = vmatmul.mubr.f32.gmra.mrb[0].mxu0 %v1965
  %v2056 = vpop.f32.mrb[0].mxu0
  %v2057 = vadd.f32 0.0, %v2056
  %v2058 = vpop.f32.mrb[0].mxu0
  %2059 = vmatprep.mubr.f32.mxu0 0.0
  %2060 = vmatmul.mubr.f32.gmra.mrb[0].mxu0 %v1967
  %v2061 = vpop.f32.mrb[0].mxu0
  %v2062 = vadd.f32 0.0, %v2061
  %v2063 = vpop.f32.mrb[0].mxu0
  %2064 = vmatprep.mubr.f32.mxu0 0.0
  %2065 = vmatmul.mubr.f32.gmra.mrb[0].mxu0 %v1969
  %v2066 = vpop.f32.mrb[0].mxu0
  %v2067 = vadd.f32 0.0, %v2066
  %v2068 = vpop.f32.mrb[0].mxu0
  %2069 = vmatprep.mubr.f32.mxu0 0.0
  %2070 = vmatmul.mubr.f32.gmra.mrb[0].mxu0 %v1971
  %v2071 = vpop.f32.mrb[0].mxu0
  %v2072 = vadd.f32 0.0, %v2071
  %v2073 = vpop.f32.mrb[0].mxu0
  %2074 = vmatprep.mubr.f32.mxu0 0.0
  %2075 = vmatmul.mubr.f32.gmra.mrb[0].mxu0 %v1973
  %v2076 = vpop.f32.mrb[0].mxu0
  %v2077 = vadd.f32 0.0, %v2076
  %v2078 = vpop.f32.mrb[0].mxu0
  %2079 = vdwg.mxu0
  %v2080 = vadd.f32 %v1927, %v2042
  %v2081 = vadd.f32 %v1928, %v2047
  %v2082 = vadd.f32 %v1929, %v2052
  %v2083 = vadd.f32 %v1930, %v2057
  %v2084 = vadd.f32 %v1931, %v2062
  %v2085 = vadd.f32 %v1932, %v2067
  %v2086 = vadd.f32 %v1933, %v2072
  %v2087 = vadd.f32 %v1934, %v2077
  %v2088 = vsub.f32 0.0, %v2080
  %v2089 = vsub.f32 0.0, %v2081
  %v2090 = vsub.f32 0.0, %v2082
  %v2091 = vsub.f32 0.0, %v2083
  %v2092 = vsub.f32 0.0, %v2084
  %v2093 = vsub.f32 0.0, %v2085
  %v2094 = vsub.f32 0.0, %v2086
  %v2095 = vsub.f32 0.0, %v2087
  %v2096 = vmul.f32 %v2088, 1.442695
  %v2097 = vpow.pop %v2096
  %v2098 = vmul.f32 %v2089, 1.442695
  %v2099 = vpow.pop %v2098
  %v2100 = vmul.f32 %v2090, 1.442695
  %v2101 = vpow.pop %v2100
  %v2102 = vmul.f32 %v2091, 1.442695
  %v2103 = vpow.pop %v2102
  %v2104 = vmul.f32 %v2092, 1.442695
  %v2105 = vpow.pop %v2104
  %v2106 = vmul.f32 %v2093, 1.442695
  %v2107 = vpow.pop %v2106
  %v2108 = vmul.f32 %v2094, 1.442695
  %v2109 = vpow.pop %v2108
  %v2110 = vmul.f32 %v2095, 1.442695
  %v2111 = vpow.pop %v2110
  %v2112 = vadd.f32 %v2097, 1.0
  %v2113 = vadd.f32 %v2099, 1.0
  %v2114 = vadd.f32 %v2101, 1.0
  %v2115 = vadd.f32 %v2103, 1.0
  %v2116 = vadd.f32 %v2105, 1.0
  %v2117 = vadd.f32 %v2107, 1.0
  %v2118 = vadd.f32 %v2109, 1.0
  %v2119 = vadd.f32 %v2111, 1.0
  %v2120 = vrcp.pop %v2112
  %v2121 = vrcp.pop %v2113
  %v2122 = vrcp.pop %v2114
  %v2123 = vrcp.pop %v2115
  %v2124 = vrcp.pop %v2116
  %v2125 = vrcp.pop %v2117
  %v2126 = vrcp.pop %v2118
  %v2127 = vrcp.pop %v2119
  %v2128 = vtanh.pop %v2080
  %v2129 = vtanh.pop %v2081
  %v2130 = vtanh.pop %v2082
  %v2131 = vtanh.pop %v2083
  %v2132 = vtanh.pop %v2084
  %v2133 = vtanh.pop %v2085
  %v2134 = vtanh.pop %v2086
  %v2135 = vtanh.pop %v2087
  %v2136 = vmul.f32 %v2120, %v1814
  %v2137 = vmul.f32 %v2121, %v1815
  %v2138 = vmul.f32 %v2122, %v1816
  %v2139 = vmul.f32 %v2123, %v1817
  %v2140 = vmul.f32 %v2124, %v1818
  %v2141 = vmul.f32 %v2125, %v1819
  %v2142 = vmul.f32 %v2126, %v1820
  %v2143 = vmul.f32 %v2127, %v1821
  %2152 = vrot.lane.b32.xlu0 %v2128, 64
  %v2153 = vpop.permute.xlu0 %2152
  %2154 = vrot.lane.b32.xlu0 %v2129, 64
  %v2155 = vpop.permute.xlu0 %2154
  %2156 = vrot.lane.b32.xlu0 %v2130, 64
  %v2157 = vpop.permute.xlu0 %2156
  %2158 = vrot.lane.b32.xlu0 %v2131, 64
  %v2159 = vpop.permute.xlu0 %2158
  %2160 = vrot.lane.b32.xlu0 %v2132, 64
  %v2161 = vpop.permute.xlu0 %2160
  %2162 = vrot.lane.b32.xlu0 %v2133, 64
  %v2163 = vpop.permute.xlu0 %2162
  %2164 = vrot.lane.b32.xlu0 %v2134, 64
  %v2165 = vpop.permute.xlu0 %2164
  %2166 = vrot.lane.b32.xlu0 %v2135, 64
  %v2167 = vpop.permute.xlu0 %2166
  %v2176 = vmul.f32 %v2120, %v2153
  %v2177 = vmul.f32 %v2121, %v2155
  %v2178 = vmul.f32 %v2122, %v2157
  %v2179 = vmul.f32 %v2123, %v2159
  %v2180 = vmul.f32 %v2124, %v2161
  %v2181 = vmul.f32 %v2125, %v2163
  %v2182 = vmul.f32 %v2126, %v2165
  %v2183 = vmul.f32 %v2127, %v2167
  %2192 = vrot.lane.b32.xlu0 %v2176, 32
  %v2193 = vpop.permute.xlu0 %2192
  %2194 = vrot.lane.b32.xlu0 %v2177, 32
  %v2195 = vpop.permute.xlu0 %2194
  %2196 = vrot.lane.b32.xlu0 %v2178, 32
  %v2197 = vpop.permute.xlu0 %2196
  %2198 = vrot.lane.b32.xlu0 %v2179, 32
  %v2199 = vpop.permute.xlu0 %2198
  %2200 = vrot.lane.b32.xlu0 %v2180, 32
  %v2201 = vpop.permute.xlu0 %2200
  %2202 = vrot.lane.b32.xlu0 %v2181, 32
  %v2203 = vpop.permute.xlu0 %2202
  %2204 = vrot.lane.b32.xlu0 %v2182, 32
  %v2205 = vpop.permute.xlu0 %2204
  %2206 = vrot.lane.b32.xlu0 %v2183, 32
  %v2207 = vpop.permute.xlu0 %2206
  %v2216 = vadd.f32 %v2136, %v2193
  %v2217 = vadd.f32 %v2137, %v2195
  %v2218 = vadd.f32 %v2138, %v2197
  %v2219 = vadd.f32 %v2139, %v2199
  %v2220 = vadd.f32 %v2140, %v2201
  %v2221 = vadd.f32 %v2141, %v2203
  %v2222 = vadd.f32 %v2142, %v2205
  %v2223 = vadd.f32 %v2143, %v2207
  %v2224 = vtanh.pop %v2216
  %v2225 = vtanh.pop %v2217
  %v2226 = vtanh.pop %v2218
  %v2227 = vtanh.pop %v2219
  %v2228 = vtanh.pop %v2220
  %v2229 = vtanh.pop %v2221
  %v2230 = vtanh.pop %v2222
  %v2231 = vtanh.pop %v2223
  %2240 = vrot.lane.b32.xlu0 %v2224, 64
  %v2241 = vpop.permute.xlu0 %2240
  %2242 = vrot.lane.b32.xlu0 %v2225, 64
  %v2243 = vpop.permute.xlu0 %2242
  %2244 = vrot.lane.b32.xlu0 %v2226, 64
  %v2245 = vpop.permute.xlu0 %2244
  %2246 = vrot.lane.b32.xlu0 %v2227, 64
  %v2247 = vpop.permute.xlu0 %2246
  %2248 = vrot.lane.b32.xlu0 %v2228, 64
  %v2249 = vpop.permute.xlu0 %2248
  %2250 = vrot.lane.b32.xlu0 %v2229, 64
  %v2251 = vpop.permute.xlu0 %2250
  %2252 = vrot.lane.b32.xlu0 %v2230, 64
  %v2253 = vpop.permute.xlu0 %2252
  %2254 = vrot.lane.b32.xlu0 %v2231, 64
  %v2255 = vpop.permute.xlu0 %2254
  %v2264 = vmul.f32 %v2120, %v2241
  %v2265 = vmul.f32 %v2121, %v2243
  %v2266 = vmul.f32 %v2122, %v2245
  %v2267 = vmul.f32 %v2123, %v2247
  %v2268 = vmul.f32 %v2124, %v2249
  %v2269 = vmul.f32 %v2125, %v2251
  %v2270 = vmul.f32 %v2126, %v2253
  %v2271 = vmul.f32 %v2127, %v2255
  %vm2272 = vcmp.eq.s32.totalorder %v1147, 2
  %vm2273 = vcmp.eq.s32.totalorder %v1148, 2
  %vm2274 = vcmp.eq.s32.totalorder %v1149, 2
  %vm2275 = vcmp.eq.s32.totalorder %v1150, 2
  %vm2276 = vcmp.eq.s32.totalorder %v1151, 2
  %vm2277 = vcmp.eq.s32.totalorder %v1152, 2
  %vm2278 = vcmp.eq.s32.totalorder %v1153, 2
  %vm2279 = vcmp.eq.s32.totalorder %v1154, 2
  %v2280 = vsel %vm2272, 1, 0
  %v2281 = vsel %vm2273, 1, 0
  %v2282 = vsel %vm2274, 1, 0
  %v2283 = vsel %vm2275, 1, 0
  %v2284 = vsel %vm2276, 1, 0
  %v2285 = vsel %vm2277, 1, 0
  %v2286 = vsel %vm2278, 1, 0
  %v2287 = vsel %vm2279, 1, 0
  %2288 = vset.pattern.permute.xlu0 0
  %2289 = vperm.xlu0 %2288, %v2280
  %v2290 = vpop.permute.xlu0 %2289
  %2291 = vset.pattern.permute.xlu0 0
  %2292 = vperm.xlu0 %2291, %v2281
  %v2293 = vpop.permute.xlu0 %2292
  %2294 = vset.pattern.permute.xlu0 0
  %2295 = vperm.xlu0 %2294, %v2282
  %v2296 = vpop.permute.xlu0 %2295
  %2297 = vset.pattern.permute.xlu0 0
  %2298 = vperm.xlu0 %2297, %v2283
  %v2299 = vpop.permute.xlu0 %2298
  %2300 = vset.pattern.permute.xlu0 0
  %2301 = vperm.xlu0 %2300, %v2284
  %v2302 = vpop.permute.xlu0 %2301
  %2303 = vset.pattern.permute.xlu0 0
  %2304 = vperm.xlu0 %2303, %v2285
  %v2305 = vpop.permute.xlu0 %2304
  %2306 = vset.pattern.permute.xlu0 0
  %2307 = vperm.xlu0 %2306, %v2286
  %v2308 = vpop.permute.xlu0 %2307
  %2309 = vset.pattern.permute.xlu0 0
  %2310 = vperm.xlu0 %2309, %v2287
  %v2311 = vpop.permute.xlu0 %2310
  %vm2312 = vcmp.eq.s32.totalorder %v2290, 1
  %vm2313 = vcmp.eq.s32.totalorder %v2293, 1
  %vm2314 = vcmp.eq.s32.totalorder %v2296, 1
  %vm2315 = vcmp.eq.s32.totalorder %v2299, 1
  %vm2316 = vcmp.eq.s32.totalorder %v2302, 1
  %vm2317 = vcmp.eq.s32.totalorder %v2305, 1
  %vm2318 = vcmp.eq.s32.totalorder %v2308, 1
  %vm2319 = vcmp.eq.s32.totalorder %v2311, 1
  %v2320 = vsel %vm2312, %v2264, %v1918
  %v2321 = vsel %vm2313, %v2265, %v1919
  %v2322 = vsel %vm2314, %v2266, %v1920
  %v2323 = vsel %vm2315, %v2267, %v1921
  %v2324 = vsel %vm2316, %v2268, %v1922
  %v2325 = vsel %vm2317, %v2269, %v1923
  %v2326 = vsel %vm2318, %v2270, %v1924
  %v2327 = vsel %vm2319, %v2271, %v1925
  %s2328 = scalar_lea.vmem [#allocation2], 192
  %v2329 = vld [vmem:[%s2328] sm:$0xff]
  %v2330 = vld [vmem:[%s2328 + $0x8] sm:$0xff]
  %v2331 = vld [vmem:[%s2328 + $0x10] sm:$0xff]
  %v2332 = vld [vmem:[%s2328 + $0x18] sm:$0xff]
  %v2333 = vld [vmem:[%s2328 + $0x20] sm:$0xff]
  %v2334 = vld [vmem:[%s2328 + $0x28] sm:$0xff]
  %v2335 = vld [vmem:[%s2328 + $0x30] sm:$0xff]
  %v2336 = vld [vmem:[%s2328 + $0x38] sm:$0xff]
  %2345 = vrot.lane.b32.xlu0 %v2264, 32
  %v2346 = vpop.permute.xlu0 %2345
  %2347 = vrot.lane.b32.xlu0 %v2265, 32
  %v2348 = vpop.permute.xlu0 %2347
  %2349 = vrot.lane.b32.xlu0 %v2266, 32
  %v2350 = vpop.permute.xlu0 %2349
  %2351 = vrot.lane.b32.xlu0 %v2267, 32
  %v2352 = vpop.permute.xlu0 %2351
  %2353 = vrot.lane.b32.xlu0 %v2268, 32
  %v2354 = vpop.permute.xlu0 %2353
  %2355 = vrot.lane.b32.xlu0 %v2269, 32
  %v2356 = vpop.permute.xlu0 %2355
  %2357 = vrot.lane.b32.xlu0 %v2270, 32
  %v2358 = vpop.permute.xlu0 %2357
  %2359 = vrot.lane.b32.xlu0 %v2271, 32
  %v2360 = vpop.permute.xlu0 %2359
  %v2361 = vsel %vm1167, %v2346, 0
  %v2363 = vsel %vm1167, %v2348, 0
  %v2365 = vsel %vm1167, %v2350, 0
  %v2367 = vsel %vm1167, %v2352, 0
  %v2369 = vsel %vm1167, %v2354, 0
  %v2371 = vsel %vm1167, %v2356, 0
  %v2373 = vsel %vm1167, %v2358, 0
  %v2375 = vsel %vm1167, %v2360, 0
  %2377 = vmatprep.subr.mxu0 0.0
  %2378 = vmatpush1.msra.mxu0 %v1155
  %2379 = vmatprep.subr.mxu0 0.0
  %2380 = vmatpush1.msra.mxu0 %v1156
  %2381 = vmatprep.subr.mxu0 0.0
  %2382 = vmatpush1.msra.mxu0 %v1157
  %2383 = vmatprep.subr.mxu0 0.0
  %2384 = vmatpush1.msra.mxu0 %v1158
  %2385 = vmatprep.subr.mxu0 0.0
  %2386 = vmatpush1.msra.mxu0 0.0
  %2387 = vmatprep.subr.mxu0 0.0
  %2388 = vmatpush1.msra.mxu0 0.0
  %2389 = vmatprep.subr.mxu0 0.0
  %2390 = vmatpush1.msra.mxu0 0.0
  %2391 = vmatprep.subr.mxu0 0.0
  %2392 = vmatpush1.msra.mxu0 0.0
  %2393 = vmatprep.subr.mxu0 0.0
  %2394 = vmatpush1.msra.mxu0 0.0
  %2395 = vmatprep.subr.mxu0 0.0
  %2396 = vmatpush1.msra.mxu0 0.0
  %2397 = vmatprep.subr.mxu0 0.0
  %2398 = vmatpush1.msra.mxu0 0.0
  %2399 = vmatprep.subr.mxu0 0.0
  %2400 = vmatpush1.msra.mxu0 0.0
  %2401 = vmatprep.subr.mxu0 0.0
  %2402 = vmatpush1.msra.mxu0 0.0
  %2403 = vmatprep.subr.mxu0 0.0
  %2404 = vmatpush1.msra.mxu0 0.0
  %2405 = vmatprep.subr.mxu0 0.0
  %2406 = vmatpush1.msra.mxu0 0.0
  %2407 = vmatprep.subr.mxu0 0.0
  %2408 = vmatpush1.msra.mxu0 0.0
  %2409 = vmatprep.subr.mxu0 0.0
  %2410 = vmatpush1.msra.mxu0 0.0
  %2411 = vmatprep.subr.mxu0 0.0
  %2412 = vmatpush1.msra.mxu0 0.0
  %2413 = vmatprep.subr.mxu0 0.0
  %2414 = vmatpush1.msra.mxu0 0.0
  %2415 = vmatprep.subr.mxu0 0.0
  %2416 = vmatpush1.msra.mxu0 0.0
  %2417 = vmatprep.subr.mxu0 0.0
  %2418 = vmatpush1.msra.mxu0 0.0
  %2419 = vmatprep.subr.mxu0 0.0
  %2420 = vmatpush1.msra.mxu0 0.0
  %2421 = vmatprep.subr.mxu0 0.0
  %2422 = vmatpush1.msra.mxu0 0.0
  %2423 = vmatprep.subr.mxu0 0.0
  %2424 = vmatpush1.msra.mxu0 0.0
  %2425 = vmatprep.subr.mxu0 0.0
  %2426 = vmatpush1.msra.mxu0 0.0
  %2427 = vmatprep.subr.mxu0 0.0
  %2428 = vmatpush1.msra.mxu0 0.0
  %2429 = vmatprep.subr.mxu0 0.0
  %2430 = vmatpush1.msra.mxu0 0.0
  %2431 = vmatprep.subr.mxu0 0.0
  %2432 = vmatpush1.msra.mxu0 0.0
  %2433 = vmatprep.subr.mxu0 0.0
  %2434 = vmatpush1.msra.mxu0 0.0
  %2435 = vmatprep.subr.mxu0 0.0
  %2436 = vmatpush1.msra.mxu0 0.0
  %2437 = vmatprep.subr.mxu0 0.0
  %2438 = vmatpush1.msra.mxu0 0.0
  %2439 = vmatprep.subr.mxu0 0.0
  %2440 = vmatpush1.msra.mxu0 0.0
  %2441 = vmatprep.mubr.f32.mxu0 0.0
  %2442 = vmatmul.mubr.f32.gmra.mrb[0].mxu0 %v2361
  %v2443 = vpop.f32.mrb[0].mxu0
  %v2444 = vadd.f32 0.0, %v2443
  %v2445 = vpop.f32.mrb[0].mxu0
  %2446 = vmatprep.mubr.f32.mxu0 0.0
  %2447 = vmatmul.mubr.f32.gmra.mrb[0].mxu0 %v2363
  %v2448 = vpop.f32.mrb[0].mxu0
  %v2449 = vadd.f32 0.0, %v2448
  %v2450 = vpop.f32.mrb[0].mxu0
  %2451 = vmatprep.mubr.f32.mxu0 0.0
  %2452 = vmatmul.mubr.f32.gmra.mrb[0].mxu0 %v2365
  %v2453 = vpop.f32.mrb[0].mxu0
  %v2454 = vadd.f32 0.0, %v2453
  %v2455 = vpop.f32.mrb[0].mxu0
  %2456 = vmatprep.mubr.f32.mxu0 0.0
  %2457 = vmatmul.mubr.f32.gmra.mrb[0].mxu0 %v2367
  %v2458 = vpop.f32.mrb[0].mxu0
  %v2459 = vadd.f32 0.0, %v2458
  %v2460 = vpop.f32.mrb[0].mxu0
  %2461 = vmatprep.mubr.f32.mxu0 0.0
  %2462 = vmatmul.mubr.f32.gmra.mrb[0].mxu0 %v2369
  %v2463 = vpop.f32.mrb[0].mxu0
  %v2464 = vadd.f32 0.0, %v2463
  %v2465 = vpop.f32.mrb[0].mxu0
  %2466 = vmatprep.mubr.f32.mxu0 0.0
  %2467 = vmatmul.mubr.f32.gmra.mrb[0].mxu0 %v2371
  %v2468 = vpop.f32.mrb[0].mxu0
  %v2469 = vadd.f32 0.0, %v2468
  %v2470 = vpop.f32.mrb[0].mxu0
  %2471 = vmatprep.mubr.f32.mxu0 0.0
  %2472 = vmatmul.mubr.f32.gmra.mrb[0].mxu0 %v2373
  %v2473 = vpop.f32.mrb[0].mxu0
  %v2474 = vadd.f32 0.0, %v2473
  %v2475 = vpop.f32.mrb[0].mxu0
  %2476 = vmatprep.mubr.f32.mxu0 0.0
  %2477 = vmatmul.mubr.f32.gmra.mrb[0].mxu0 %v2375
  %v2478 = vpop.f32.mrb[0].mxu0
  %v2479 = vadd.f32 0.0, %v2478
  %v2480 = vpop.f32.mrb[0].mxu0
  %2481 = vdwg.mxu0
  %v2482 = vadd.f32 %v2329, %v2444
  %v2483 = vadd.f32 %v2330, %v2449
  %v2484 = vadd.f32 %v2331, %v2454
  %v2485 = vadd.f32 %v2332, %v2459
  %v2486 = vadd.f32 %v2333, %v2464
  %v2487 = vadd.f32 %v2334, %v2469
  %v2488 = vadd.f32 %v2335, %v2474
  %v2489 = vadd.f32 %v2336, %v2479
  %v2490 = vsub.f32 0.0, %v2482
  %v2491 = vsub.f32 0.0, %v2483
  %v2492 = vsub.f32 0.0, %v2484
  %v2493 = vsub.f32 0.0, %v2485
  %v2494 = vsub.f32 0.0, %v2486
  %v2495 = vsub.f32 0.0, %v2487
  %v2496 = vsub.f32 0.0, %v2488
  %v2497 = vsub.f32 0.0, %v2489
  %v2498 = vmul.f32 %v2490, 1.442695
  %v2499 = vpow.pop %v2498
  %v2500 = vmul.f32 %v2491, 1.442695
  %v2501 = vpow.pop %v2500
  %v2502 = vmul.f32 %v2492, 1.442695
  %v2503 = vpow.pop %v2502
  %v2504 = vmul.f32 %v2493, 1.442695
  %v2505 = vpow.pop %v2504
  %v2506 = vmul.f32 %v2494, 1.442695
  %v2507 = vpow.pop %v2506
  %v2508 = vmul.f32 %v2495, 1.442695
  %v2509 = vpow.pop %v2508
  %v2510 = vmul.f32 %v2496, 1.442695
  %v2511 = vpow.pop %v2510
  %v2512 = vmul.f32 %v2497, 1.442695
  %v2513 = vpow.pop %v2512
  %v2514 = vadd.f32 %v2499, 1.0
  %v2515 = vadd.f32 %v2501, 1.0
  %v2516 = vadd.f32 %v2503, 1.0
  %v2517 = vadd.f32 %v2505, 1.0
  %v2518 = vadd.f32 %v2507, 1.0
  %v2519 = vadd.f32 %v2509, 1.0
  %v2520 = vadd.f32 %v2511, 1.0
  %v2521 = vadd.f32 %v2513, 1.0
  %v2522 = vrcp.pop %v2514
  %v2523 = vrcp.pop %v2515
  %v2524 = vrcp.pop %v2516
  %v2525 = vrcp.pop %v2517
  %v2526 = vrcp.pop %v2518
  %v2527 = vrcp.pop %v2519
  %v2528 = vrcp.pop %v2520
  %v2529 = vrcp.pop %v2521
  %v2530 = vtanh.pop %v2482
  %v2531 = vtanh.pop %v2483
  %v2532 = vtanh.pop %v2484
  %v2533 = vtanh.pop %v2485
  %v2534 = vtanh.pop %v2486
  %v2535 = vtanh.pop %v2487
  %v2536 = vtanh.pop %v2488
  %v2537 = vtanh.pop %v2489
  %v2538 = vmul.f32 %v2522, %v2216
  %v2539 = vmul.f32 %v2523, %v2217
  %v2540 = vmul.f32 %v2524, %v2218
  %v2541 = vmul.f32 %v2525, %v2219
  %v2542 = vmul.f32 %v2526, %v2220
  %v2543 = vmul.f32 %v2527, %v2221
  %v2544 = vmul.f32 %v2528, %v2222
  %v2545 = vmul.f32 %v2529, %v2223
  %2554 = vrot.lane.b32.xlu0 %v2530, 64
  %v2555 = vpop.permute.xlu0 %2554
  %2556 = vrot.lane.b32.xlu0 %v2531, 64
  %v2557 = vpop.permute.xlu0 %2556
  %2558 = vrot.lane.b32.xlu0 %v2532, 64
  %v2559 = vpop.permute.xlu0 %2558
  %2560 = vrot.lane.b32.xlu0 %v2533, 64
  %v2561 = vpop.permute.xlu0 %2560
  %2562 = vrot.lane.b32.xlu0 %v2534, 64
  %v2563 = vpop.permute.xlu0 %2562
  %2564 = vrot.lane.b32.xlu0 %v2535, 64
  %v2565 = vpop.permute.xlu0 %2564
  %2566 = vrot.lane.b32.xlu0 %v2536, 64
  %v2567 = vpop.permute.xlu0 %2566
  %2568 = vrot.lane.b32.xlu0 %v2537, 64
  %v2569 = vpop.permute.xlu0 %2568
  %v2578 = vmul.f32 %v2522, %v2555
  %v2579 = vmul.f32 %v2523, %v2557
  %v2580 = vmul.f32 %v2524, %v2559
  %v2581 = vmul.f32 %v2525, %v2561
  %v2582 = vmul.f32 %v2526, %v2563
  %v2583 = vmul.f32 %v2527, %v2565
  %v2584 = vmul.f32 %v2528, %v2567
  %v2585 = vmul.f32 %v2529, %v2569
  %2594 = vrot.lane.b32.xlu0 %v2578, 32
  %v2595 = vpop.permute.xlu0 %2594
  %2596 = vrot.lane.b32.xlu0 %v2579, 32
  %v2597 = vpop.permute.xlu0 %2596
  %2598 = vrot.lane.b32.xlu0 %v2580, 32
  %v2599 = vpop.permute.xlu0 %2598
  %2600 = vrot.lane.b32.xlu0 %v2581, 32
  %v2601 = vpop.permute.xlu0 %2600
  %2602 = vrot.lane.b32.xlu0 %v2582, 32
  %v2603 = vpop.permute.xlu0 %2602
  %2604 = vrot.lane.b32.xlu0 %v2583, 32
  %v2605 = vpop.permute.xlu0 %2604
  %2606 = vrot.lane.b32.xlu0 %v2584, 32
  %v2607 = vpop.permute.xlu0 %2606
  %2608 = vrot.lane.b32.xlu0 %v2585, 32
  %v2609 = vpop.permute.xlu0 %2608
  %v2618 = vadd.f32 %v2538, %v2595
  %v2619 = vadd.f32 %v2539, %v2597
  %v2620 = vadd.f32 %v2540, %v2599
  %v2621 = vadd.f32 %v2541, %v2601
  %v2622 = vadd.f32 %v2542, %v2603
  %v2623 = vadd.f32 %v2543, %v2605
  %v2624 = vadd.f32 %v2544, %v2607
  %v2625 = vadd.f32 %v2545, %v2609
  %v2626 = vtanh.pop %v2618
  %v2627 = vtanh.pop %v2619
  %v2628 = vtanh.pop %v2620
  %v2629 = vtanh.pop %v2621
  %v2630 = vtanh.pop %v2622
  %v2631 = vtanh.pop %v2623
  %v2632 = vtanh.pop %v2624
  %v2633 = vtanh.pop %v2625
  %2642 = vrot.lane.b32.xlu0 %v2626, 64
  %v2643 = vpop.permute.xlu0 %2642
  %2644 = vrot.lane.b32.xlu0 %v2627, 64
  %v2645 = vpop.permute.xlu0 %2644
  %2646 = vrot.lane.b32.xlu0 %v2628, 64
  %v2647 = vpop.permute.xlu0 %2646
  %2648 = vrot.lane.b32.xlu0 %v2629, 64
  %v2649 = vpop.permute.xlu0 %2648
  %2650 = vrot.lane.b32.xlu0 %v2630, 64
  %v2651 = vpop.permute.xlu0 %2650
  %2652 = vrot.lane.b32.xlu0 %v2631, 64
  %v2653 = vpop.permute.xlu0 %2652
  %2654 = vrot.lane.b32.xlu0 %v2632, 64
  %v2655 = vpop.permute.xlu0 %2654
  %2656 = vrot.lane.b32.xlu0 %v2633, 64
  %v2657 = vpop.permute.xlu0 %2656
  %v2666 = vmul.f32 %v2522, %v2643
  %v2667 = vmul.f32 %v2523, %v2645
  %v2668 = vmul.f32 %v2524, %v2647
  %v2669 = vmul.f32 %v2525, %v2649
  %v2670 = vmul.f32 %v2526, %v2651
  %v2671 = vmul.f32 %v2527, %v2653
  %v2672 = vmul.f32 %v2528, %v2655
  %v2673 = vmul.f32 %v2529, %v2657
  %vm2674 = vcmp.eq.s32.totalorder %v1147, 3
  %vm2675 = vcmp.eq.s32.totalorder %v1148, 3
  %vm2676 = vcmp.eq.s32.totalorder %v1149, 3
  %vm2677 = vcmp.eq.s32.totalorder %v1150, 3
  %vm2678 = vcmp.eq.s32.totalorder %v1151, 3
  %vm2679 = vcmp.eq.s32.totalorder %v1152, 3
  %vm2680 = vcmp.eq.s32.totalorder %v1153, 3
  %vm2681 = vcmp.eq.s32.totalorder %v1154, 3
  %v2682 = vsel %vm2674, 1, 0
  %v2683 = vsel %vm2675, 1, 0
  %v2684 = vsel %vm2676, 1, 0
  %v2685 = vsel %vm2677, 1, 0
  %v2686 = vsel %vm2678, 1, 0
  %v2687 = vsel %vm2679, 1, 0
  %v2688 = vsel %vm2680, 1, 0
  %v2689 = vsel %vm2681, 1, 0
  %2690 = vset.pattern.permute.xlu0 0
  %2691 = vperm.xlu0 %2690, %v2682
  %v2692 = vpop.permute.xlu0 %2691
  %2693 = vset.pattern.permute.xlu0 0
  %2694 = vperm.xlu0 %2693, %v2683
  %v2695 = vpop.permute.xlu0 %2694
  %2696 = vset.pattern.permute.xlu0 0
  %2697 = vperm.xlu0 %2696, %v2684
  %v2698 = vpop.permute.xlu0 %2697
  %2699 = vset.pattern.permute.xlu0 0
  %2700 = vperm.xlu0 %2699, %v2685
  %v2701 = vpop.permute.xlu0 %2700
  %2702 = vset.pattern.permute.xlu0 0
  %2703 = vperm.xlu0 %2702, %v2686
  %v2704 = vpop.permute.xlu0 %2703
  %2705 = vset.pattern.permute.xlu0 0
  %2706 = vperm.xlu0 %2705, %v2687
  %v2707 = vpop.permute.xlu0 %2706
  %2708 = vset.pattern.permute.xlu0 0
  %2709 = vperm.xlu0 %2708, %v2688
  %v2710 = vpop.permute.xlu0 %2709
  %2711 = vset.pattern.permute.xlu0 0
  %2712 = vperm.xlu0 %2711, %v2689
  %v2713 = vpop.permute.xlu0 %2712
  %vm2714 = vcmp.eq.s32.totalorder %v2692, 1
  %vm2715 = vcmp.eq.s32.totalorder %v2695, 1
  %vm2716 = vcmp.eq.s32.totalorder %v2698, 1
  %vm2717 = vcmp.eq.s32.totalorder %v2701, 1
  %vm2718 = vcmp.eq.s32.totalorder %v2704, 1
  %vm2719 = vcmp.eq.s32.totalorder %v2707, 1
  %vm2720 = vcmp.eq.s32.totalorder %v2710, 1
  %vm2721 = vcmp.eq.s32.totalorder %v2713, 1
  %v2722 = vsel %vm2714, %v2666, %v2320
  %v2723 = vsel %vm2715, %v2667, %v2321
  %v2724 = vsel %vm2716, %v2668, %v2322
  %v2725 = vsel %vm2717, %v2669, %v2323
  %v2726 = vsel %vm2718, %v2670, %v2324
  %v2727 = vsel %vm2719, %v2671, %v2325
  %v2728 = vsel %vm2720, %v2672, %v2326
  %v2729 = vsel %vm2721, %v2673, %v2327
  %s2730 = scalar_lea.vmem [#allocation2], 256
  %v2731 = vld [vmem:[%s2730] sm:$0xff]
  %v2732 = vld [vmem:[%s2730 + $0x8] sm:$0xff]
  %v2733 = vld [vmem:[%s2730 + $0x10] sm:$0xff]
  %v2734 = vld [vmem:[%s2730 + $0x18] sm:$0xff]
  %v2735 = vld [vmem:[%s2730 + $0x20] sm:$0xff]
  %v2736 = vld [vmem:[%s2730 + $0x28] sm:$0xff]
  %v2737 = vld [vmem:[%s2730 + $0x30] sm:$0xff]
  %v2738 = vld [vmem:[%s2730 + $0x38] sm:$0xff]
  %2747 = vrot.lane.b32.xlu0 %v2666, 32
  %v2748 = vpop.permute.xlu0 %2747
  %2749 = vrot.lane.b32.xlu0 %v2667, 32
  %v2750 = vpop.permute.xlu0 %2749
  %2751 = vrot.lane.b32.xlu0 %v2668, 32
  %v2752 = vpop.permute.xlu0 %2751
  %2753 = vrot.lane.b32.xlu0 %v2669, 32
  %v2754 = vpop.permute.xlu0 %2753
  %2755 = vrot.lane.b32.xlu0 %v2670, 32
  %v2756 = vpop.permute.xlu0 %2755
  %2757 = vrot.lane.b32.xlu0 %v2671, 32
  %v2758 = vpop.permute.xlu0 %2757
  %2759 = vrot.lane.b32.xlu0 %v2672, 32
  %v2760 = vpop.permute.xlu0 %2759
  %2761 = vrot.lane.b32.xlu0 %v2673, 32
  %v2762 = vpop.permute.xlu0 %2761
  %v2763 = vsel %vm1167, %v2748, 0
  %v2765 = vsel %vm1167, %v2750, 0
  %v2767 = vsel %vm1167, %v2752, 0
  %v2769 = vsel %vm1167, %v2754, 0
  %v2771 = vsel %vm1167, %v2756, 0
  %v2773 = vsel %vm1167, %v2758, 0
  %v2775 = vsel %vm1167, %v2760, 0
  %v2777 = vsel %vm1167, %v2762, 0
  %2779 = vmatprep.subr.mxu0 0.0
  %2780 = vmatpush1.msra.mxu0 %v1155
  %2781 = vmatprep.subr.mxu0 0.0
  %2782 = vmatpush1.msra.mxu0 %v1156
  %2783 = vmatprep.subr.mxu0 0.0
  %2784 = vmatpush1.msra.mxu0 %v1157
  %2785 = vmatprep.subr.mxu0 0.0
  %2786 = vmatpush1.msra.mxu0 %v1158
  %2787 = vmatprep.subr.mxu0 0.0
  %2788 = vmatpush1.msra.mxu0 0.0
  %2789 = vmatprep.subr.mxu0 0.0
  %2790 = vmatpush1.msra.mxu0 0.0
  %2791 = vmatprep.subr.mxu0 0.0
  %2792 = vmatpush1.msra.mxu0 0.0
  %2793 = vmatprep.subr.mxu0 0.0
  %2794 = vmatpush1.msra.mxu0 0.0
  %2795 = vmatprep.subr.mxu0 0.0
  %2796 = vmatpush1.msra.mxu0 0.0
  %2797 = vmatprep.subr.mxu0 0.0
  %2798 = vmatpush1.msra.mxu0 0.0
  %2799 = vmatprep.subr.mxu0 0.0
  %2800 = vmatpush1.msra.mxu0 0.0
  %2801 = vmatprep.subr.mxu0 0.0
  %2802 = vmatpush1.msra.mxu0 0.0
  %2803 = vmatprep.subr.mxu0 0.0
  %2804 = vmatpush1.msra.mxu0 0.0
  %2805 = vmatprep.subr.mxu0 0.0
  %2806 = vmatpush1.msra.mxu0 0.0
  %2807 = vmatprep.subr.mxu0 0.0
  %2808 = vmatpush1.msra.mxu0 0.0
  %2809 = vmatprep.subr.mxu0 0.0
  %2810 = vmatpush1.msra.mxu0 0.0
  %2811 = vmatprep.subr.mxu0 0.0
  %2812 = vmatpush1.msra.mxu0 0.0
  %2813 = vmatprep.subr.mxu0 0.0
  %2814 = vmatpush1.msra.mxu0 0.0
  %2815 = vmatprep.subr.mxu0 0.0
  %2816 = vmatpush1.msra.mxu0 0.0
  %2817 = vmatprep.subr.mxu0 0.0
  %2818 = vmatpush1.msra.mxu0 0.0
  %2819 = vmatprep.subr.mxu0 0.0
  %2820 = vmatpush1.msra.mxu0 0.0
  %2821 = vmatprep.subr.mxu0 0.0
  %2822 = vmatpush1.msra.mxu0 0.0
  %2823 = vmatprep.subr.mxu0 0.0
  %2824 = vmatpush1.msra.mxu0 0.0
  %2825 = vmatprep.subr.mxu0 0.0
  %2826 = vmatpush1.msra.mxu0 0.0
  %2827 = vmatprep.subr.mxu0 0.0
  %2828 = vmatpush1.msra.mxu0 0.0
  %2829 = vmatprep.subr.mxu0 0.0
  %2830 = vmatpush1.msra.mxu0 0.0
  %2831 = vmatprep.subr.mxu0 0.0
  %2832 = vmatpush1.msra.mxu0 0.0
  %2833 = vmatprep.subr.mxu0 0.0
  %2834 = vmatpush1.msra.mxu0 0.0
  %2835 = vmatprep.subr.mxu0 0.0
  %2836 = vmatpush1.msra.mxu0 0.0
  %2837 = vmatprep.subr.mxu0 0.0
  %2838 = vmatpush1.msra.mxu0 0.0
  %2839 = vmatprep.subr.mxu0 0.0
  %2840 = vmatpush1.msra.mxu0 0.0
  %2841 = vmatprep.subr.mxu0 0.0
  %2842 = vmatpush1.msra.mxu0 0.0
  %2843 = vmatprep.mubr.f32.mxu0 0.0
  %2844 = vmatmul.mubr.f32.gmra.mrb[0].mxu0 %v2763
  %v2845 = vpop.f32.mrb[0].mxu0
  %v2846 = vadd.f32 0.0, %v2845
  %v2847 = vpop.f32.mrb[0].mxu0
  %2848 = vmatprep.mubr.f32.mxu0 0.0
  %2849 = vmatmul.mubr.f32.gmra.mrb[0].mxu0 %v2765
  %v2850 = vpop.f32.mrb[0].mxu0
  %v2851 = vadd.f32 0.0, %v2850
  %v2852 = vpop.f32.mrb[0].mxu0
  %2853 = vmatprep.mubr.f32.mxu0 0.0
  %2854 = vmatmul.mubr.f32.gmra.mrb[0].mxu0 %v2767
  %v2855 = vpop.f32.mrb[0].mxu0
  %v2856 = vadd.f32 0.0, %v2855
  %v2857 = vpop.f32.mrb[0].mxu0
  %2858 = vmatprep.mubr.f32.mxu0 0.0
  %2859 = vmatmul.mubr.f32.gmra.mrb[0].mxu0 %v2769
  %v2860 = vpop.f32.mrb[0].mxu0
  %v2861 = vadd.f32 0.0, %v2860
  %v2862 = vpop.f32.mrb[0].mxu0
  %2863 = vmatprep.mubr.f32.mxu0 0.0
  %2864 = vmatmul.mubr.f32.gmra.mrb[0].mxu0 %v2771
  %v2865 = vpop.f32.mrb[0].mxu0
  %v2866 = vadd.f32 0.0, %v2865
  %v2867 = vpop.f32.mrb[0].mxu0
  %2868 = vmatprep.mubr.f32.mxu0 0.0
  %2869 = vmatmul.mubr.f32.gmra.mrb[0].mxu0 %v2773
  %v2870 = vpop.f32.mrb[0].mxu0
  %v2871 = vadd.f32 0.0, %v2870
  %v2872 = vpop.f32.mrb[0].mxu0
  %2873 = vmatprep.mubr.f32.mxu0 0.0
  %2874 = vmatmul.mubr.f32.gmra.mrb[0].mxu0 %v2775
  %v2875 = vpop.f32.mrb[0].mxu0
  %v2876 = vadd.f32 0.0, %v2875
  %v2877 = vpop.f32.mrb[0].mxu0
  %2878 = vmatprep.mubr.f32.mxu0 0.0
  %2879 = vmatmul.mubr.f32.gmra.mrb[0].mxu0 %v2777
  %v2880 = vpop.f32.mrb[0].mxu0
  %v2881 = vadd.f32 0.0, %v2880
  %v2882 = vpop.f32.mrb[0].mxu0
  %2883 = vdwg.mxu0
  %v2884 = vadd.f32 %v2731, %v2846
  %v2885 = vadd.f32 %v2732, %v2851
  %v2886 = vadd.f32 %v2733, %v2856
  %v2887 = vadd.f32 %v2734, %v2861
  %v2888 = vadd.f32 %v2735, %v2866
  %v2889 = vadd.f32 %v2736, %v2871
  %v2890 = vadd.f32 %v2737, %v2876
  %v2891 = vadd.f32 %v2738, %v2881
  %v2892 = vsub.f32 0.0, %v2884
  %v2893 = vsub.f32 0.0, %v2885
  %v2894 = vsub.f32 0.0, %v2886
  %v2895 = vsub.f32 0.0, %v2887
  %v2896 = vsub.f32 0.0, %v2888
  %v2897 = vsub.f32 0.0, %v2889
  %v2898 = vsub.f32 0.0, %v2890
  %v2899 = vsub.f32 0.0, %v2891
  %v2900 = vmul.f32 %v2892, 1.442695
  %v2901 = vpow.pop %v2900
  %v2902 = vmul.f32 %v2893, 1.442695
  %v2903 = vpow.pop %v2902
  %v2904 = vmul.f32 %v2894, 1.442695
  %v2905 = vpow.pop %v2904
  %v2906 = vmul.f32 %v2895, 1.442695
  %v2907 = vpow.pop %v2906
  %v2908 = vmul.f32 %v2896, 1.442695
  %v2909 = vpow.pop %v2908
  %v2910 = vmul.f32 %v2897, 1.442695
  %v2911 = vpow.pop %v2910
  %v2912 = vmul.f32 %v2898, 1.442695
  %v2913 = vpow.pop %v2912
  %v2914 = vmul.f32 %v2899, 1.442695
  %v2915 = vpow.pop %v2914
  %v2916 = vadd.f32 %v2901, 1.0
  %v2917 = vadd.f32 %v2903, 1.0
  %v2918 = vadd.f32 %v2905, 1.0
  %v2919 = vadd.f32 %v2907, 1.0
  %v2920 = vadd.f32 %v2909, 1.0
  %v2921 = vadd.f32 %v2911, 1.0
  %v2922 = vadd.f32 %v2913, 1.0
  %v2923 = vadd.f32 %v2915, 1.0
  %v2924 = vrcp.pop %v2916
  %v2925 = vrcp.pop %v2917
  %v2926 = vrcp.pop %v2918
  %v2927 = vrcp.pop %v2919
  %v2928 = vrcp.pop %v2920
  %v2929 = vrcp.pop %v2921
  %v2930 = vrcp.pop %v2922
  %v2931 = vrcp.pop %v2923
  %v2932 = vtanh.pop %v2884
  %v2933 = vtanh.pop %v2885
  %v2934 = vtanh.pop %v2886
  %v2935 = vtanh.pop %v2887
  %v2936 = vtanh.pop %v2888
  %v2937 = vtanh.pop %v2889
  %v2938 = vtanh.pop %v2890
  %v2939 = vtanh.pop %v2891
  %v2940 = vmul.f32 %v2924, %v2618
  %v2941 = vmul.f32 %v2925, %v2619
  %v2942 = vmul.f32 %v2926, %v2620
  %v2943 = vmul.f32 %v2927, %v2621
  %v2944 = vmul.f32 %v2928, %v2622
  %v2945 = vmul.f32 %v2929, %v2623
  %v2946 = vmul.f32 %v2930, %v2624
  %v2947 = vmul.f32 %v2931, %v2625
  %2956 = vrot.lane.b32.xlu0 %v2932, 64
  %v2957 = vpop.permute.xlu0 %2956
  %2958 = vrot.lane.b32.xlu0 %v2933, 64
  %v2959 = vpop.permute.xlu0 %2958
  %2960 = vrot.lane.b32.xlu0 %v2934, 64
  %v2961 = vpop.permute.xlu0 %2960
  %2962 = vrot.lane.b32.xlu0 %v2935, 64
  %v2963 = vpop.permute.xlu0 %2962
  %2964 = vrot.lane.b32.xlu0 %v2936, 64
  %v2965 = vpop.permute.xlu0 %2964
  %2966 = vrot.lane.b32.xlu0 %v2937, 64
  %v2967 = vpop.permute.xlu0 %2966
  %2968 = vrot.lane.b32.xlu0 %v2938, 64
  %v2969 = vpop.permute.xlu0 %2968
  %2970 = vrot.lane.b32.xlu0 %v2939, 64
  %v2971 = vpop.permute.xlu0 %2970
  %v2980 = vmul.f32 %v2924, %v2957
  %v2981 = vmul.f32 %v2925, %v2959
  %v2982 = vmul.f32 %v2926, %v2961
  %v2983 = vmul.f32 %v2927, %v2963
  %v2984 = vmul.f32 %v2928, %v2965
  %v2985 = vmul.f32 %v2929, %v2967
  %v2986 = vmul.f32 %v2930, %v2969
  %v2987 = vmul.f32 %v2931, %v2971
  %2996 = vrot.lane.b32.xlu0 %v2980, 32
  %v2997 = vpop.permute.xlu0 %2996
  %2998 = vrot.lane.b32.xlu0 %v2981, 32
  %v2999 = vpop.permute.xlu0 %2998
  %3000 = vrot.lane.b32.xlu0 %v2982, 32
  %v3001 = vpop.permute.xlu0 %3000
  %3002 = vrot.lane.b32.xlu0 %v2983, 32
  %v3003 = vpop.permute.xlu0 %3002
  %3004 = vrot.lane.b32.xlu0 %v2984, 32
  %v3005 = vpop.permute.xlu0 %3004
  %3006 = vrot.lane.b32.xlu0 %v2985, 32
  %v3007 = vpop.permute.xlu0 %3006
  %3008 = vrot.lane.b32.xlu0 %v2986, 32
  %v3009 = vpop.permute.xlu0 %3008
  %3010 = vrot.lane.b32.xlu0 %v2987, 32
  %v3011 = vpop.permute.xlu0 %3010
  %v3020 = vadd.f32 %v2940, %v2997
  %v3021 = vadd.f32 %v2941, %v2999
  %v3022 = vadd.f32 %v2942, %v3001
  %v3023 = vadd.f32 %v2943, %v3003
  %v3024 = vadd.f32 %v2944, %v3005
  %v3025 = vadd.f32 %v2945, %v3007
  %v3026 = vadd.f32 %v2946, %v3009
  %v3027 = vadd.f32 %v2947, %v3011
  %v3028 = vtanh.pop %v3020
  %v3029 = vtanh.pop %v3021
  %v3030 = vtanh.pop %v3022
  %v3031 = vtanh.pop %v3023
  %v3032 = vtanh.pop %v3024
  %v3033 = vtanh.pop %v3025
  %v3034 = vtanh.pop %v3026
  %v3035 = vtanh.pop %v3027
  %3044 = vrot.lane.b32.xlu0 %v3028, 64
  %v3045 = vpop.permute.xlu0 %3044
  %3046 = vrot.lane.b32.xlu0 %v3029, 64
  %v3047 = vpop.permute.xlu0 %3046
  %3048 = vrot.lane.b32.xlu0 %v3030, 64
  %v3049 = vpop.permute.xlu0 %3048
  %3050 = vrot.lane.b32.xlu0 %v3031, 64
  %v3051 = vpop.permute.xlu0 %3050
  %3052 = vrot.lane.b32.xlu0 %v3032, 64
  %v3053 = vpop.permute.xlu0 %3052
  %3054 = vrot.lane.b32.xlu0 %v3033, 64
  %v3055 = vpop.permute.xlu0 %3054
  %3056 = vrot.lane.b32.xlu0 %v3034, 64
  %v3057 = vpop.permute.xlu0 %3056
  %3058 = vrot.lane.b32.xlu0 %v3035, 64
  %v3059 = vpop.permute.xlu0 %3058
  %v3068 = vmul.f32 %v2924, %v3045
  %v3069 = vmul.f32 %v2925, %v3047
  %v3070 = vmul.f32 %v2926, %v3049
  %v3071 = vmul.f32 %v2927, %v3051
  %v3072 = vmul.f32 %v2928, %v3053
  %v3073 = vmul.f32 %v2929, %v3055
  %v3074 = vmul.f32 %v2930, %v3057
  %v3075 = vmul.f32 %v2931, %v3059
  %vm3076 = vcmp.eq.s32.totalorder %v1147, 4
  %vm3077 = vcmp.eq.s32.totalorder %v1148, 4
  %vm3078 = vcmp.eq.s32.totalorder %v1149, 4
  %vm3079 = vcmp.eq.s32.totalorder %v1150, 4
  %vm3080 = vcmp.eq.s32.totalorder %v1151, 4
  %vm3081 = vcmp.eq.s32.totalorder %v1152, 4
  %vm3082 = vcmp.eq.s32.totalorder %v1153, 4
  %vm3083 = vcmp.eq.s32.totalorder %v1154, 4
  %v3084 = vsel %vm3076, 1, 0
  %v3085 = vsel %vm3077, 1, 0
  %v3086 = vsel %vm3078, 1, 0
  %v3087 = vsel %vm3079, 1, 0
  %v3088 = vsel %vm3080, 1, 0
  %v3089 = vsel %vm3081, 1, 0
  %v3090 = vsel %vm3082, 1, 0
  %v3091 = vsel %vm3083, 1, 0
  %3092 = vset.pattern.permute.xlu0 0
  %3093 = vperm.xlu0 %3092, %v3084
  %v3094 = vpop.permute.xlu0 %3093
  %3095 = vset.pattern.permute.xlu0 0
  %3096 = vperm.xlu0 %3095, %v3085
  %v3097 = vpop.permute.xlu0 %3096
  %3098 = vset.pattern.permute.xlu0 0
  %3099 = vperm.xlu0 %3098, %v3086
  %v3100 = vpop.permute.xlu0 %3099
  %3101 = vset.pattern.permute.xlu0 0
  %3102 = vperm.xlu0 %3101, %v3087
  %v3103 = vpop.permute.xlu0 %3102
  %3104 = vset.pattern.permute.xlu0 0
  %3105 = vperm.xlu0 %3104, %v3088
  %v3106 = vpop.permute.xlu0 %3105
  %3107 = vset.pattern.permute.xlu0 0
  %3108 = vperm.xlu0 %3107, %v3089
  %v3109 = vpop.permute.xlu0 %3108
  %3110 = vset.pattern.permute.xlu0 0
  %3111 = vperm.xlu0 %3110, %v3090
  %v3112 = vpop.permute.xlu0 %3111
  %3113 = vset.pattern.permute.xlu0 0
  %3114 = vperm.xlu0 %3113, %v3091
  %v3115 = vpop.permute.xlu0 %3114
  %vm3116 = vcmp.eq.s32.totalorder %v3094, 1
  %vm3117 = vcmp.eq.s32.totalorder %v3097, 1
  %vm3118 = vcmp.eq.s32.totalorder %v3100, 1
  %vm3119 = vcmp.eq.s32.totalorder %v3103, 1
  %vm3120 = vcmp.eq.s32.totalorder %v3106, 1
  %vm3121 = vcmp.eq.s32.totalorder %v3109, 1
  %vm3122 = vcmp.eq.s32.totalorder %v3112, 1
  %vm3123 = vcmp.eq.s32.totalorder %v3115, 1
  %v3124 = vsel %vm3116, %v3068, %v2722
  %v3125 = vsel %vm3117, %v3069, %v2723
  %v3126 = vsel %vm3118, %v3070, %v2724
  %v3127 = vsel %vm3119, %v3071, %v2725
  %v3128 = vsel %vm3120, %v3072, %v2726
  %v3129 = vsel %vm3121, %v3073, %v2727
  %v3130 = vsel %vm3122, %v3074, %v2728
  %v3131 = vsel %vm3123, %v3075, %v2729
  %s3132 = scalar_lea.vmem [#allocation2], 320
  %v3133 = vld [vmem:[%s3132] sm:$0xff]
  %v3134 = vld [vmem:[%s3132 + $0x8] sm:$0xff]
  %v3135 = vld [vmem:[%s3132 + $0x10] sm:$0xff]
  %v3136 = vld [vmem:[%s3132 + $0x18] sm:$0xff]
  %v3137 = vld [vmem:[%s3132 + $0x20] sm:$0xff]
  %v3138 = vld [vmem:[%s3132 + $0x28] sm:$0xff]
  %v3139 = vld [vmem:[%s3132 + $0x30] sm:$0xff]
  %v3140 = vld [vmem:[%s3132 + $0x38] sm:$0xff]
  %3149 = vrot.lane.b32.xlu0 %v3068, 32
  %v3150 = vpop.permute.xlu0 %3149
  %3151 = vrot.lane.b32.xlu0 %v3069, 32
  %v3152 = vpop.permute.xlu0 %3151
  %3153 = vrot.lane.b32.xlu0 %v3070, 32
  %v3154 = vpop.permute.xlu0 %3153
  %3155 = vrot.lane.b32.xlu0 %v3071, 32
  %v3156 = vpop.permute.xlu0 %3155
  %3157 = vrot.lane.b32.xlu0 %v3072, 32
  %v3158 = vpop.permute.xlu0 %3157
  %3159 = vrot.lane.b32.xlu0 %v3073, 32
  %v3160 = vpop.permute.xlu0 %3159
  %3161 = vrot.lane.b32.xlu0 %v3074, 32
  %v3162 = vpop.permute.xlu0 %3161
  %3163 = vrot.lane.b32.xlu0 %v3075, 32
  %v3164 = vpop.permute.xlu0 %3163
  %v3165 = vsel %vm1167, %v3150, 0
  %v3167 = vsel %vm1167, %v3152, 0
  %v3169 = vsel %vm1167, %v3154, 0
  %v3171 = vsel %vm1167, %v3156, 0
  %v3173 = vsel %vm1167, %v3158, 0
  %v3175 = vsel %vm1167, %v3160, 0
  %v3177 = vsel %vm1167, %v3162, 0
  %v3179 = vsel %vm1167, %v3164, 0
  %3181 = vmatprep.subr.mxu0 0.0
  %3182 = vmatpush1.msra.mxu0 %v1155
  %3183 = vmatprep.subr.mxu0 0.0
  %3184 = vmatpush1.msra.mxu0 %v1156
  %3185 = vmatprep.subr.mxu0 0.0
  %3186 = vmatpush1.msra.mxu0 %v1157
  %3187 = vmatprep.subr.mxu0 0.0
  %3188 = vmatpush1.msra.mxu0 %v1158
  %3189 = vmatprep.subr.mxu0 0.0
  %3190 = vmatpush1.msra.mxu0 0.0
  %3191 = vmatprep.subr.mxu0 0.0
  %3192 = vmatpush1.msra.mxu0 0.0
  %3193 = vmatprep.subr.mxu0 0.0
  %3194 = vmatpush1.msra.mxu0 0.0
  %3195 = vmatprep.subr.mxu0 0.0
  %3196 = vmatpush1.msra.mxu0 0.0
  %3197 = vmatprep.subr.mxu0 0.0
  %3198 = vmatpush1.msra.mxu0 0.0
  %3199 = vmatprep.subr.mxu0 0.0
  %3200 = vmatpush1.msra.mxu0 0.0
  %3201 = vmatprep.subr.mxu0 0.0
  %3202 = vmatpush1.msra.mxu0 0.0
  %3203 = vmatprep.subr.mxu0 0.0
  %3204 = vmatpush1.msra.mxu0 0.0
  %3205 = vmatprep.subr.mxu0 0.0
  %3206 = vmatpush1.msra.mxu0 0.0
  %3207 = vmatprep.subr.mxu0 0.0
  %3208 = vmatpush1.msra.mxu0 0.0
  %3209 = vmatprep.subr.mxu0 0.0
  %3210 = vmatpush1.msra.mxu0 0.0
  %3211 = vmatprep.subr.mxu0 0.0
  %3212 = vmatpush1.msra.mxu0 0.0
  %3213 = vmatprep.subr.mxu0 0.0
  %3214 = vmatpush1.msra.mxu0 0.0
  %3215 = vmatprep.subr.mxu0 0.0
  %3216 = vmatpush1.msra.mxu0 0.0
  %3217 = vmatprep.subr.mxu0 0.0
  %3218 = vmatpush1.msra.mxu0 0.0
  %3219 = vmatprep.subr.mxu0 0.0
  %3220 = vmatpush1.msra.mxu0 0.0
  %3221 = vmatprep.subr.mxu0 0.0
  %3222 = vmatpush1.msra.mxu0 0.0
  %3223 = vmatprep.subr.mxu0 0.0
  %3224 = vmatpush1.msra.mxu0 0.0
  %3225 = vmatprep.subr.mxu0 0.0
  %3226 = vmatpush1.msra.mxu0 0.0
  %3227 = vmatprep.subr.mxu0 0.0
  %3228 = vmatpush1.msra.mxu0 0.0
  %3229 = vmatprep.subr.mxu0 0.0
  %3230 = vmatpush1.msra.mxu0 0.0
  %3231 = vmatprep.subr.mxu0 0.0
  %3232 = vmatpush1.msra.mxu0 0.0
  %3233 = vmatprep.subr.mxu0 0.0
  %3234 = vmatpush1.msra.mxu0 0.0
  %3235 = vmatprep.subr.mxu0 0.0
  %3236 = vmatpush1.msra.mxu0 0.0
  %3237 = vmatprep.subr.mxu0 0.0
  %3238 = vmatpush1.msra.mxu0 0.0
  %3239 = vmatprep.subr.mxu0 0.0
  %3240 = vmatpush1.msra.mxu0 0.0
  %3241 = vmatprep.subr.mxu0 0.0
  %3242 = vmatpush1.msra.mxu0 0.0
  %3243 = vmatprep.subr.mxu0 0.0
  %3244 = vmatpush1.msra.mxu0 0.0
  %3245 = vmatprep.mubr.f32.mxu0 0.0
  %3246 = vmatmul.mubr.f32.gmra.mrb[0].mxu0 %v3165
  %v3247 = vpop.f32.mrb[0].mxu0
  %v3248 = vadd.f32 0.0, %v3247
  %v3249 = vpop.f32.mrb[0].mxu0
  %3250 = vmatprep.mubr.f32.mxu0 0.0
  %3251 = vmatmul.mubr.f32.gmra.mrb[0].mxu0 %v3167
  %v3252 = vpop.f32.mrb[0].mxu0
  %v3253 = vadd.f32 0.0, %v3252
  %v3254 = vpop.f32.mrb[0].mxu0
  %3255 = vmatprep.mubr.f32.mxu0 0.0
  %3256 = vmatmul.mubr.f32.gmra.mrb[0].mxu0 %v3169
  %v3257 = vpop.f32.mrb[0].mxu0
  %v3258 = vadd.f32 0.0, %v3257
  %v3259 = vpop.f32.mrb[0].mxu0
  %3260 = vmatprep.mubr.f32.mxu0 0.0
  %3261 = vmatmul.mubr.f32.gmra.mrb[0].mxu0 %v3171
  %v3262 = vpop.f32.mrb[0].mxu0
  %v3263 = vadd.f32 0.0, %v3262
  %v3264 = vpop.f32.mrb[0].mxu0
  %3265 = vmatprep.mubr.f32.mxu0 0.0
  %3266 = vmatmul.mubr.f32.gmra.mrb[0].mxu0 %v3173
  %v3267 = vpop.f32.mrb[0].mxu0
  %v3268 = vadd.f32 0.0, %v3267
  %v3269 = vpop.f32.mrb[0].mxu0
  %3270 = vmatprep.mubr.f32.mxu0 0.0
  %3271 = vmatmul.mubr.f32.gmra.mrb[0].mxu0 %v3175
  %v3272 = vpop.f32.mrb[0].mxu0
  %v3273 = vadd.f32 0.0, %v3272
  %v3274 = vpop.f32.mrb[0].mxu0
  %3275 = vmatprep.mubr.f32.mxu0 0.0
  %3276 = vmatmul.mubr.f32.gmra.mrb[0].mxu0 %v3177
  %v3277 = vpop.f32.mrb[0].mxu0
  %v3278 = vadd.f32 0.0, %v3277
  %v3279 = vpop.f32.mrb[0].mxu0
  %3280 = vmatprep.mubr.f32.mxu0 0.0
  %3281 = vmatmul.mubr.f32.gmra.mrb[0].mxu0 %v3179
  %v3282 = vpop.f32.mrb[0].mxu0
  %v3283 = vadd.f32 0.0, %v3282
  %v3284 = vpop.f32.mrb[0].mxu0
  %3285 = vdwg.mxu0
  %v3286 = vadd.f32 %v3133, %v3248
  %v3287 = vadd.f32 %v3134, %v3253
  %v3288 = vadd.f32 %v3135, %v3258
  %v3289 = vadd.f32 %v3136, %v3263
  %v3290 = vadd.f32 %v3137, %v3268
  %v3291 = vadd.f32 %v3138, %v3273
  %v3292 = vadd.f32 %v3139, %v3278
  %v3293 = vadd.f32 %v3140, %v3283
  %v3294 = vsub.f32 0.0, %v3286
  %v3295 = vsub.f32 0.0, %v3287
  %v3296 = vsub.f32 0.0, %v3288
  %v3297 = vsub.f32 0.0, %v3289
  %v3298 = vsub.f32 0.0, %v3290
  %v3299 = vsub.f32 0.0, %v3291
  %v3300 = vsub.f32 0.0, %v3292
  %v3301 = vsub.f32 0.0, %v3293
  %v3302 = vmul.f32 %v3294, 1.442695
  %v3303 = vpow.pop %v3302
  %v3304 = vmul.f32 %v3295, 1.442695
  %v3305 = vpow.pop %v3304
  %v3306 = vmul.f32 %v3296, 1.442695
  %v3307 = vpow.pop %v3306
  %v3308 = vmul.f32 %v3297, 1.442695
  %v3309 = vpow.pop %v3308
  %v3310 = vmul.f32 %v3298, 1.442695
  %v3311 = vpow.pop %v3310
  %v3312 = vmul.f32 %v3299, 1.442695
  %v3313 = vpow.pop %v3312
  %v3314 = vmul.f32 %v3300, 1.442695
  %v3315 = vpow.pop %v3314
  %v3316 = vmul.f32 %v3301, 1.442695
  %v3317 = vpow.pop %v3316
  %v3318 = vadd.f32 %v3303, 1.0
  %v3319 = vadd.f32 %v3305, 1.0
  %v3320 = vadd.f32 %v3307, 1.0
  %v3321 = vadd.f32 %v3309, 1.0
  %v3322 = vadd.f32 %v3311, 1.0
  %v3323 = vadd.f32 %v3313, 1.0
  %v3324 = vadd.f32 %v3315, 1.0
  %v3325 = vadd.f32 %v3317, 1.0
  %v3326 = vrcp.pop %v3318
  %v3327 = vrcp.pop %v3319
  %v3328 = vrcp.pop %v3320
  %v3329 = vrcp.pop %v3321
  %v3330 = vrcp.pop %v3322
  %v3331 = vrcp.pop %v3323
  %v3332 = vrcp.pop %v3324
  %v3333 = vrcp.pop %v3325
  %v3334 = vtanh.pop %v3286
  %v3335 = vtanh.pop %v3287
  %v3336 = vtanh.pop %v3288
  %v3337 = vtanh.pop %v3289
  %v3338 = vtanh.pop %v3290
  %v3339 = vtanh.pop %v3291
  %v3340 = vtanh.pop %v3292
  %v3341 = vtanh.pop %v3293
  %v3342 = vmul.f32 %v3326, %v3020
  %v3343 = vmul.f32 %v3327, %v3021
  %v3344 = vmul.f32 %v3328, %v3022
  %v3345 = vmul.f32 %v3329, %v3023
  %v3346 = vmul.f32 %v3330, %v3024
  %v3347 = vmul.f32 %v3331, %v3025
  %v3348 = vmul.f32 %v3332, %v3026
  %v3349 = vmul.f32 %v3333, %v3027
  %3358 = vrot.lane.b32.xlu0 %v3334, 64
  %v3359 = vpop.permute.xlu0 %3358
  %3360 = vrot.lane.b32.xlu0 %v3335, 64
  %v3361 = vpop.permute.xlu0 %3360
  %3362 = vrot.lane.b32.xlu0 %v3336, 64
  %v3363 = vpop.permute.xlu0 %3362
  %3364 = vrot.lane.b32.xlu0 %v3337, 64
  %v3365 = vpop.permute.xlu0 %3364
  %3366 = vrot.lane.b32.xlu0 %v3338, 64
  %v3367 = vpop.permute.xlu0 %3366
  %3368 = vrot.lane.b32.xlu0 %v3339, 64
  %v3369 = vpop.permute.xlu0 %3368
  %3370 = vrot.lane.b32.xlu0 %v3340, 64
  %v3371 = vpop.permute.xlu0 %3370
  %3372 = vrot.lane.b32.xlu0 %v3341, 64
  %v3373 = vpop.permute.xlu0 %3372
  %v3382 = vmul.f32 %v3326, %v3359
  %v3383 = vmul.f32 %v3327, %v3361
  %v3384 = vmul.f32 %v3328, %v3363
  %v3385 = vmul.f32 %v3329, %v3365
  %v3386 = vmul.f32 %v3330, %v3367
  %v3387 = vmul.f32 %v3331, %v3369
  %v3388 = vmul.f32 %v3332, %v3371
  %v3389 = vmul.f32 %v3333, %v3373
  %3398 = vrot.lane.b32.xlu0 %v3382, 32
  %v3399 = vpop.permute.xlu0 %3398
  %3400 = vrot.lane.b32.xlu0 %v3383, 32
  %v3401 = vpop.permute.xlu0 %3400
  %3402 = vrot.lane.b32.xlu0 %v3384, 32
  %v3403 = vpop.permute.xlu0 %3402
  %3404 = vrot.lane.b32.xlu0 %v3385, 32
  %v3405 = vpop.permute.xlu0 %3404
  %3406 = vrot.lane.b32.xlu0 %v3386, 32
  %v3407 = vpop.permute.xlu0 %3406
  %3408 = vrot.lane.b32.xlu0 %v3387, 32
  %v3409 = vpop.permute.xlu0 %3408
  %3410 = vrot.lane.b32.xlu0 %v3388, 32
  %v3411 = vpop.permute.xlu0 %3410
  %3412 = vrot.lane.b32.xlu0 %v3389, 32
  %v3413 = vpop.permute.xlu0 %3412
  %v3422 = vadd.f32 %v3342, %v3399
  %v3423 = vadd.f32 %v3343, %v3401
  %v3424 = vadd.f32 %v3344, %v3403
  %v3425 = vadd.f32 %v3345, %v3405
  %v3426 = vadd.f32 %v3346, %v3407
  %v3427 = vadd.f32 %v3347, %v3409
  %v3428 = vadd.f32 %v3348, %v3411
  %v3429 = vadd.f32 %v3349, %v3413
  %v3430 = vtanh.pop %v3422
  %v3431 = vtanh.pop %v3423
  %v3432 = vtanh.pop %v3424
  %v3433 = vtanh.pop %v3425
  %v3434 = vtanh.pop %v3426
  %v3435 = vtanh.pop %v3427
  %v3436 = vtanh.pop %v3428
  %v3437 = vtanh.pop %v3429
  %3446 = vrot.lane.b32.xlu0 %v3430, 64
  %v3447 = vpop.permute.xlu0 %3446
  %3448 = vrot.lane.b32.xlu0 %v3431, 64
  %v3449 = vpop.permute.xlu0 %3448
  %3450 = vrot.lane.b32.xlu0 %v3432, 64
  %v3451 = vpop.permute.xlu0 %3450
  %3452 = vrot.lane.b32.xlu0 %v3433, 64
  %v3453 = vpop.permute.xlu0 %3452
  %3454 = vrot.lane.b32.xlu0 %v3434, 64
  %v3455 = vpop.permute.xlu0 %3454
  %3456 = vrot.lane.b32.xlu0 %v3435, 64
  %v3457 = vpop.permute.xlu0 %3456
  %3458 = vrot.lane.b32.xlu0 %v3436, 64
  %v3459 = vpop.permute.xlu0 %3458
  %3460 = vrot.lane.b32.xlu0 %v3437, 64
  %v3461 = vpop.permute.xlu0 %3460
  %v3470 = vmul.f32 %v3326, %v3447
  %v3471 = vmul.f32 %v3327, %v3449
  %v3472 = vmul.f32 %v3328, %v3451
  %v3473 = vmul.f32 %v3329, %v3453
  %v3474 = vmul.f32 %v3330, %v3455
  %v3475 = vmul.f32 %v3331, %v3457
  %v3476 = vmul.f32 %v3332, %v3459
  %v3477 = vmul.f32 %v3333, %v3461
  %vm3478 = vcmp.eq.s32.totalorder %v1147, 5
  %vm3479 = vcmp.eq.s32.totalorder %v1148, 5
  %vm3480 = vcmp.eq.s32.totalorder %v1149, 5
  %vm3481 = vcmp.eq.s32.totalorder %v1150, 5
  %vm3482 = vcmp.eq.s32.totalorder %v1151, 5
  %vm3483 = vcmp.eq.s32.totalorder %v1152, 5
  %vm3484 = vcmp.eq.s32.totalorder %v1153, 5
  %vm3485 = vcmp.eq.s32.totalorder %v1154, 5
  %v3486 = vsel %vm3478, 1, 0
  %v3487 = vsel %vm3479, 1, 0
  %v3488 = vsel %vm3480, 1, 0
  %v3489 = vsel %vm3481, 1, 0
  %v3490 = vsel %vm3482, 1, 0
  %v3491 = vsel %vm3483, 1, 0
  %v3492 = vsel %vm3484, 1, 0
  %v3493 = vsel %vm3485, 1, 0
  %3494 = vset.pattern.permute.xlu0 0
  %3495 = vperm.xlu0 %3494, %v3486
  %v3496 = vpop.permute.xlu0 %3495
  %3497 = vset.pattern.permute.xlu0 0
  %3498 = vperm.xlu0 %3497, %v3487
  %v3499 = vpop.permute.xlu0 %3498
  %3500 = vset.pattern.permute.xlu0 0
  %3501 = vperm.xlu0 %3500, %v3488
  %v3502 = vpop.permute.xlu0 %3501
  %3503 = vset.pattern.permute.xlu0 0
  %3504 = vperm.xlu0 %3503, %v3489
  %v3505 = vpop.permute.xlu0 %3504
  %3506 = vset.pattern.permute.xlu0 0
  %3507 = vperm.xlu0 %3506, %v3490
  %v3508 = vpop.permute.xlu0 %3507
  %3509 = vset.pattern.permute.xlu0 0
  %3510 = vperm.xlu0 %3509, %v3491
  %v3511 = vpop.permute.xlu0 %3510
  %3512 = vset.pattern.permute.xlu0 0
  %3513 = vperm.xlu0 %3512, %v3492
  %v3514 = vpop.permute.xlu0 %3513
  %3515 = vset.pattern.permute.xlu0 0
  %3516 = vperm.xlu0 %3515, %v3493
  %v3517 = vpop.permute.xlu0 %3516
  %vm3518 = vcmp.eq.s32.totalorder %v3496, 1
  %vm3519 = vcmp.eq.s32.totalorder %v3499, 1
  %vm3520 = vcmp.eq.s32.totalorder %v3502, 1
  %vm3521 = vcmp.eq.s32.totalorder %v3505, 1
  %vm3522 = vcmp.eq.s32.totalorder %v3508, 1
  %vm3523 = vcmp.eq.s32.totalorder %v3511, 1
  %vm3524 = vcmp.eq.s32.totalorder %v3514, 1
  %vm3525 = vcmp.eq.s32.totalorder %v3517, 1
  %v3526 = vsel %vm3518, %v3470, %v3124
  %v3527 = vsel %vm3519, %v3471, %v3125
  %v3528 = vsel %vm3520, %v3472, %v3126
  %v3529 = vsel %vm3521, %v3473, %v3127
  %v3530 = vsel %vm3522, %v3474, %v3128
  %v3531 = vsel %vm3523, %v3475, %v3129
  %v3532 = vsel %vm3524, %v3476, %v3130
  %v3533 = vsel %vm3525, %v3477, %v3131
  %s3534 = scalar_lea.vmem [#allocation2], 384
  %v3535 = vld [vmem:[%s3534] sm:$0xff]
  %v3536 = vld [vmem:[%s3534 + $0x8] sm:$0xff]
  %v3537 = vld [vmem:[%s3534 + $0x10] sm:$0xff]
  %v3538 = vld [vmem:[%s3534 + $0x18] sm:$0xff]
  %v3539 = vld [vmem:[%s3534 + $0x20] sm:$0xff]
  %v3540 = vld [vmem:[%s3534 + $0x28] sm:$0xff]
  %v3541 = vld [vmem:[%s3534 + $0x30] sm:$0xff]
  %v3542 = vld [vmem:[%s3534 + $0x38] sm:$0xff]
  %3551 = vrot.lane.b32.xlu0 %v3470, 32
  %v3552 = vpop.permute.xlu0 %3551
  %3553 = vrot.lane.b32.xlu0 %v3471, 32
  %v3554 = vpop.permute.xlu0 %3553
  %3555 = vrot.lane.b32.xlu0 %v3472, 32
  %v3556 = vpop.permute.xlu0 %3555
  %3557 = vrot.lane.b32.xlu0 %v3473, 32
  %v3558 = vpop.permute.xlu0 %3557
  %3559 = vrot.lane.b32.xlu0 %v3474, 32
  %v3560 = vpop.permute.xlu0 %3559
  %3561 = vrot.lane.b32.xlu0 %v3475, 32
  %v3562 = vpop.permute.xlu0 %3561
  %3563 = vrot.lane.b32.xlu0 %v3476, 32
  %v3564 = vpop.permute.xlu0 %3563
  %3565 = vrot.lane.b32.xlu0 %v3477, 32
  %v3566 = vpop.permute.xlu0 %3565
  %v3567 = vsel %vm1167, %v3552, 0
  %v3569 = vsel %vm1167, %v3554, 0
  %v3571 = vsel %vm1167, %v3556, 0
  %v3573 = vsel %vm1167, %v3558, 0
  %v3575 = vsel %vm1167, %v3560, 0
  %v3577 = vsel %vm1167, %v3562, 0
  %v3579 = vsel %vm1167, %v3564, 0
  %v3581 = vsel %vm1167, %v3566, 0
  %3583 = vmatprep.subr.mxu0 0.0
  %3584 = vmatpush1.msra.mxu0 %v1155
  %3585 = vmatprep.subr.mxu0 0.0
  %3586 = vmatpush1.msra.mxu0 %v1156
  %3587 = vmatprep.subr.mxu0 0.0
  %3588 = vmatpush1.msra.mxu0 %v1157
  %3589 = vmatprep.subr.mxu0 0.0
  %3590 = vmatpush1.msra.mxu0 %v1158
  %3591 = vmatprep.subr.mxu0 0.0
  %3592 = vmatpush1.msra.mxu0 0.0
  %3593 = vmatprep.subr.mxu0 0.0
  %3594 = vmatpush1.msra.mxu0 0.0
  %3595 = vmatprep.subr.mxu0 0.0
  %3596 = vmatpush1.msra.mxu0 0.0
  %3597 = vmatprep.subr.mxu0 0.0
  %3598 = vmatpush1.msra.mxu0 0.0
  %3599 = vmatprep.subr.mxu0 0.0
  %3600 = vmatpush1.msra.mxu0 0.0
  %3601 = vmatprep.subr.mxu0 0.0
  %3602 = vmatpush1.msra.mxu0 0.0
  %3603 = vmatprep.subr.mxu0 0.0
  %3604 = vmatpush1.msra.mxu0 0.0
  %3605 = vmatprep.subr.mxu0 0.0
  %3606 = vmatpush1.msra.mxu0 0.0
  %3607 = vmatprep.subr.mxu0 0.0
  %3608 = vmatpush1.msra.mxu0 0.0
  %3609 = vmatprep.subr.mxu0 0.0
  %3610 = vmatpush1.msra.mxu0 0.0
  %3611 = vmatprep.subr.mxu0 0.0
  %3612 = vmatpush1.msra.mxu0 0.0
  %3613 = vmatprep.subr.mxu0 0.0
  %3614 = vmatpush1.msra.mxu0 0.0
  %3615 = vmatprep.subr.mxu0 0.0
  %3616 = vmatpush1.msra.mxu0 0.0
  %3617 = vmatprep.subr.mxu0 0.0
  %3618 = vmatpush1.msra.mxu0 0.0
  %3619 = vmatprep.subr.mxu0 0.0
  %3620 = vmatpush1.msra.mxu0 0.0
  %3621 = vmatprep.subr.mxu0 0.0
  %3622 = vmatpush1.msra.mxu0 0.0
  %3623 = vmatprep.subr.mxu0 0.0
  %3624 = vmatpush1.msra.mxu0 0.0
  %3625 = vmatprep.subr.mxu0 0.0
  %3626 = vmatpush1.msra.mxu0 0.0
  %3627 = vmatprep.subr.mxu0 0.0
  %3628 = vmatpush1.msra.mxu0 0.0
  %3629 = vmatprep.subr.mxu0 0.0
  %3630 = vmatpush1.msra.mxu0 0.0
  %3631 = vmatprep.subr.mxu0 0.0
  %3632 = vmatpush1.msra.mxu0 0.0
  %3633 = vmatprep.subr.mxu0 0.0
  %3634 = vmatpush1.msra.mxu0 0.0
  %3635 = vmatprep.subr.mxu0 0.0
  %3636 = vmatpush1.msra.mxu0 0.0
  %3637 = vmatprep.subr.mxu0 0.0
  %3638 = vmatpush1.msra.mxu0 0.0
  %3639 = vmatprep.subr.mxu0 0.0
  %3640 = vmatpush1.msra.mxu0 0.0
  %3641 = vmatprep.subr.mxu0 0.0
  %3642 = vmatpush1.msra.mxu0 0.0
  %3643 = vmatprep.subr.mxu0 0.0
  %3644 = vmatpush1.msra.mxu0 0.0
  %3645 = vmatprep.subr.mxu0 0.0
  %3646 = vmatpush1.msra.mxu0 0.0
  %3647 = vmatprep.mubr.f32.mxu0 0.0
  %3648 = vmatmul.mubr.f32.gmra.mrb[0].mxu0 %v3567
  %v3649 = vpop.f32.mrb[0].mxu0
  %v3650 = vadd.f32 0.0, %v3649
  %v3651 = vpop.f32.mrb[0].mxu0
  %3652 = vmatprep.mubr.f32.mxu0 0.0
  %3653 = vmatmul.mubr.f32.gmra.mrb[0].mxu0 %v3569
  %v3654 = vpop.f32.mrb[0].mxu0
  %v3655 = vadd.f32 0.0, %v3654
  %v3656 = vpop.f32.mrb[0].mxu0
  %3657 = vmatprep.mubr.f32.mxu0 0.0
  %3658 = vmatmul.mubr.f32.gmra.mrb[0].mxu0 %v3571
  %v3659 = vpop.f32.mrb[0].mxu0
  %v3660 = vadd.f32 0.0, %v3659
  %v3661 = vpop.f32.mrb[0].mxu0
  %3662 = vmatprep.mubr.f32.mxu0 0.0
  %3663 = vmatmul.mubr.f32.gmra.mrb[0].mxu0 %v3573
  %v3664 = vpop.f32.mrb[0].mxu0
  %v3665 = vadd.f32 0.0, %v3664
  %v3666 = vpop.f32.mrb[0].mxu0
  %3667 = vmatprep.mubr.f32.mxu0 0.0
  %3668 = vmatmul.mubr.f32.gmra.mrb[0].mxu0 %v3575
  %v3669 = vpop.f32.mrb[0].mxu0
  %v3670 = vadd.f32 0.0, %v3669
  %v3671 = vpop.f32.mrb[0].mxu0
  %3672 = vmatprep.mubr.f32.mxu0 0.0
  %3673 = vmatmul.mubr.f32.gmra.mrb[0].mxu0 %v3577
  %v3674 = vpop.f32.mrb[0].mxu0
  %v3675 = vadd.f32 0.0, %v3674
  %v3676 = vpop.f32.mrb[0].mxu0
  %3677 = vmatprep.mubr.f32.mxu0 0.0
  %3678 = vmatmul.mubr.f32.gmra.mrb[0].mxu0 %v3579
  %v3679 = vpop.f32.mrb[0].mxu0
  %v3680 = vadd.f32 0.0, %v3679
  %v3681 = vpop.f32.mrb[0].mxu0
  %3682 = vmatprep.mubr.f32.mxu0 0.0
  %3683 = vmatmul.mubr.f32.gmra.mrb[0].mxu0 %v3581
  %v3684 = vpop.f32.mrb[0].mxu0
  %v3685 = vadd.f32 0.0, %v3684
  %v3686 = vpop.f32.mrb[0].mxu0
  %3687 = vdwg.mxu0
  %v3688 = vadd.f32 %v3535, %v3650
  %v3689 = vadd.f32 %v3536, %v3655
  %v3690 = vadd.f32 %v3537, %v3660
  %v3691 = vadd.f32 %v3538, %v3665
  %v3692 = vadd.f32 %v3539, %v3670
  %v3693 = vadd.f32 %v3540, %v3675
  %v3694 = vadd.f32 %v3541, %v3680
  %v3695 = vadd.f32 %v3542, %v3685
  %v3696 = vsub.f32 0.0, %v3688
  %v3697 = vsub.f32 0.0, %v3689
  %v3698 = vsub.f32 0.0, %v3690
  %v3699 = vsub.f32 0.0, %v3691
  %v3700 = vsub.f32 0.0, %v3692
  %v3701 = vsub.f32 0.0, %v3693
  %v3702 = vsub.f32 0.0, %v3694
  %v3703 = vsub.f32 0.0, %v3695
  %v3704 = vmul.f32 %v3696, 1.442695
  %v3705 = vpow.pop %v3704
  %v3706 = vmul.f32 %v3697, 1.442695
  %v3707 = vpow.pop %v3706
  %v3708 = vmul.f32 %v3698, 1.442695
  %v3709 = vpow.pop %v3708
  %v3710 = vmul.f32 %v3699, 1.442695
  %v3711 = vpow.pop %v3710
  %v3712 = vmul.f32 %v3700, 1.442695
  %v3713 = vpow.pop %v3712
  %v3714 = vmul.f32 %v3701, 1.442695
  %v3715 = vpow.pop %v3714
  %v3716 = vmul.f32 %v3702, 1.442695
  %v3717 = vpow.pop %v3716
  %v3718 = vmul.f32 %v3703, 1.442695
  %v3719 = vpow.pop %v3718
  %v3720 = vadd.f32 %v3705, 1.0
  %v3721 = vadd.f32 %v3707, 1.0
  %v3722 = vadd.f32 %v3709, 1.0
  %v3723 = vadd.f32 %v3711, 1.0
  %v3724 = vadd.f32 %v3713, 1.0
  %v3725 = vadd.f32 %v3715, 1.0
  %v3726 = vadd.f32 %v3717, 1.0
  %v3727 = vadd.f32 %v3719, 1.0
  %v3728 = vrcp.pop %v3720
  %v3729 = vrcp.pop %v3721
  %v3730 = vrcp.pop %v3722
  %v3731 = vrcp.pop %v3723
  %v3732 = vrcp.pop %v3724
  %v3733 = vrcp.pop %v3725
  %v3734 = vrcp.pop %v3726
  %v3735 = vrcp.pop %v3727
  %v3736 = vtanh.pop %v3688
  %v3737 = vtanh.pop %v3689
  %v3738 = vtanh.pop %v3690
  %v3739 = vtanh.pop %v3691
  %v3740 = vtanh.pop %v3692
  %v3741 = vtanh.pop %v3693
  %v3742 = vtanh.pop %v3694
  %v3743 = vtanh.pop %v3695
  %v3744 = vmul.f32 %v3728, %v3422
  %v3745 = vmul.f32 %v3729, %v3423
  %v3746 = vmul.f32 %v3730, %v3424
  %v3747 = vmul.f32 %v3731, %v3425
  %v3748 = vmul.f32 %v3732, %v3426
  %v3749 = vmul.f32 %v3733, %v3427
  %v3750 = vmul.f32 %v3734, %v3428
  %v3751 = vmul.f32 %v3735, %v3429
  %3760 = vrot.lane.b32.xlu0 %v3736, 64
  %v3761 = vpop.permute.xlu0 %3760
  %3762 = vrot.lane.b32.xlu0 %v3737, 64
  %v3763 = vpop.permute.xlu0 %3762
  %3764 = vrot.lane.b32.xlu0 %v3738, 64
  %v3765 = vpop.permute.xlu0 %3764
  %3766 = vrot.lane.b32.xlu0 %v3739, 64
  %v3767 = vpop.permute.xlu0 %3766
  %3768 = vrot.lane.b32.xlu0 %v3740, 64
  %v3769 = vpop.permute.xlu0 %3768
  %3770 = vrot.lane.b32.xlu0 %v3741, 64
  %v3771 = vpop.permute.xlu0 %3770
  %3772 = vrot.lane.b32.xlu0 %v3742, 64
  %v3773 = vpop.permute.xlu0 %3772
  %3774 = vrot.lane.b32.xlu0 %v3743, 64
  %v3775 = vpop.permute.xlu0 %3774
  %v3784 = vmul.f32 %v3728, %v3761
  %v3785 = vmul.f32 %v3729, %v3763
  %v3786 = vmul.f32 %v3730, %v3765
  %v3787 = vmul.f32 %v3731, %v3767
  %v3788 = vmul.f32 %v3732, %v3769
  %v3789 = vmul.f32 %v3733, %v3771
  %v3790 = vmul.f32 %v3734, %v3773
  %v3791 = vmul.f32 %v3735, %v3775
  %3800 = vrot.lane.b32.xlu0 %v3784, 32
  %v3801 = vpop.permute.xlu0 %3800
  %3802 = vrot.lane.b32.xlu0 %v3785, 32
  %v3803 = vpop.permute.xlu0 %3802
  %3804 = vrot.lane.b32.xlu0 %v3786, 32
  %v3805 = vpop.permute.xlu0 %3804
  %3806 = vrot.lane.b32.xlu0 %v3787, 32
  %v3807 = vpop.permute.xlu0 %3806
  %3808 = vrot.lane.b32.xlu0 %v3788, 32
  %v3809 = vpop.permute.xlu0 %3808
  %3810 = vrot.lane.b32.xlu0 %v3789, 32
  %v3811 = vpop.permute.xlu0 %3810
  %3812 = vrot.lane.b32.xlu0 %v3790, 32
  %v3813 = vpop.permute.xlu0 %3812
  %3814 = vrot.lane.b32.xlu0 %v3791, 32
  %v3815 = vpop.permute.xlu0 %3814
  %v3824 = vadd.f32 %v3744, %v3801
  %v3825 = vadd.f32 %v3745, %v3803
  %v3826 = vadd.f32 %v3746, %v3805
  %v3827 = vadd.f32 %v3747, %v3807
  %v3828 = vadd.f32 %v3748, %v3809
  %v3829 = vadd.f32 %v3749, %v3811
  %v3830 = vadd.f32 %v3750, %v3813
  %v3831 = vadd.f32 %v3751, %v3815
  %v3832 = vtanh.pop %v3824
  %v3833 = vtanh.pop %v3825
  %v3834 = vtanh.pop %v3826
  %v3835 = vtanh.pop %v3827
  %v3836 = vtanh.pop %v3828
  %v3837 = vtanh.pop %v3829
  %v3838 = vtanh.pop %v3830
  %v3839 = vtanh.pop %v3831
  %3848 = vrot.lane.b32.xlu0 %v3832, 64
  %v3849 = vpop.permute.xlu0 %3848
  %3850 = vrot.lane.b32.xlu0 %v3833, 64
  %v3851 = vpop.permute.xlu0 %3850
  %3852 = vrot.lane.b32.xlu0 %v3834, 64
  %v3853 = vpop.permute.xlu0 %3852
  %3854 = vrot.lane.b32.xlu0 %v3835, 64
  %v3855 = vpop.permute.xlu0 %3854
  %3856 = vrot.lane.b32.xlu0 %v3836, 64
  %v3857 = vpop.permute.xlu0 %3856
  %3858 = vrot.lane.b32.xlu0 %v3837, 64
  %v3859 = vpop.permute.xlu0 %3858
  %3860 = vrot.lane.b32.xlu0 %v3838, 64
  %v3861 = vpop.permute.xlu0 %3860
  %3862 = vrot.lane.b32.xlu0 %v3839, 64
  %v3863 = vpop.permute.xlu0 %3862
  %v3872 = vmul.f32 %v3728, %v3849
  %v3873 = vmul.f32 %v3729, %v3851
  %v3874 = vmul.f32 %v3730, %v3853
  %v3875 = vmul.f32 %v3731, %v3855
  %v3876 = vmul.f32 %v3732, %v3857
  %v3877 = vmul.f32 %v3733, %v3859
  %v3878 = vmul.f32 %v3734, %v3861
  %v3879 = vmul.f32 %v3735, %v3863
  %vm3880 = vcmp.eq.s32.totalorder %v1147, 6
  %vm3881 = vcmp.eq.s32.totalorder %v1148, 6
  %vm3882 = vcmp.eq.s32.totalorder %v1149, 6
  %vm3883 = vcmp.eq.s32.totalorder %v1150, 6
  %vm3884 = vcmp.eq.s32.totalorder %v1151, 6
  %vm3885 = vcmp.eq.s32.totalorder %v1152, 6
  %vm3886 = vcmp.eq.s32.totalorder %v1153, 6
  %vm3887 = vcmp.eq.s32.totalorder %v1154, 6
  %v3888 = vsel %vm3880, 1, 0
  %v3889 = vsel %vm3881, 1, 0
  %v3890 = vsel %vm3882, 1, 0
  %v3891 = vsel %vm3883, 1, 0
  %v3892 = vsel %vm3884, 1, 0
  %v3893 = vsel %vm3885, 1, 0
  %v3894 = vsel %vm3886, 1, 0
  %v3895 = vsel %vm3887, 1, 0
  %3896 = vset.pattern.permute.xlu0 0
  %3897 = vperm.xlu0 %3896, %v3888
  %v3898 = vpop.permute.xlu0 %3897
  %3899 = vset.pattern.permute.xlu0 0
  %3900 = vperm.xlu0 %3899, %v3889
  %v3901 = vpop.permute.xlu0 %3900
  %3902 = vset.pattern.permute.xlu0 0
  %3903 = vperm.xlu0 %3902, %v3890
  %v3904 = vpop.permute.xlu0 %3903
  %3905 = vset.pattern.permute.xlu0 0
  %3906 = vperm.xlu0 %3905, %v3891
  %v3907 = vpop.permute.xlu0 %3906
  %3908 = vset.pattern.permute.xlu0 0
  %3909 = vperm.xlu0 %3908, %v3892
  %v3910 = vpop.permute.xlu0 %3909
  %3911 = vset.pattern.permute.xlu0 0
  %3912 = vperm.xlu0 %3911, %v3893
  %v3913 = vpop.permute.xlu0 %3912
  %3914 = vset.pattern.permute.xlu0 0
  %3915 = vperm.xlu0 %3914, %v3894
  %v3916 = vpop.permute.xlu0 %3915
  %3917 = vset.pattern.permute.xlu0 0
  %3918 = vperm.xlu0 %3917, %v3895
  %v3919 = vpop.permute.xlu0 %3918
  %vm3920 = vcmp.eq.s32.totalorder %v3898, 1
  %vm3921 = vcmp.eq.s32.totalorder %v3901, 1
  %vm3922 = vcmp.eq.s32.totalorder %v3904, 1
  %vm3923 = vcmp.eq.s32.totalorder %v3907, 1
  %vm3924 = vcmp.eq.s32.totalorder %v3910, 1
  %vm3925 = vcmp.eq.s32.totalorder %v3913, 1
  %vm3926 = vcmp.eq.s32.totalorder %v3916, 1
  %vm3927 = vcmp.eq.s32.totalorder %v3919, 1
  %v3928 = vsel %vm3920, %v3872, %v3526
  %v3929 = vsel %vm3921, %v3873, %v3527
  %v3930 = vsel %vm3922, %v3874, %v3528
  %v3931 = vsel %vm3923, %v3875, %v3529
  %v3932 = vsel %vm3924, %v3876, %v3530
  %v3933 = vsel %vm3925, %v3877, %v3531
  %v3934 = vsel %vm3926, %v3878, %v3532
  %v3935 = vsel %vm3927, %v3879, %v3533
  %s3936 = scalar_lea.vmem [#allocation2], 448
  %v3937 = vld [vmem:[%s3936] sm:$0xff]
  %v3938 = vld [vmem:[%s3936 + $0x8] sm:$0xff]
  %v3939 = vld [vmem:[%s3936 + $0x10] sm:$0xff]
  %v3940 = vld [vmem:[%s3936 + $0x18] sm:$0xff]
  %v3941 = vld [vmem:[%s3936 + $0x20] sm:$0xff]
  %v3942 = vld [vmem:[%s3936 + $0x28] sm:$0xff]
  %v3943 = vld [vmem:[%s3936 + $0x30] sm:$0xff]
  %v3944 = vld [vmem:[%s3936 + $0x38] sm:$0xff]
  %3953 = vrot.lane.b32.xlu0 %v3872, 32
  %v3954 = vpop.permute.xlu0 %3953
  %3955 = vrot.lane.b32.xlu0 %v3873, 32
  %v3956 = vpop.permute.xlu0 %3955
  %3957 = vrot.lane.b32.xlu0 %v3874, 32
  %v3958 = vpop.permute.xlu0 %3957
  %3959 = vrot.lane.b32.xlu0 %v3875, 32
  %v3960 = vpop.permute.xlu0 %3959
  %3961 = vrot.lane.b32.xlu0 %v3876, 32
  %v3962 = vpop.permute.xlu0 %3961
  %3963 = vrot.lane.b32.xlu0 %v3877, 32
  %v3964 = vpop.permute.xlu0 %3963
  %3965 = vrot.lane.b32.xlu0 %v3878, 32
  %v3966 = vpop.permute.xlu0 %3965
  %3967 = vrot.lane.b32.xlu0 %v3879, 32
  %v3968 = vpop.permute.xlu0 %3967
  %v3969 = vsel %vm1167, %v3954, 0
  %v3971 = vsel %vm1167, %v3956, 0
  %v3973 = vsel %vm1167, %v3958, 0
  %v3975 = vsel %vm1167, %v3960, 0
  %v3977 = vsel %vm1167, %v3962, 0
  %v3979 = vsel %vm1167, %v3964, 0
  %v3981 = vsel %vm1167, %v3966, 0
  %v3983 = vsel %vm1167, %v3968, 0
  %3985 = vmatprep.subr.mxu0 0.0
  %3986 = vmatpush1.msra.mxu0 %v1155
  %3987 = vmatprep.subr.mxu0 0.0
  %3988 = vmatpush1.msra.mxu0 %v1156
  %3989 = vmatprep.subr.mxu0 0.0
  %3990 = vmatpush1.msra.mxu0 %v1157
  %3991 = vmatprep.subr.mxu0 0.0
  %3992 = vmatpush1.msra.mxu0 %v1158
  %3993 = vmatprep.subr.mxu0 0.0
  %3994 = vmatpush1.msra.mxu0 0.0
  %3995 = vmatprep.subr.mxu0 0.0
  %3996 = vmatpush1.msra.mxu0 0.0
  %3997 = vmatprep.subr.mxu0 0.0
  %3998 = vmatpush1.msra.mxu0 0.0
  %3999 = vmatprep.subr.mxu0 0.0
  %4000 = vmatpush1.msra.mxu0 0.0
  %4001 = vmatprep.subr.mxu0 0.0
  %4002 = vmatpush1.msra.mxu0 0.0
  %4003 = vmatprep.subr.mxu0 0.0
  %4004 = vmatpush1.msra.mxu0 0.0
  %4005 = vmatprep.subr.mxu0 0.0
  %4006 = vmatpush1.msra.mxu0 0.0
  %4007 = vmatprep.subr.mxu0 0.0
  %4008 = vmatpush1.msra.mxu0 0.0
  %4009 = vmatprep.subr.mxu0 0.0
  %4010 = vmatpush1.msra.mxu0 0.0
  %4011 = vmatprep.subr.mxu0 0.0
  %4012 = vmatpush1.msra.mxu0 0.0
  %4013 = vmatprep.subr.mxu0 0.0
  %4014 = vmatpush1.msra.mxu0 0.0
  %4015 = vmatprep.subr.mxu0 0.0
  %4016 = vmatpush1.msra.mxu0 0.0
  %4017 = vmatprep.subr.mxu0 0.0
  %4018 = vmatpush1.msra.mxu0 0.0
  %4019 = vmatprep.subr.mxu0 0.0
  %4020 = vmatpush1.msra.mxu0 0.0
  %4021 = vmatprep.subr.mxu0 0.0
  %4022 = vmatpush1.msra.mxu0 0.0
  %4023 = vmatprep.subr.mxu0 0.0
  %4024 = vmatpush1.msra.mxu0 0.0
  %4025 = vmatprep.subr.mxu0 0.0
  %4026 = vmatpush1.msra.mxu0 0.0
  %4027 = vmatprep.subr.mxu0 0.0
  %4028 = vmatpush1.msra.mxu0 0.0
  %4029 = vmatprep.subr.mxu0 0.0
  %4030 = vmatpush1.msra.mxu0 0.0
  %4031 = vmatprep.subr.mxu0 0.0
  %4032 = vmatpush1.msra.mxu0 0.0
  %4033 = vmatprep.subr.mxu0 0.0
  %4034 = vmatpush1.msra.mxu0 0.0
  %4035 = vmatprep.subr.mxu0 0.0
  %4036 = vmatpush1.msra.mxu0 0.0
  %4037 = vmatprep.subr.mxu0 0.0
  %4038 = vmatpush1.msra.mxu0 0.0
  %4039 = vmatprep.subr.mxu0 0.0
  %4040 = vmatpush1.msra.mxu0 0.0
  %4041 = vmatprep.subr.mxu0 0.0
  %4042 = vmatpush1.msra.mxu0 0.0
  %4043 = vmatprep.subr.mxu0 0.0
  %4044 = vmatpush1.msra.mxu0 0.0
  %4045 = vmatprep.subr.mxu0 0.0
  %4046 = vmatpush1.msra.mxu0 0.0
  %4047 = vmatprep.subr.mxu0 0.0
  %4048 = vmatpush1.msra.mxu0 0.0
  %4049 = vmatprep.mubr.f32.mxu0 0.0
  %4050 = vmatmul.mubr.f32.gmra.mrb[0].mxu0 %v3969
  %v4051 = vpop.f32.mrb[0].mxu0
  %v4052 = vadd.f32 0.0, %v4051
  %v4053 = vpop.f32.mrb[0].mxu0
  %4054 = vmatprep.mubr.f32.mxu0 0.0
  %4055 = vmatmul.mubr.f32.gmra.mrb[0].mxu0 %v3971
  %v4056 = vpop.f32.mrb[0].mxu0
  %v4057 = vadd.f32 0.0, %v4056
  %v4058 = vpop.f32.mrb[0].mxu0
  %4059 = vmatprep.mubr.f32.mxu0 0.0
  %4060 = vmatmul.mubr.f32.gmra.mrb[0].mxu0 %v3973
  %v4061 = vpop.f32.mrb[0].mxu0
  %v4062 = vadd.f32 0.0, %v4061
  %v4063 = vpop.f32.mrb[0].mxu0
  %4064 = vmatprep.mubr.f32.mxu0 0.0
  %4065 = vmatmul.mubr.f32.gmra.mrb[0].mxu0 %v3975
  %v4066 = vpop.f32.mrb[0].mxu0
  %v4067 = vadd.f32 0.0, %v4066
  %v4068 = vpop.f32.mrb[0].mxu0
  %4069 = vmatprep.mubr.f32.mxu0 0.0
  %4070 = vmatmul.mubr.f32.gmra.mrb[0].mxu0 %v3977
  %v4071 = vpop.f32.mrb[0].mxu0
  %v4072 = vadd.f32 0.0, %v4071
  %v4073 = vpop.f32.mrb[0].mxu0
  %4074 = vmatprep.mubr.f32.mxu0 0.0
  %4075 = vmatmul.mubr.f32.gmra.mrb[0].mxu0 %v3979
  %v4076 = vpop.f32.mrb[0].mxu0
  %v4077 = vadd.f32 0.0, %v4076
  %v4078 = vpop.f32.mrb[0].mxu0
  %4079 = vmatprep.mubr.f32.mxu0 0.0
  %4080 = vmatmul.mubr.f32.gmra.mrb[0].mxu0 %v3981
  %v4081 = vpop.f32.mrb[0].mxu0
  %v4082 = vadd.f32 0.0, %v4081
  %v4083 = vpop.f32.mrb[0].mxu0
  %4084 = vmatprep.mubr.f32.mxu0 0.0
  %4085 = vmatmul.mubr.f32.gmra.mrb[0].mxu0 %v3983
  %v4086 = vpop.f32.mrb[0].mxu0
  %v4087 = vadd.f32 0.0, %v4086
  %v4088 = vpop.f32.mrb[0].mxu0
  %4089 = vdwg.mxu0
  %v4090 = vadd.f32 %v3937, %v4052
  %v4091 = vadd.f32 %v3938, %v4057
  %v4092 = vadd.f32 %v3939, %v4062
  %v4093 = vadd.f32 %v3940, %v4067
  %v4094 = vadd.f32 %v3941, %v4072
  %v4095 = vadd.f32 %v3942, %v4077
  %v4096 = vadd.f32 %v3943, %v4082
  %v4097 = vadd.f32 %v3944, %v4087
  %v4098 = vsub.f32 0.0, %v4090
  %v4099 = vsub.f32 0.0, %v4091
  %v4100 = vsub.f32 0.0, %v4092
  %v4101 = vsub.f32 0.0, %v4093
  %v4102 = vsub.f32 0.0, %v4094
  %v4103 = vsub.f32 0.0, %v4095
  %v4104 = vsub.f32 0.0, %v4096
  %v4105 = vsub.f32 0.0, %v4097
  %v4106 = vmul.f32 %v4098, 1.442695
  %v4107 = vpow.pop %v4106
  %v4108 = vmul.f32 %v4099, 1.442695
  %v4109 = vpow.pop %v4108
  %v4110 = vmul.f32 %v4100, 1.442695
  %v4111 = vpow.pop %v4110
  %v4112 = vmul.f32 %v4101, 1.442695
  %v4113 = vpow.pop %v4112
  %v4114 = vmul.f32 %v4102, 1.442695
  %v4115 = vpow.pop %v4114
  %v4116 = vmul.f32 %v4103, 1.442695
  %v4117 = vpow.pop %v4116
  %v4118 = vmul.f32 %v4104, 1.442695
  %v4119 = vpow.pop %v4118
  %v4120 = vmul.f32 %v4105, 1.442695
  %v4121 = vpow.pop %v4120
  %v4122 = vadd.f32 %v4107, 1.0
  %v4123 = vadd.f32 %v4109, 1.0
  %v4124 = vadd.f32 %v4111, 1.0
  %v4125 = vadd.f32 %v4113, 1.0
  %v4126 = vadd.f32 %v4115, 1.0
  %v4127 = vadd.f32 %v4117, 1.0
  %v4128 = vadd.f32 %v4119, 1.0
  %v4129 = vadd.f32 %v4121, 1.0
  %v4130 = vrcp.pop %v4122
  %v4131 = vrcp.pop %v4123
  %v4132 = vrcp.pop %v4124
  %v4133 = vrcp.pop %v4125
  %v4134 = vrcp.pop %v4126
  %v4135 = vrcp.pop %v4127
  %v4136 = vrcp.pop %v4128
  %v4137 = vrcp.pop %v4129
  %v4138 = vtanh.pop %v4090
  %v4139 = vtanh.pop %v4091
  %v4140 = vtanh.pop %v4092
  %v4141 = vtanh.pop %v4093
  %v4142 = vtanh.pop %v4094
  %v4143 = vtanh.pop %v4095
  %v4144 = vtanh.pop %v4096
  %v4145 = vtanh.pop %v4097
  %v4146 = vmul.f32 %v4130, %v3824
  %v4147 = vmul.f32 %v4131, %v3825
  %v4148 = vmul.f32 %v4132, %v3826
  %v4149 = vmul.f32 %v4133, %v3827
  %v4150 = vmul.f32 %v4134, %v3828
  %v4151 = vmul.f32 %v4135, %v3829
  %v4152 = vmul.f32 %v4136, %v3830
  %v4153 = vmul.f32 %v4137, %v3831
  %4162 = vrot.lane.b32.xlu0 %v4138, 64
  %v4163 = vpop.permute.xlu0 %4162
  %4164 = vrot.lane.b32.xlu0 %v4139, 64
  %v4165 = vpop.permute.xlu0 %4164
  %4166 = vrot.lane.b32.xlu0 %v4140, 64
  %v4167 = vpop.permute.xlu0 %4166
  %4168 = vrot.lane.b32.xlu0 %v4141, 64
  %v4169 = vpop.permute.xlu0 %4168
  %4170 = vrot.lane.b32.xlu0 %v4142, 64
  %v4171 = vpop.permute.xlu0 %4170
  %4172 = vrot.lane.b32.xlu0 %v4143, 64
  %v4173 = vpop.permute.xlu0 %4172
  %4174 = vrot.lane.b32.xlu0 %v4144, 64
  %v4175 = vpop.permute.xlu0 %4174
  %4176 = vrot.lane.b32.xlu0 %v4145, 64
  %v4177 = vpop.permute.xlu0 %4176
  %v4186 = vmul.f32 %v4130, %v4163
  %v4187 = vmul.f32 %v4131, %v4165
  %v4188 = vmul.f32 %v4132, %v4167
  %v4189 = vmul.f32 %v4133, %v4169
  %v4190 = vmul.f32 %v4134, %v4171
  %v4191 = vmul.f32 %v4135, %v4173
  %v4192 = vmul.f32 %v4136, %v4175
  %v4193 = vmul.f32 %v4137, %v4177
  %4202 = vrot.lane.b32.xlu0 %v4186, 32
  %v4203 = vpop.permute.xlu0 %4202
  %4204 = vrot.lane.b32.xlu0 %v4187, 32
  %v4205 = vpop.permute.xlu0 %4204
  %4206 = vrot.lane.b32.xlu0 %v4188, 32
  %v4207 = vpop.permute.xlu0 %4206
  %4208 = vrot.lane.b32.xlu0 %v4189, 32
  %v4209 = vpop.permute.xlu0 %4208
  %4210 = vrot.lane.b32.xlu0 %v4190, 32
  %v4211 = vpop.permute.xlu0 %4210
  %4212 = vrot.lane.b32.xlu0 %v4191, 32
  %v4213 = vpop.permute.xlu0 %4212
  %4214 = vrot.lane.b32.xlu0 %v4192, 32
  %v4215 = vpop.permute.xlu0 %4214
  %4216 = vrot.lane.b32.xlu0 %v4193, 32
  %v4217 = vpop.permute.xlu0 %4216
  %v4226 = vadd.f32 %v4146, %v4203
  %v4227 = vadd.f32 %v4147, %v4205
  %v4228 = vadd.f32 %v4148, %v4207
  %v4229 = vadd.f32 %v4149, %v4209
  %v4230 = vadd.f32 %v4150, %v4211
  %v4231 = vadd.f32 %v4151, %v4213
  %v4232 = vadd.f32 %v4152, %v4215
  %v4233 = vadd.f32 %v4153, %v4217
  %v4234 = vtanh.pop %v4226
  %v4235 = vtanh.pop %v4227
  %v4236 = vtanh.pop %v4228
  %v4237 = vtanh.pop %v4229
  %v4238 = vtanh.pop %v4230
  %v4239 = vtanh.pop %v4231
  %v4240 = vtanh.pop %v4232
  %v4241 = vtanh.pop %v4233
  %4250 = vrot.lane.b32.xlu0 %v4234, 64
  %v4251 = vpop.permute.xlu0 %4250
  %4252 = vrot.lane.b32.xlu0 %v4235, 64
  %v4253 = vpop.permute.xlu0 %4252
  %4254 = vrot.lane.b32.xlu0 %v4236, 64
  %v4255 = vpop.permute.xlu0 %4254
  %4256 = vrot.lane.b32.xlu0 %v4237, 64
  %v4257 = vpop.permute.xlu0 %4256
  %4258 = vrot.lane.b32.xlu0 %v4238, 64
  %v4259 = vpop.permute.xlu0 %4258
  %4260 = vrot.lane.b32.xlu0 %v4239, 64
  %v4261 = vpop.permute.xlu0 %4260
  %4262 = vrot.lane.b32.xlu0 %v4240, 64
  %v4263 = vpop.permute.xlu0 %4262
  %4264 = vrot.lane.b32.xlu0 %v4241, 64
  %v4265 = vpop.permute.xlu0 %4264
  %v4274 = vmul.f32 %v4130, %v4251
  %v4275 = vmul.f32 %v4131, %v4253
  %v4276 = vmul.f32 %v4132, %v4255
  %v4277 = vmul.f32 %v4133, %v4257
  %v4278 = vmul.f32 %v4134, %v4259
  %v4279 = vmul.f32 %v4135, %v4261
  %v4280 = vmul.f32 %v4136, %v4263
  %v4281 = vmul.f32 %v4137, %v4265
  %vm4282 = vcmp.eq.s32.totalorder %v1147, 7
  %vm4283 = vcmp.eq.s32.totalorder %v1148, 7
  %vm4284 = vcmp.eq.s32.totalorder %v1149, 7
  %vm4285 = vcmp.eq.s32.totalorder %v1150, 7
  %vm4286 = vcmp.eq.s32.totalorder %v1151, 7
  %vm4287 = vcmp.eq.s32.totalorder %v1152, 7
  %vm4288 = vcmp.eq.s32.totalorder %v1153, 7
  %vm4289 = vcmp.eq.s32.totalorder %v1154, 7
  %v4290 = vsel %vm4282, 1, 0
  %v4291 = vsel %vm4283, 1, 0
  %v4292 = vsel %vm4284, 1, 0
  %v4293 = vsel %vm4285, 1, 0
  %v4294 = vsel %vm4286, 1, 0
  %v4295 = vsel %vm4287, 1, 0
  %v4296 = vsel %vm4288, 1, 0
  %v4297 = vsel %vm4289, 1, 0
  %4298 = vset.pattern.permute.xlu0 0
  %4299 = vperm.xlu0 %4298, %v4290
  %v4300 = vpop.permute.xlu0 %4299
  %4301 = vset.pattern.permute.xlu0 0
  %4302 = vperm.xlu0 %4301, %v4291
  %v4303 = vpop.permute.xlu0 %4302
  %4304 = vset.pattern.permute.xlu0 0
  %4305 = vperm.xlu0 %4304, %v4292
  %v4306 = vpop.permute.xlu0 %4305
  %4307 = vset.pattern.permute.xlu0 0
  %4308 = vperm.xlu0 %4307, %v4293
  %v4309 = vpop.permute.xlu0 %4308
  %4310 = vset.pattern.permute.xlu0 0
  %4311 = vperm.xlu0 %4310, %v4294
  %v4312 = vpop.permute.xlu0 %4311
  %4313 = vset.pattern.permute.xlu0 0
  %4314 = vperm.xlu0 %4313, %v4295
  %v4315 = vpop.permute.xlu0 %4314
  %4316 = vset.pattern.permute.xlu0 0
  %4317 = vperm.xlu0 %4316, %v4296
  %v4318 = vpop.permute.xlu0 %4317
  %4319 = vset.pattern.permute.xlu0 0
  %4320 = vperm.xlu0 %4319, %v4297
  %v4321 = vpop.permute.xlu0 %4320
  %vm4322 = vcmp.eq.s32.totalorder %v4300, 1
  %vm4323 = vcmp.eq.s32.totalorder %v4303, 1
  %vm4324 = vcmp.eq.s32.totalorder %v4306, 1
  %vm4325 = vcmp.eq.s32.totalorder %v4309, 1
  %vm4326 = vcmp.eq.s32.totalorder %v4312, 1
  %vm4327 = vcmp.eq.s32.totalorder %v4315, 1
  %vm4328 = vcmp.eq.s32.totalorder %v4318, 1
  %vm4329 = vcmp.eq.s32.totalorder %v4321, 1
  %v4330 = vsel %vm4322, %v4274, %v3928
  %v4331 = vsel %vm4323, %v4275, %v3929
  %v4332 = vsel %vm4324, %v4276, %v3930
  %v4333 = vsel %vm4325, %v4277, %v3931
  %v4334 = vsel %vm4326, %v4278, %v3932
  %v4335 = vsel %vm4327, %v4279, %v3933
  %v4336 = vsel %vm4328, %v4280, %v3934
  %v4337 = vsel %vm4329, %v4281, %v3935
  %v4338 = vld [vmem:[%s2] sm:$0xff]
  %v4339 = vld [vmem:[%s6] sm:$0xff]
  %v4340 = vld [vmem:[%s6 + $0x8] sm:$0xff]
  %v4341 = vld [vmem:[%s6 + $0x10] sm:$0xff]
  %v4342 = vld [vmem:[%s6 + $0x18] sm:$0xff]
  %v4343 = vld [vmem:[%s8] sm:$0x1]
  %v4345 = vlaneseq
  %v4346 = vshrl.u32 %v4345, 7
  %v4347 = vsub.s32 0, %v4346
  %v4348 = vrot.slane %v4343, %v4347
  %4358 = vrot.lane.b32.xlu0 %v4330, 32
  %v4359 = vpop.permute.xlu0 %4358
  %4360 = vrot.lane.b32.xlu0 %v4331, 32
  %v4361 = vpop.permute.xlu0 %4360
  %4362 = vrot.lane.b32.xlu0 %v4332, 32
  %v4363 = vpop.permute.xlu0 %4362
  %4364 = vrot.lane.b32.xlu0 %v4333, 32
  %v4365 = vpop.permute.xlu0 %4364
  %4366 = vrot.lane.b32.xlu0 %v4334, 32
  %v4367 = vpop.permute.xlu0 %4366
  %4368 = vrot.lane.b32.xlu0 %v4335, 32
  %v4369 = vpop.permute.xlu0 %4368
  %4370 = vrot.lane.b32.xlu0 %v4336, 32
  %v4371 = vpop.permute.xlu0 %4370
  %4372 = vrot.lane.b32.xlu0 %v4337, 32
  %v4373 = vpop.permute.xlu0 %4372
  %v4374 = vsel %vm1167, %v4359, 0
  %v4376 = vsel %vm1167, %v4361, 0
  %v4378 = vsel %vm1167, %v4363, 0
  %v4380 = vsel %vm1167, %v4365, 0
  %v4382 = vsel %vm1167, %v4367, 0
  %v4384 = vsel %vm1167, %v4369, 0
  %v4386 = vsel %vm1167, %v4371, 0
  %v4388 = vsel %vm1167, %v4373, 0
  %4390 = vmatprep.subr.mxu0 0.0
  %4391 = vmatpush1.msra.mxu0 %v4339
  %4392 = vmatprep.subr.mxu0 0.0
  %4393 = vmatpush1.msra.mxu0 %v4340
  %4394 = vmatprep.subr.mxu0 0.0
  %4395 = vmatpush1.msra.mxu0 %v4341
  %4396 = vmatprep.subr.mxu0 0.0
  %4397 = vmatpush1.msra.mxu0 %v4342
  %4398 = vmatprep.subr.mxu0 0.0
  %4399 = vmatpush1.msra.mxu0 0.0
  %4400 = vmatprep.subr.mxu0 0.0
  %4401 = vmatpush1.msra.mxu0 0.0
  %4402 = vmatprep.subr.mxu0 0.0
  %4403 = vmatpush1.msra.mxu0 0.0
  %4404 = vmatprep.subr.mxu0 0.0
  %4405 = vmatpush1.msra.mxu0 0.0
  %4406 = vmatprep.subr.mxu0 0.0
  %4407 = vmatpush1.msra.mxu0 0.0
  %4408 = vmatprep.subr.mxu0 0.0
  %4409 = vmatpush1.msra.mxu0 0.0
  %4410 = vmatprep.subr.mxu0 0.0
  %4411 = vmatpush1.msra.mxu0 0.0
  %4412 = vmatprep.subr.mxu0 0.0
  %4413 = vmatpush1.msra.mxu0 0.0
  %4414 = vmatprep.subr.mxu0 0.0
  %4415 = vmatpush1.msra.mxu0 0.0
  %4416 = vmatprep.subr.mxu0 0.0
  %4417 = vmatpush1.msra.mxu0 0.0
  %4418 = vmatprep.subr.mxu0 0.0
  %4419 = vmatpush1.msra.mxu0 0.0
  %4420 = vmatprep.subr.mxu0 0.0
  %4421 = vmatpush1.msra.mxu0 0.0
  %4422 = vmatprep.subr.mxu0 0.0
  %4423 = vmatpush1.msra.mxu0 0.0
  %4424 = vmatprep.subr.mxu0 0.0
  %4425 = vmatpush1.msra.mxu0 0.0
  %4426 = vmatprep.subr.mxu0 0.0
  %4427 = vmatpush1.msra.mxu0 0.0
  %4428 = vmatprep.subr.mxu0 0.0
  %4429 = vmatpush1.msra.mxu0 0.0
  %4430 = vmatprep.subr.mxu0 0.0
  %4431 = vmatpush1.msra.mxu0 0.0
  %4432 = vmatprep.subr.mxu0 0.0
  %4433 = vmatpush1.msra.mxu0 0.0
  %4434 = vmatprep.subr.mxu0 0.0
  %4435 = vmatpush1.msra.mxu0 0.0
  %4436 = vmatprep.subr.mxu0 0.0
  %4437 = vmatpush1.msra.mxu0 0.0
  %4438 = vmatprep.subr.mxu0 0.0
  %4439 = vmatpush1.msra.mxu0 0.0
  %4440 = vmatprep.subr.mxu0 0.0
  %4441 = vmatpush1.msra.mxu0 0.0
  %4442 = vmatprep.subr.mxu0 0.0
  %4443 = vmatpush1.msra.mxu0 0.0
  %4444 = vmatprep.subr.mxu0 0.0
  %4445 = vmatpush1.msra.mxu0 0.0
  %4446 = vmatprep.subr.mxu0 0.0
  %4447 = vmatpush1.msra.mxu0 0.0
  %4448 = vmatprep.subr.mxu0 0.0
  %4449 = vmatpush1.msra.mxu0 0.0
  %4450 = vmatprep.subr.mxu0 0.0
  %4451 = vmatpush1.msra.mxu0 0.0
  %4452 = vmatprep.subr.mxu0 0.0
  %4453 = vmatpush1.msra.mxu0 0.0
  %4454 = vmatprep.mubr.f32.mxu0 0.0
  %4455 = vmatmul.mubr.f32.gmra.mrb[0].mxu0 %v4374
  %v4456 = vpop.f32.mrb[0].mxu0
  %v4457 = vadd.f32 %v4348, %v4456
  %v4458 = vpop.f32.mrb[0].mxu0
  %4459 = vmatprep.mubr.f32.mxu0 0.0
  %4460 = vmatmul.mubr.f32.gmra.mrb[0].mxu0 %v4376
  %v4461 = vpop.f32.mrb[0].mxu0
  %v4462 = vadd.f32 %v4348, %v4461
  %v4463 = vpop.f32.mrb[0].mxu0
  %4464 = vmatprep.mubr.f32.mxu0 0.0
  %4465 = vmatmul.mubr.f32.gmra.mrb[0].mxu0 %v4378
  %v4466 = vpop.f32.mrb[0].mxu0
  %v4467 = vadd.f32 %v4348, %v4466
  %v4468 = vpop.f32.mrb[0].mxu0
  %4469 = vmatprep.mubr.f32.mxu0 0.0
  %4470 = vmatmul.mubr.f32.gmra.mrb[0].mxu0 %v4380
  %v4471 = vpop.f32.mrb[0].mxu0
  %v4472 = vadd.f32 %v4348, %v4471
  %v4473 = vpop.f32.mrb[0].mxu0
  %4474 = vmatprep.mubr.f32.mxu0 0.0
  %4475 = vmatmul.mubr.f32.gmra.mrb[0].mxu0 %v4382
  %v4476 = vpop.f32.mrb[0].mxu0
  %v4477 = vadd.f32 %v4348, %v4476
  %v4478 = vpop.f32.mrb[0].mxu0
  %4479 = vmatprep.mubr.f32.mxu0 0.0
  %4480 = vmatmul.mubr.f32.gmra.mrb[0].mxu0 %v4384
  %v4481 = vpop.f32.mrb[0].mxu0
  %v4482 = vadd.f32 %v4348, %v4481
  %v4483 = vpop.f32.mrb[0].mxu0
  %4484 = vmatprep.mubr.f32.mxu0 0.0
  %4485 = vmatmul.mubr.f32.gmra.mrb[0].mxu0 %v4386
  %v4486 = vpop.f32.mrb[0].mxu0
  %v4487 = vadd.f32 %v4348, %v4486
  %v4488 = vpop.f32.mrb[0].mxu0
  %4489 = vmatprep.mubr.f32.mxu0 0.0
  %4490 = vmatmul.mubr.f32.gmra.mrb[0].mxu0 %v4388
  %v4491 = vpop.f32.mrb[0].mxu0
  %v4492 = vadd.f32 %v4348, %v4491
  %v4493 = vpop.f32.mrb[0].mxu0
  %4494 = vdwg.mxu0
  %4495 = vst [vmem:[#allocation3] sm:$0xff] %v4457
  %4496 = vst [vmem:[#allocation3 + $0x8] sm:$0xff] %v4462
  %4497 = vst [vmem:[#allocation3 + $0x10] sm:$0xff] %v4467
  %4498 = vst [vmem:[#allocation3 + $0x18] sm:$0xff] %v4472
  %4499 = vst [vmem:[#allocation3 + $0x20] sm:$0xff] %v4477
  %4500 = vst [vmem:[#allocation3 + $0x28] sm:$0xff] %v4482
  %4501 = vst [vmem:[#allocation3 + $0x30] sm:$0xff] %v4487
  %4502 = vst [vmem:[#allocation3 + $0x38] sm:$0xff] %v4492
  %v4503 = vld [vmem:[%s7] sm:$0xff]
  %v4504 = vld [vmem:[%s7 + $0x8] sm:$0xff]
  %v4505 = vld [vmem:[%s7 + $0x10] sm:$0xff]
  %v4506 = vld [vmem:[%s7 + $0x18] sm:$0xff]
  %v4507 = vld [vmem:[#allocation3] sm:$0xff]
  %4508 = vmatprep.subr.mxu0 0.0
  %4509 = vmatpush1.msra.mxu0 %v4503
  %4510 = vmatprep.subr.mxu0 0.0
  %4511 = vmatpush1.msra.mxu0 %v4504
  %4512 = vmatprep.subr.mxu0 0.0
  %4513 = vmatpush1.msra.mxu0 %v4505
  %4514 = vmatprep.subr.mxu0 0.0
  %4515 = vmatpush1.msra.mxu0 %v4506
  %4516 = vmatprep.subr.mxu0 0.0
  %4517 = vmatpush1.msra.mxu0 0.0
  %4518 = vmatprep.subr.mxu0 0.0
  %4519 = vmatpush1.msra.mxu0 0.0
  %4520 = vmatprep.subr.mxu0 0.0
  %4521 = vmatpush1.msra.mxu0 0.0
  %4522 = vmatprep.subr.mxu0 0.0
  %4523 = vmatpush1.msra.mxu0 0.0
  %4524 = vmatprep.subr.mxu0 0.0
  %4525 = vmatpush1.msra.mxu0 0.0
  %4526 = vmatprep.subr.mxu0 0.0
  %4527 = vmatpush1.msra.mxu0 0.0
  %4528 = vmatprep.subr.mxu0 0.0
  %4529 = vmatpush1.msra.mxu0 0.0
  %4530 = vmatprep.subr.mxu0 0.0
  %4531 = vmatpush1.msra.mxu0 0.0
  %4532 = vmatprep.subr.mxu0 0.0
  %4533 = vmatpush1.msra.mxu0 0.0
  %4534 = vmatprep.subr.mxu0 0.0
  %4535 = vmatpush1.msra.mxu0 0.0
  %4536 = vmatprep.subr.mxu0 0.0
  %4537 = vmatpush1.msra.mxu0 0.0
  %4538 = vmatprep.subr.mxu0 0.0
  %4539 = vmatpush1.msra.mxu0 0.0
  %4540 = vmatprep.subr.mxu0 0.0
  %4541 = vmatpush1.msra.mxu0 0.0
  %4542 = vmatprep.subr.mxu0 0.0
  %4543 = vmatpush1.msra.mxu0 0.0
  %4544 = vmatprep.subr.mxu0 0.0
  %4545 = vmatpush1.msra.mxu0 0.0
  %4546 = vmatprep.subr.mxu0 0.0
  %4547 = vmatpush1.msra.mxu0 0.0
  %4548 = vmatprep.subr.mxu0 0.0
  %4549 = vmatpush1.msra.mxu0 0.0
  %4550 = vmatprep.subr.mxu0 0.0
  %4551 = vmatpush1.msra.mxu0 0.0
  %4552 = vmatprep.subr.mxu0 0.0
  %4553 = vmatpush1.msra.mxu0 0.0
  %4554 = vmatprep.subr.mxu0 0.0
  %4555 = vmatpush1.msra.mxu0 0.0
  %4556 = vmatprep.subr.mxu0 0.0
  %4557 = vmatpush1.msra.mxu0 0.0
  %4558 = vmatprep.subr.mxu0 0.0
  %4559 = vmatpush1.msra.mxu0 0.0
  %4560 = vmatprep.subr.mxu0 0.0
  %4561 = vmatpush1.msra.mxu0 0.0
  %4562 = vmatprep.subr.mxu0 0.0
  %4563 = vmatpush1.msra.mxu0 0.0
  %4564 = vmatprep.subr.mxu0 0.0
  %4565 = vmatpush1.msra.mxu0 0.0
  %4566 = vmatprep.subr.mxu0 0.0
  %4567 = vmatpush1.msra.mxu0 0.0
  %4568 = vmatprep.subr.mxu0 0.0
  %4569 = vmatpush1.msra.mxu0 0.0
  %4570 = vmatprep.subr.mxu0 0.0
  %4571 = vmatpush1.msra.mxu0 0.0
  %4572 = vmatprep.mubr.f32.mxu0 0.0
  %4573 = vmatmul.mubr.f32.gmra.mrb[0].mxu0 %v1169
  %v4574 = vpop.f32.mrb[0].mxu0
  %v4575 = vadd.f32 0.0, %v4574
  %v4576 = vpop.f32.mrb[0].mxu0
  %4577 = vdwg.mxu0
  %v4578 = vadd.f32 %v4507, %v4575
  %v4579 = vsub.f32 0.0, %v4578
  %v4580 = vmul.f32 %v4579, 1.442695
  %v4581 = vpow.pop %v4580
  %v4582 = vadd.f32 %v4581, 1.0
  %v4583 = vrcp.pop %v4582
  %v4584 = vtanh.pop %v4578
  %v4585 = vmul.f32 %v4583, 0.0
  %4587 = vrot.lane.b32.xlu0 %v4584, 64
  %v4588 = vpop.permute.xlu0 %4587
  %v4590 = vmul.f32 %v4583, %v4588
  %4592 = vrot.lane.b32.xlu0 %v4590, 32
  %v4593 = vpop.permute.xlu0 %4592
  %v4595 = vadd.f32 %v4585, %v4593
  %v4596 = vtanh.pop %v4595
  %4598 = vrot.lane.b32.xlu0 %v4596, 64
  %v4599 = vpop.permute.xlu0 %4598
  %v4601 = vmul.f32 %v4583, %v4599
  %vm4602 = vcmp.eq.s32.totalorder %v4338, 0
  %v4603 = vsel %vm4602, 1, 0
  %4604 = vset.pattern.permute.xlu0 0
  %4605 = vperm.xlu0 %4604, %v4603
  %v4606 = vpop.permute.xlu0 %4605
  %vm4607 = vcmp.eq.s32.totalorder %v4606, 1
  %v4608 = vsel %vm4607, %v4601, 0.0
  %s4609 = scalar_lea.vmem [#allocation3], 8
  %v4610 = vld [vmem:[%s4609] sm:$0xff]
  %4612 = vrot.lane.b32.xlu0 %v4601, 32
  %v4613 = vpop.permute.xlu0 %4612
  %v4614 = vsel %vm1167, %v4613, 0
  %4616 = vmatprep.subr.mxu0 0.0
  %4617 = vmatpush1.msra.mxu0 %v4503
  %4618 = vmatprep.subr.mxu0 0.0
  %4619 = vmatpush1.msra.mxu0 %v4504
  %4620 = vmatprep.subr.mxu0 0.0
  %4621 = vmatpush1.msra.mxu0 %v4505
  %4622 = vmatprep.subr.mxu0 0.0
  %4623 = vmatpush1.msra.mxu0 %v4506
  %4624 = vmatprep.subr.mxu0 0.0
  %4625 = vmatpush1.msra.mxu0 0.0
  %4626 = vmatprep.subr.mxu0 0.0
  %4627 = vmatpush1.msra.mxu0 0.0
  %4628 = vmatprep.subr.mxu0 0.0
  %4629 = vmatpush1.msra.mxu0 0.0
  %4630 = vmatprep.subr.mxu0 0.0
  %4631 = vmatpush1.msra.mxu0 0.0
  %4632 = vmatprep.subr.mxu0 0.0
  %4633 = vmatpush1.msra.mxu0 0.0
  %4634 = vmatprep.subr.mxu0 0.0
  %4635 = vmatpush1.msra.mxu0 0.0
  %4636 = vmatprep.subr.mxu0 0.0
  %4637 = vmatpush1.msra.mxu0 0.0
  %4638 = vmatprep.subr.mxu0 0.0
  %4639 = vmatpush1.msra.mxu0 0.0
  %4640 = vmatprep.subr.mxu0 0.0
  %4641 = vmatpush1.msra.mxu0 0.0
  %4642 = vmatprep.subr.mxu0 0.0
  %4643 = vmatpush1.msra.mxu0 0.0
  %4644 = vmatprep.subr.mxu0 0.0
  %4645 = vmatpush1.msra.mxu0 0.0
  %4646 = vmatprep.subr.mxu0 0.0
  %4647 = vmatpush1.msra.mxu0 0.0
  %4648 = vmatprep.subr.mxu0 0.0
  %4649 = vmatpush1.msra.mxu0 0.0
  %4650 = vmatprep.subr.mxu0 0.0
  %4651 = vmatpush1.msra.mxu0 0.0
  %4652 = vmatprep.subr.mxu0 0.0
  %4653 = vmatpush1.msra.mxu0 0.0
  %4654 = vmatprep.subr.mxu0 0.0
  %4655 = vmatpush1.msra.mxu0 0.0
  %4656 = vmatprep.subr.mxu0 0.0
  %4657 = vmatpush1.msra.mxu0 0.0
  %4658 = vmatprep.subr.mxu0 0.0
  %4659 = vmatpush1.msra.mxu0 0.0
  %4660 = vmatprep.subr.mxu0 0.0
  %4661 = vmatpush1.msra.mxu0 0.0
  %4662 = vmatprep.subr.mxu0 0.0
  %4663 = vmatpush1.msra.mxu0 0.0
  %4664 = vmatprep.subr.mxu0 0.0
  %4665 = vmatpush1.msra.mxu0 0.0
  %4666 = vmatprep.subr.mxu0 0.0
  %4667 = vmatpush1.msra.mxu0 0.0
  %4668 = vmatprep.subr.mxu0 0.0
  %4669 = vmatpush1.msra.mxu0 0.0
  %4670 = vmatprep.subr.mxu0 0.0
  %4671 = vmatpush1.msra.mxu0 0.0
  %4672 = vmatprep.subr.mxu0 0.0
  %4673 = vmatpush1.msra.mxu0 0.0
  %4674 = vmatprep.subr.mxu0 0.0
  %4675 = vmatpush1.msra.mxu0 0.0
  %4676 = vmatprep.subr.mxu0 0.0
  %4677 = vmatpush1.msra.mxu0 0.0
  %4678 = vmatprep.subr.mxu0 0.0
  %4679 = vmatpush1.msra.mxu0 0.0
  %4680 = vmatprep.mubr.f32.mxu0 0.0
  %4681 = vmatmul.mubr.f32.gmra.mrb[0].mxu0 %v4614
  %v4682 = vpop.f32.mrb[0].mxu0
  %v4683 = vadd.f32 0.0, %v4682
  %v4684 = vpop.f32.mrb[0].mxu0
  %4685 = vdwg.mxu0
  %v4686 = vadd.f32 %v4610, %v4683
  %v4687 = vsub.f32 0.0, %v4686
  %v4688 = vmul.f32 %v4687, 1.442695
  %v4689 = vpow.pop %v4688
  %v4690 = vadd.f32 %v4689, 1.0
  %v4691 = vrcp.pop %v4690
  %v4692 = vtanh.pop %v4686
  %v4693 = vmul.f32 %v4691, %v4595
  %4695 = vrot.lane.b32.xlu0 %v4692, 64
  %v4696 = vpop.permute.xlu0 %4695
  %v4698 = vmul.f32 %v4691, %v4696
  %4700 = vrot.lane.b32.xlu0 %v4698, 32
  %v4701 = vpop.permute.xlu0 %4700
  %v4703 = vadd.f32 %v4693, %v4701
  %v4704 = vtanh.pop %v4703
  %4706 = vrot.lane.b32.xlu0 %v4704, 64
  %v4707 = vpop.permute.xlu0 %4706
  %v4709 = vmul.f32 %v4691, %v4707
  %vm4710 = vcmp.eq.s32.totalorder %v4338, 1
  %v4711 = vsel %vm4710, 1, 0
  %4712 = vset.pattern.permute.xlu0 0
  %4713 = vperm.xlu0 %4712, %v4711
  %v4714 = vpop.permute.xlu0 %4713
  %vm4715 = vcmp.eq.s32.totalorder %v4714, 1
  %v4716 = vsel %vm4715, %v4709, %v4608
  %s4717 = scalar_lea.vmem [#allocation3], 16
  %v4718 = vld [vmem:[%s4717] sm:$0xff]
  %4720 = vrot.lane.b32.xlu0 %v4709, 32
  %v4721 = vpop.permute.xlu0 %4720
  %v4722 = vsel %vm1167, %v4721, 0
  %4724 = vmatprep.subr.mxu0 0.0
  %4725 = vmatpush1.msra.mxu0 %v4503
  %4726 = vmatprep.subr.mxu0 0.0
  %4727 = vmatpush1.msra.mxu0 %v4504
  %4728 = vmatprep.subr.mxu0 0.0
  %4729 = vmatpush1.msra.mxu0 %v4505
  %4730 = vmatprep.subr.mxu0 0.0
  %4731 = vmatpush1.msra.mxu0 %v4506
  %4732 = vmatprep.subr.mxu0 0.0
  %4733 = vmatpush1.msra.mxu0 0.0
  %4734 = vmatprep.subr.mxu0 0.0
  %4735 = vmatpush1.msra.mxu0 0.0
  %4736 = vmatprep.subr.mxu0 0.0
  %4737 = vmatpush1.msra.mxu0 0.0
  %4738 = vmatprep.subr.mxu0 0.0
  %4739 = vmatpush1.msra.mxu0 0.0
  %4740 = vmatprep.subr.mxu0 0.0
  %4741 = vmatpush1.msra.mxu0 0.0
  %4742 = vmatprep.subr.mxu0 0.0
  %4743 = vmatpush1.msra.mxu0 0.0
  %4744 = vmatprep.subr.mxu0 0.0
  %4745 = vmatpush1.msra.mxu0 0.0
  %4746 = vmatprep.subr.mxu0 0.0
  %4747 = vmatpush1.msra.mxu0 0.0
  %4748 = vmatprep.subr.mxu0 0.0
  %4749 = vmatpush1.msra.mxu0 0.0
  %4750 = vmatprep.subr.mxu0 0.0
  %4751 = vmatpush1.msra.mxu0 0.0
  %4752 = vmatprep.subr.mxu0 0.0
  %4753 = vmatpush1.msra.mxu0 0.0
  %4754 = vmatprep.subr.mxu0 0.0
  %4755 = vmatpush1.msra.mxu0 0.0
  %4756 = vmatprep.subr.mxu0 0.0
  %4757 = vmatpush1.msra.mxu0 0.0
  %4758 = vmatprep.subr.mxu0 0.0
  %4759 = vmatpush1.msra.mxu0 0.0
  %4760 = vmatprep.subr.mxu0 0.0
  %4761 = vmatpush1.msra.mxu0 0.0
  %4762 = vmatprep.subr.mxu0 0.0
  %4763 = vmatpush1.msra.mxu0 0.0
  %4764 = vmatprep.subr.mxu0 0.0
  %4765 = vmatpush1.msra.mxu0 0.0
  %4766 = vmatprep.subr.mxu0 0.0
  %4767 = vmatpush1.msra.mxu0 0.0
  %4768 = vmatprep.subr.mxu0 0.0
  %4769 = vmatpush1.msra.mxu0 0.0
  %4770 = vmatprep.subr.mxu0 0.0
  %4771 = vmatpush1.msra.mxu0 0.0
  %4772 = vmatprep.subr.mxu0 0.0
  %4773 = vmatpush1.msra.mxu0 0.0
  %4774 = vmatprep.subr.mxu0 0.0
  %4775 = vmatpush1.msra.mxu0 0.0
  %4776 = vmatprep.subr.mxu0 0.0
  %4777 = vmatpush1.msra.mxu0 0.0
  %4778 = vmatprep.subr.mxu0 0.0
  %4779 = vmatpush1.msra.mxu0 0.0
  %4780 = vmatprep.subr.mxu0 0.0
  %4781 = vmatpush1.msra.mxu0 0.0
  %4782 = vmatprep.subr.mxu0 0.0
  %4783 = vmatpush1.msra.mxu0 0.0
  %4784 = vmatprep.subr.mxu0 0.0
  %4785 = vmatpush1.msra.mxu0 0.0
  %4786 = vmatprep.subr.mxu0 0.0
  %4787 = vmatpush1.msra.mxu0 0.0
  %4788 = vmatprep.mubr.f32.mxu0 0.0
  %4789 = vmatmul.mubr.f32.gmra.mrb[0].mxu0 %v4722
  %v4790 = vpop.f32.mrb[0].mxu0
  %v4791 = vadd.f32 0.0, %v4790
  %v4792 = vpop.f32.mrb[0].mxu0
  %4793 = vdwg.mxu0
  %v4794 = vadd.f32 %v4718, %v4791
  %v4795 = vsub.f32 0.0, %v4794
  %v4796 = vmul.f32 %v4795, 1.442695
  %v4797 = vpow.pop %v4796
  %v4798 = vadd.f32 %v4797, 1.0
  %v4799 = vrcp.pop %v4798
  %v4800 = vtanh.pop %v4794
  %v4801 = vmul.f32 %v4799, %v4703
  %4803 = vrot.lane.b32.xlu0 %v4800, 64
  %v4804 = vpop.permute.xlu0 %4803
  %v4806 = vmul.f32 %v4799, %v4804
  %4808 = vrot.lane.b32.xlu0 %v4806, 32
  %v4809 = vpop.permute.xlu0 %4808
  %v4811 = vadd.f32 %v4801, %v4809
  %v4812 = vtanh.pop %v4811
  %4814 = vrot.lane.b32.xlu0 %v4812, 64
  %v4815 = vpop.permute.xlu0 %4814
  %v4817 = vmul.f32 %v4799, %v4815
  %vm4818 = vcmp.eq.s32.totalorder %v4338, 2
  %v4819 = vsel %vm4818, 1, 0
  %4820 = vset.pattern.permute.xlu0 0
  %4821 = vperm.xlu0 %4820, %v4819
  %v4822 = vpop.permute.xlu0 %4821
  %vm4823 = vcmp.eq.s32.totalorder %v4822, 1
  %v4824 = vsel %vm4823, %v4817, %v4716
  %s4825 = scalar_lea.vmem [#allocation3], 24
  %v4826 = vld [vmem:[%s4825] sm:$0xff]
  %4828 = vrot.lane.b32.xlu0 %v4817, 32
  %v4829 = vpop.permute.xlu0 %4828
  %v4830 = vsel %vm1167, %v4829, 0
  %4832 = vmatprep.subr.mxu0 0.0
  %4833 = vmatpush1.msra.mxu0 %v4503
  %4834 = vmatprep.subr.mxu0 0.0
  %4835 = vmatpush1.msra.mxu0 %v4504
  %4836 = vmatprep.subr.mxu0 0.0
  %4837 = vmatpush1.msra.mxu0 %v4505
  %4838 = vmatprep.subr.mxu0 0.0
  %4839 = vmatpush1.msra.mxu0 %v4506
  %4840 = vmatprep.subr.mxu0 0.0
  %4841 = vmatpush1.msra.mxu0 0.0
  %4842 = vmatprep.subr.mxu0 0.0
  %4843 = vmatpush1.msra.mxu0 0.0
  %4844 = vmatprep.subr.mxu0 0.0
  %4845 = vmatpush1.msra.mxu0 0.0
  %4846 = vmatprep.subr.mxu0 0.0
  %4847 = vmatpush1.msra.mxu0 0.0
  %4848 = vmatprep.subr.mxu0 0.0
  %4849 = vmatpush1.msra.mxu0 0.0
  %4850 = vmatprep.subr.mxu0 0.0
  %4851 = vmatpush1.msra.mxu0 0.0
  %4852 = vmatprep.subr.mxu0 0.0
  %4853 = vmatpush1.msra.mxu0 0.0
  %4854 = vmatprep.subr.mxu0 0.0
  %4855 = vmatpush1.msra.mxu0 0.0
  %4856 = vmatprep.subr.mxu0 0.0
  %4857 = vmatpush1.msra.mxu0 0.0
  %4858 = vmatprep.subr.mxu0 0.0
  %4859 = vmatpush1.msra.mxu0 0.0
  %4860 = vmatprep.subr.mxu0 0.0
  %4861 = vmatpush1.msra.mxu0 0.0
  %4862 = vmatprep.subr.mxu0 0.0
  %4863 = vmatpush1.msra.mxu0 0.0
  %4864 = vmatprep.subr.mxu0 0.0
  %4865 = vmatpush1.msra.mxu0 0.0
  %4866 = vmatprep.subr.mxu0 0.0
  %4867 = vmatpush1.msra.mxu0 0.0
  %4868 = vmatprep.subr.mxu0 0.0
  %4869 = vmatpush1.msra.mxu0 0.0
  %4870 = vmatprep.subr.mxu0 0.0
  %4871 = vmatpush1.msra.mxu0 0.0
  %4872 = vmatprep.subr.mxu0 0.0
  %4873 = vmatpush1.msra.mxu0 0.0
  %4874 = vmatprep.subr.mxu0 0.0
  %4875 = vmatpush1.msra.mxu0 0.0
  %4876 = vmatprep.subr.mxu0 0.0
  %4877 = vmatpush1.msra.mxu0 0.0
  %4878 = vmatprep.subr.mxu0 0.0
  %4879 = vmatpush1.msra.mxu0 0.0
  %4880 = vmatprep.subr.mxu0 0.0
  %4881 = vmatpush1.msra.mxu0 0.0
  %4882 = vmatprep.subr.mxu0 0.0
  %4883 = vmatpush1.msra.mxu0 0.0
  %4884 = vmatprep.subr.mxu0 0.0
  %4885 = vmatpush1.msra.mxu0 0.0
  %4886 = vmatprep.subr.mxu0 0.0
  %4887 = vmatpush1.msra.mxu0 0.0
  %4888 = vmatprep.subr.mxu0 0.0
  %4889 = vmatpush1.msra.mxu0 0.0
  %4890 = vmatprep.subr.mxu0 0.0
  %4891 = vmatpush1.msra.mxu0 0.0
  %4892 = vmatprep.subr.mxu0 0.0
  %4893 = vmatpush1.msra.mxu0 0.0
  %4894 = vmatprep.subr.mxu0 0.0
  %4895 = vmatpush1.msra.mxu0 0.0
  %4896 = vmatprep.mubr.f32.mxu0 0.0
  %4897 = vmatmul.mubr.f32.gmra.mrb[0].mxu0 %v4830
  %v4898 = vpop.f32.mrb[0].mxu0
  %v4899 = vadd.f32 0.0, %v4898
  %v4900 = vpop.f32.mrb[0].mxu0
  %4901 = vdwg.mxu0
  %v4902 = vadd.f32 %v4826, %v4899
  %v4903 = vsub.f32 0.0, %v4902
  %v4904 = vmul.f32 %v4903, 1.442695
  %v4905 = vpow.pop %v4904
  %v4906 = vadd.f32 %v4905, 1.0
  %v4907 = vrcp.pop %v4906
  %v4908 = vtanh.pop %v4902
  %v4909 = vmul.f32 %v4907, %v4811
  %4911 = vrot.lane.b32.xlu0 %v4908, 64
  %v4912 = vpop.permute.xlu0 %4911
  %v4914 = vmul.f32 %v4907, %v4912
  %4916 = vrot.lane.b32.xlu0 %v4914, 32
  %v4917 = vpop.permute.xlu0 %4916
  %v4919 = vadd.f32 %v4909, %v4917
  %v4920 = vtanh.pop %v4919
  %4922 = vrot.lane.b32.xlu0 %v4920, 64
  %v4923 = vpop.permute.xlu0 %4922
  %v4925 = vmul.f32 %v4907, %v4923
  %vm4926 = vcmp.eq.s32.totalorder %v4338, 3
  %v4927 = vsel %vm4926, 1, 0
  %4928 = vset.pattern.permute.xlu0 0
  %4929 = vperm.xlu0 %4928, %v4927
  %v4930 = vpop.permute.xlu0 %4929
  %vm4931 = vcmp.eq.s32.totalorder %v4930, 1
  %v4932 = vsel %vm4931, %v4925, %v4824
  %s4933 = scalar_lea.vmem [#allocation3], 32
  %v4934 = vld [vmem:[%s4933] sm:$0xff]
  %4936 = vrot.lane.b32.xlu0 %v4925, 32
  %v4937 = vpop.permute.xlu0 %4936
  %v4938 = vsel %vm1167, %v4937, 0
  %4940 = vmatprep.subr.mxu0 0.0
  %4941 = vmatpush1.msra.mxu0 %v4503
  %4942 = vmatprep.subr.mxu0 0.0
  %4943 = vmatpush1.msra.mxu0 %v4504
  %4944 = vmatprep.subr.mxu0 0.0
  %4945 = vmatpush1.msra.mxu0 %v4505
  %4946 = vmatprep.subr.mxu0 0.0
  %4947 = vmatpush1.msra.mxu0 %v4506
  %4948 = vmatprep.subr.mxu0 0.0
  %4949 = vmatpush1.msra.mxu0 0.0
  %4950 = vmatprep.subr.mxu0 0.0
  %4951 = vmatpush1.msra.mxu0 0.0
  %4952 = vmatprep.subr.mxu0 0.0
  %4953 = vmatpush1.msra.mxu0 0.0
  %4954 = vmatprep.subr.mxu0 0.0
  %4955 = vmatpush1.msra.mxu0 0.0
  %4956 = vmatprep.subr.mxu0 0.0
  %4957 = vmatpush1.msra.mxu0 0.0
  %4958 = vmatprep.subr.mxu0 0.0
  %4959 = vmatpush1.msra.mxu0 0.0
  %4960 = vmatprep.subr.mxu0 0.0
  %4961 = vmatpush1.msra.mxu0 0.0
  %4962 = vmatprep.subr.mxu0 0.0
  %4963 = vmatpush1.msra.mxu0 0.0
  %4964 = vmatprep.subr.mxu0 0.0
  %4965 = vmatpush1.msra.mxu0 0.0
  %4966 = vmatprep.subr.mxu0 0.0
  %4967 = vmatpush1.msra.mxu0 0.0
  %4968 = vmatprep.subr.mxu0 0.0
  %4969 = vmatpush1.msra.mxu0 0.0
  %4970 = vmatprep.subr.mxu0 0.0
  %4971 = vmatpush1.msra.mxu0 0.0
  %4972 = vmatprep.subr.mxu0 0.0
  %4973 = vmatpush1.msra.mxu0 0.0
  %4974 = vmatprep.subr.mxu0 0.0
  %4975 = vmatpush1.msra.mxu0 0.0
  %4976 = vmatprep.subr.mxu0 0.0
  %4977 = vmatpush1.msra.mxu0 0.0
  %4978 = vmatprep.subr.mxu0 0.0
  %4979 = vmatpush1.msra.mxu0 0.0
  %4980 = vmatprep.subr.mxu0 0.0
  %4981 = vmatpush1.msra.mxu0 0.0
  %4982 = vmatprep.subr.mxu0 0.0
  %4983 = vmatpush1.msra.mxu0 0.0
  %4984 = vmatprep.subr.mxu0 0.0
  %4985 = vmatpush1.msra.mxu0 0.0
  %4986 = vmatprep.subr.mxu0 0.0
  %4987 = vmatpush1.msra.mxu0 0.0
  %4988 = vmatprep.subr.mxu0 0.0
  %4989 = vmatpush1.msra.mxu0 0.0
  %4990 = vmatprep.subr.mxu0 0.0
  %4991 = vmatpush1.msra.mxu0 0.0
  %4992 = vmatprep.subr.mxu0 0.0
  %4993 = vmatpush1.msra.mxu0 0.0
  %4994 = vmatprep.subr.mxu0 0.0
  %4995 = vmatpush1.msra.mxu0 0.0
  %4996 = vmatprep.subr.mxu0 0.0
  %4997 = vmatpush1.msra.mxu0 0.0
  %4998 = vmatprep.subr.mxu0 0.0
  %4999 = vmatpush1.msra.mxu0 0.0
  %5000 = vmatprep.subr.mxu0 0.0
  %5001 = vmatpush1.msra.mxu0 0.0
  %5002 = vmatprep.subr.mxu0 0.0
  %5003 = vmatpush1.msra.mxu0 0.0
  %5004 = vmatprep.mubr.f32.mxu0 0.0
  %5005 = vmatmul.mubr.f32.gmra.mrb[0].mxu0 %v4938
  %v5006 = vpop.f32.mrb[0].mxu0
  %v5007 = vadd.f32 0.0, %v5006
  %v5008 = vpop.f32.mrb[0].mxu0
  %5009 = vdwg.mxu0
  %v5010 = vadd.f32 %v4934, %v5007
  %v5011 = vsub.f32 0.0, %v5010
  %v5012 = vmul.f32 %v5011, 1.442695
  %v5013 = vpow.pop %v5012
  %v5014 = vadd.f32 %v5013, 1.0
  %v5015 = vrcp.pop %v5014
  %v5016 = vtanh.pop %v5010
  %v5017 = vmul.f32 %v5015, %v4919
  %5019 = vrot.lane.b32.xlu0 %v5016, 64
  %v5020 = vpop.permute.xlu0 %5019
  %v5022 = vmul.f32 %v5015, %v5020
  %5024 = vrot.lane.b32.xlu0 %v5022, 32
  %v5025 = vpop.permute.xlu0 %5024
  %v5027 = vadd.f32 %v5017, %v5025
  %v5028 = vtanh.pop %v5027
  %5030 = vrot.lane.b32.xlu0 %v5028, 64
  %v5031 = vpop.permute.xlu0 %5030
  %v5033 = vmul.f32 %v5015, %v5031
  %vm5034 = vcmp.eq.s32.totalorder %v4338, 4
  %v5035 = vsel %vm5034, 1, 0
  %5036 = vset.pattern.permute.xlu0 0
  %5037 = vperm.xlu0 %5036, %v5035
  %v5038 = vpop.permute.xlu0 %5037
  %vm5039 = vcmp.eq.s32.totalorder %v5038, 1
  %v5040 = vsel %vm5039, %v5033, %v4932
  %s5041 = scalar_lea.vmem [#allocation3], 40
  %v5042 = vld [vmem:[%s5041] sm:$0xff]
  %5044 = vrot.lane.b32.xlu0 %v5033, 32
  %v5045 = vpop.permute.xlu0 %5044
  %v5046 = vsel %vm1167, %v5045, 0
  %5048 = vmatprep.subr.mxu0 0.0
  %5049 = vmatpush1.msra.mxu0 %v4503
  %5050 = vmatprep.subr.mxu0 0.0
  %5051 = vmatpush1.msra.mxu0 %v4504
  %5052 = vmatprep.subr.mxu0 0.0
  %5053 = vmatpush1.msra.mxu0 %v4505
  %5054 = vmatprep.subr.mxu0 0.0
  %5055 = vmatpush1.msra.mxu0 %v4506
  %5056 = vmatprep.subr.mxu0 0.0
  %5057 = vmatpush1.msra.mxu0 0.0
  %5058 = vmatprep.subr.mxu0 0.0
  %5059 = vmatpush1.msra.mxu0 0.0
  %5060 = vmatprep.subr.mxu0 0.0
  %5061 = vmatpush1.msra.mxu0 0.0
  %5062 = vmatprep.subr.mxu0 0.0
  %5063 = vmatpush1.msra.mxu0 0.0
  %5064 = vmatprep.subr.mxu0 0.0
  %5065 = vmatpush1.msra.mxu0 0.0
  %5066 = vmatprep.subr.mxu0 0.0
  %5067 = vmatpush1.msra.mxu0 0.0
  %5068 = vmatprep.subr.mxu0 0.0
  %5069 = vmatpush1.msra.mxu0 0.0
  %5070 = vmatprep.subr.mxu0 0.0
  %5071 = vmatpush1.msra.mxu0 0.0
  %5072 = vmatprep.subr.mxu0 0.0
  %5073 = vmatpush1.msra.mxu0 0.0
  %5074 = vmatprep.subr.mxu0 0.0
  %5075 = vmatpush1.msra.mxu0 0.0
  %5076 = vmatprep.subr.mxu0 0.0
  %5077 = vmatpush1.msra.mxu0 0.0
  %5078 = vmatprep.subr.mxu0 0.0
  %5079 = vmatpush1.msra.mxu0 0.0
  %5080 = vmatprep.subr.mxu0 0.0
  %5081 = vmatpush1.msra.mxu0 0.0
  %5082 = vmatprep.subr.mxu0 0.0
  %5083 = vmatpush1.msra.mxu0 0.0
  %5084 = vmatprep.subr.mxu0 0.0
  %5085 = vmatpush1.msra.mxu0 0.0
  %5086 = vmatprep.subr.mxu0 0.0
  %5087 = vmatpush1.msra.mxu0 0.0
  %5088 = vmatprep.subr.mxu0 0.0
  %5089 = vmatpush1.msra.mxu0 0.0
  %5090 = vmatprep.subr.mxu0 0.0
  %5091 = vmatpush1.msra.mxu0 0.0
  %5092 = vmatprep.subr.mxu0 0.0
  %5093 = vmatpush1.msra.mxu0 0.0
  %5094 = vmatprep.subr.mxu0 0.0
  %5095 = vmatpush1.msra.mxu0 0.0
  %5096 = vmatprep.subr.mxu0 0.0
  %5097 = vmatpush1.msra.mxu0 0.0
  %5098 = vmatprep.subr.mxu0 0.0
  %5099 = vmatpush1.msra.mxu0 0.0
  %5100 = vmatprep.subr.mxu0 0.0
  %5101 = vmatpush1.msra.mxu0 0.0
  %5102 = vmatprep.subr.mxu0 0.0
  %5103 = vmatpush1.msra.mxu0 0.0
  %5104 = vmatprep.subr.mxu0 0.0
  %5105 = vmatpush1.msra.mxu0 0.0
  %5106 = vmatprep.subr.mxu0 0.0
  %5107 = vmatpush1.msra.mxu0 0.0
  %5108 = vmatprep.subr.mxu0 0.0
  %5109 = vmatpush1.msra.mxu0 0.0
  %5110 = vmatprep.subr.mxu0 0.0
  %5111 = vmatpush1.msra.mxu0 0.0
  %5112 = vmatprep.mubr.f32.mxu0 0.0
  %5113 = vmatmul.mubr.f32.gmra.mrb[0].mxu0 %v5046
  %v5114 = vpop.f32.mrb[0].mxu0
  %v5115 = vadd.f32 0.0, %v5114
  %v5116 = vpop.f32.mrb[0].mxu0
  %5117 = vdwg.mxu0
  %v5118 = vadd.f32 %v5042, %v5115
  %v5119 = vsub.f32 0.0, %v5118
  %v5120 = vmul.f32 %v5119, 1.442695
  %v5121 = vpow.pop %v5120
  %v5122 = vadd.f32 %v5121, 1.0
  %v5123 = vrcp.pop %v5122
  %v5124 = vtanh.pop %v5118
  %v5125 = vmul.f32 %v5123, %v5027
  %5127 = vrot.lane.b32.xlu0 %v5124, 64
  %v5128 = vpop.permute.xlu0 %5127
  %v5130 = vmul.f32 %v5123, %v5128
  %5132 = vrot.lane.b32.xlu0 %v5130, 32
  %v5133 = vpop.permute.xlu0 %5132
  %v5135 = vadd.f32 %v5125, %v5133
  %v5136 = vtanh.pop %v5135
  %5138 = vrot.lane.b32.xlu0 %v5136, 64
  %v5139 = vpop.permute.xlu0 %5138
  %v5141 = vmul.f32 %v5123, %v5139
  %vm5142 = vcmp.eq.s32.totalorder %v4338, 5
  %v5143 = vsel %vm5142, 1, 0
  %5144 = vset.pattern.permute.xlu0 0
  %5145 = vperm.xlu0 %5144, %v5143
  %v5146 = vpop.permute.xlu0 %5145
  %vm5147 = vcmp.eq.s32.totalorder %v5146, 1
  %v5148 = vsel %vm5147, %v5141, %v5040
  %s5149 = scalar_lea.vmem [#allocation3], 48
  %v5150 = vld [vmem:[%s5149] sm:$0xff]
  %5152 = vrot.lane.b32.xlu0 %v5141, 32
  %v5153 = vpop.permute.xlu0 %5152
  %v5154 = vsel %vm1167, %v5153, 0
  %5156 = vmatprep.subr.mxu0 0.0
  %5157 = vmatpush1.msra.mxu0 %v4503
  %5158 = vmatprep.subr.mxu0 0.0
  %5159 = vmatpush1.msra.mxu0 %v4504
  %5160 = vmatprep.subr.mxu0 0.0
  %5161 = vmatpush1.msra.mxu0 %v4505
  %5162 = vmatprep.subr.mxu0 0.0
  %5163 = vmatpush1.msra.mxu0 %v4506
  %5164 = vmatprep.subr.mxu0 0.0
  %5165 = vmatpush1.msra.mxu0 0.0
  %5166 = vmatprep.subr.mxu0 0.0
  %5167 = vmatpush1.msra.mxu0 0.0
  %5168 = vmatprep.subr.mxu0 0.0
  %5169 = vmatpush1.msra.mxu0 0.0
  %5170 = vmatprep.subr.mxu0 0.0
  %5171 = vmatpush1.msra.mxu0 0.0
  %5172 = vmatprep.subr.mxu0 0.0
  %5173 = vmatpush1.msra.mxu0 0.0
  %5174 = vmatprep.subr.mxu0 0.0
  %5175 = vmatpush1.msra.mxu0 0.0
  %5176 = vmatprep.subr.mxu0 0.0
  %5177 = vmatpush1.msra.mxu0 0.0
  %5178 = vmatprep.subr.mxu0 0.0
  %5179 = vmatpush1.msra.mxu0 0.0
  %5180 = vmatprep.subr.mxu0 0.0
  %5181 = vmatpush1.msra.mxu0 0.0
  %5182 = vmatprep.subr.mxu0 0.0
  %5183 = vmatpush1.msra.mxu0 0.0
  %5184 = vmatprep.subr.mxu0 0.0
  %5185 = vmatpush1.msra.mxu0 0.0
  %5186 = vmatprep.subr.mxu0 0.0
  %5187 = vmatpush1.msra.mxu0 0.0
  %5188 = vmatprep.subr.mxu0 0.0
  %5189 = vmatpush1.msra.mxu0 0.0
  %5190 = vmatprep.subr.mxu0 0.0
  %5191 = vmatpush1.msra.mxu0 0.0
  %5192 = vmatprep.subr.mxu0 0.0
  %5193 = vmatpush1.msra.mxu0 0.0
  %5194 = vmatprep.subr.mxu0 0.0
  %5195 = vmatpush1.msra.mxu0 0.0
  %5196 = vmatprep.subr.mxu0 0.0
  %5197 = vmatpush1.msra.mxu0 0.0
  %5198 = vmatprep.subr.mxu0 0.0
  %5199 = vmatpush1.msra.mxu0 0.0
  %5200 = vmatprep.subr.mxu0 0.0
  %5201 = vmatpush1.msra.mxu0 0.0
  %5202 = vmatprep.subr.mxu0 0.0
  %5203 = vmatpush1.msra.mxu0 0.0
  %5204 = vmatprep.subr.mxu0 0.0
  %5205 = vmatpush1.msra.mxu0 0.0
  %5206 = vmatprep.subr.mxu0 0.0
  %5207 = vmatpush1.msra.mxu0 0.0
  %5208 = vmatprep.subr.mxu0 0.0
  %5209 = vmatpush1.msra.mxu0 0.0
  %5210 = vmatprep.subr.mxu0 0.0
  %5211 = vmatpush1.msra.mxu0 0.0
  %5212 = vmatprep.subr.mxu0 0.0
  %5213 = vmatpush1.msra.mxu0 0.0
  %5214 = vmatprep.subr.mxu0 0.0
  %5215 = vmatpush1.msra.mxu0 0.0
  %5216 = vmatprep.subr.mxu0 0.0
  %5217 = vmatpush1.msra.mxu0 0.0
  %5218 = vmatprep.subr.mxu0 0.0
  %5219 = vmatpush1.msra.mxu0 0.0
  %5220 = vmatprep.mubr.f32.mxu0 0.0
  %5221 = vmatmul.mubr.f32.gmra.mrb[0].mxu0 %v5154
  %v5222 = vpop.f32.mrb[0].mxu0
  %v5223 = vadd.f32 0.0, %v5222
  %v5224 = vpop.f32.mrb[0].mxu0
  %5225 = vdwg.mxu0
  %v5226 = vadd.f32 %v5150, %v5223
  %v5227 = vsub.f32 0.0, %v5226
  %v5228 = vmul.f32 %v5227, 1.442695
  %v5229 = vpow.pop %v5228
  %v5230 = vadd.f32 %v5229, 1.0
  %v5231 = vrcp.pop %v5230
  %v5232 = vtanh.pop %v5226
  %v5233 = vmul.f32 %v5231, %v5135
  %5235 = vrot.lane.b32.xlu0 %v5232, 64
  %v5236 = vpop.permute.xlu0 %5235
  %v5238 = vmul.f32 %v5231, %v5236
  %5240 = vrot.lane.b32.xlu0 %v5238, 32
  %v5241 = vpop.permute.xlu0 %5240
  %v5243 = vadd.f32 %v5233, %v5241
  %v5244 = vtanh.pop %v5243
  %5246 = vrot.lane.b32.xlu0 %v5244, 64
  %v5247 = vpop.permute.xlu0 %5246
  %v5249 = vmul.f32 %v5231, %v5247
  %vm5250 = vcmp.eq.s32.totalorder %v4338, 6
  %v5251 = vsel %vm5250, 1, 0
  %5252 = vset.pattern.permute.xlu0 0
  %5253 = vperm.xlu0 %5252, %v5251
  %v5254 = vpop.permute.xlu0 %5253
  %vm5255 = vcmp.eq.s32.totalorder %v5254, 1
  %v5256 = vsel %vm5255, %v5249, %v5148
  %s5257 = scalar_lea.vmem [#allocation3], 56
  %v5258 = vld [vmem:[%s5257] sm:$0xff]
  %5260 = vrot.lane.b32.xlu0 %v5249, 32
  %v5261 = vpop.permute.xlu0 %5260
  %v5262 = vsel %vm1167, %v5261, 0
  %5264 = vmatprep.subr.mxu0 0.0
  %5265 = vmatpush1.msra.mxu0 %v4503
  %5266 = vmatprep.subr.mxu0 0.0
  %5267 = vmatpush1.msra.mxu0 %v4504
  %5268 = vmatprep.subr.mxu0 0.0
  %5269 = vmatpush1.msra.mxu0 %v4505
  %5270 = vmatprep.subr.mxu0 0.0
  %5271 = vmatpush1.msra.mxu0 %v4506
  %5272 = vmatprep.subr.mxu0 0.0
  %5273 = vmatpush1.msra.mxu0 0.0
  %5274 = vmatprep.subr.mxu0 0.0
  %5275 = vmatpush1.msra.mxu0 0.0
  %5276 = vmatprep.subr.mxu0 0.0
  %5277 = vmatpush1.msra.mxu0 0.0
  %5278 = vmatprep.subr.mxu0 0.0
  %5279 = vmatpush1.msra.mxu0 0.0
  %5280 = vmatprep.subr.mxu0 0.0
  %5281 = vmatpush1.msra.mxu0 0.0
  %5282 = vmatprep.subr.mxu0 0.0
  %5283 = vmatpush1.msra.mxu0 0.0
  %5284 = vmatprep.subr.mxu0 0.0
  %5285 = vmatpush1.msra.mxu0 0.0
  %5286 = vmatprep.subr.mxu0 0.0
  %5287 = vmatpush1.msra.mxu0 0.0
  %5288 = vmatprep.subr.mxu0 0.0
  %5289 = vmatpush1.msra.mxu0 0.0
  %5290 = vmatprep.subr.mxu0 0.0
  %5291 = vmatpush1.msra.mxu0 0.0
  %5292 = vmatprep.subr.mxu0 0.0
  %5293 = vmatpush1.msra.mxu0 0.0
  %5294 = vmatprep.subr.mxu0 0.0
  %5295 = vmatpush1.msra.mxu0 0.0
  %5296 = vmatprep.subr.mxu0 0.0
  %5297 = vmatpush1.msra.mxu0 0.0
  %5298 = vmatprep.subr.mxu0 0.0
  %5299 = vmatpush1.msra.mxu0 0.0
  %5300 = vmatprep.subr.mxu0 0.0
  %5301 = vmatpush1.msra.mxu0 0.0
  %5302 = vmatprep.subr.mxu0 0.0
  %5303 = vmatpush1.msra.mxu0 0.0
  %5304 = vmatprep.subr.mxu0 0.0
  %5305 = vmatpush1.msra.mxu0 0.0
  %5306 = vmatprep.subr.mxu0 0.0
  %5307 = vmatpush1.msra.mxu0 0.0
  %5308 = vmatprep.subr.mxu0 0.0
  %5309 = vmatpush1.msra.mxu0 0.0
  %5310 = vmatprep.subr.mxu0 0.0
  %5311 = vmatpush1.msra.mxu0 0.0
  %5312 = vmatprep.subr.mxu0 0.0
  %5313 = vmatpush1.msra.mxu0 0.0
  %5314 = vmatprep.subr.mxu0 0.0
  %5315 = vmatpush1.msra.mxu0 0.0
  %5316 = vmatprep.subr.mxu0 0.0
  %5317 = vmatpush1.msra.mxu0 0.0
  %5318 = vmatprep.subr.mxu0 0.0
  %5319 = vmatpush1.msra.mxu0 0.0
  %5320 = vmatprep.subr.mxu0 0.0
  %5321 = vmatpush1.msra.mxu0 0.0
  %5322 = vmatprep.subr.mxu0 0.0
  %5323 = vmatpush1.msra.mxu0 0.0
  %5324 = vmatprep.subr.mxu0 0.0
  %5325 = vmatpush1.msra.mxu0 0.0
  %5326 = vmatprep.subr.mxu0 0.0
  %5327 = vmatpush1.msra.mxu0 0.0
  %5328 = vmatprep.mubr.f32.mxu0 0.0
  %5329 = vmatmul.mubr.f32.gmra.mrb[0].mxu0 %v5262
  %v5330 = vpop.f32.mrb[0].mxu0
  %v5331 = vadd.f32 0.0, %v5330
  %v5332 = vpop.f32.mrb[0].mxu0
  %5333 = vdwg.mxu0
  %v5334 = vadd.f32 %v5258, %v5331
  %v5335 = vsub.f32 0.0, %v5334
  %v5336 = vmul.f32 %v5335, 1.442695
  %v5337 = vpow.pop %v5336
  %v5338 = vadd.f32 %v5337, 1.0
  %v5339 = vrcp.pop %v5338
  %v5340 = vtanh.pop %v5334
  %v5341 = vmul.f32 %v5339, %v5243
  %5343 = vrot.lane.b32.xlu0 %v5340, 64
  %v5344 = vpop.permute.xlu0 %5343
  %v5346 = vmul.f32 %v5339, %v5344
  %5348 = vrot.lane.b32.xlu0 %v5346, 32
  %v5349 = vpop.permute.xlu0 %5348
  %v5351 = vadd.f32 %v5341, %v5349
  %v5352 = vtanh.pop %v5351
  %5354 = vrot.lane.b32.xlu0 %v5352, 64
  %v5355 = vpop.permute.xlu0 %5354
  %v5357 = vmul.f32 %v5339, %v5355
  %vm5358 = vcmp.eq.s32.totalorder %v4338, 7
  %v5359 = vsel %vm5358, 1, 0
  %5360 = vset.pattern.permute.xlu0 0
  %5361 = vperm.xlu0 %5360, %v5359
  %v5362 = vpop.permute.xlu0 %5361
  %vm5363 = vcmp.eq.s32.totalorder %v5362, 1
  %v5364 = vsel %vm5363, %v5357, %v5256
  %v5365 = vld [vmem:[%s9] sm:$0x1]
  %v5367 = vlaneseq
  %v5368 = vshrl.u32 %v5367, 7
  %v5369 = vsub.s32 0, %v5368
  %v5370 = vrot.slane %v5365, %v5369
  %5371 = vrot.lane.b32.xlu0 %v5370, 96
  %v5372 = vpop.permute.xlu0 %5371
  %v5374 = vmul.f32 %v5364, %v5372
  %5376 = vrot.lane.b32.xlu0 %v5374, 32
  %v5377 = vpop.permute.xlu0 %5376
  %v5379 = vsel %vm1167, %v5377, 0.0
  %5380 = vadd.xlane.f32.xlu0 %v5379
  %v5381 = vpop.xlane.xlu0 %5380
  %v5382 = vld [vmem:[#allocation4] sm:$0x1]
  %v5384 = vlaneseq
  %v5385 = vshrl.u32 %v5384, 7
  %v5386 = vsub.s32 0, %v5385
  %v5387 = vrot.slane %v5382, %v5386
  %v5389 = vadd.f32 %v5381, %v5387
  %vm5390 = vcmask 7168
  %5391 = vst.msk [vmem:[%s11] sm:$0xff] %vm5390, %v5389
  // Predicated region
  $region46: #{fasthemal_forward.1} parent=0 // pred_check
    _
  $region47: #{fasthemal_forward.1} parent=0 // pred_check_branch
    %5393 = sbr.rel (0) target = $region49
  $region48: #{fasthemal_forward.1} parent=0 // pred_region
    _
  $region49: #{fasthemal_forward.1} parent=0 // pred_fallthru
    _
  // Predicated region
  $region50: #{fasthemal_forward.1} parent=0 // pred_check
    _
  $region51: #{fasthemal_forward.1} parent=0 // pred_check_branch
    %5395 = sbr.rel (0) target = $region53
  $region52: #{fasthemal_forward.1} parent=0 // pred_region
    _
  $region53: #{fasthemal_forward.1} parent=0 // pred_fallthru
    _

</llo_original>
